<compile_context>
chip_gen: v6e
topology: v6e:2x2x1
jax: 0.10.0
libtpu: 0.0.40
codegen_flags: <defaults>
</compile_context>

<pallas_src>
import jax
import jax.numpy as jnp
from jax import lax
from jax.experimental import pallas as pl
from jax.experimental.pallas import tpu as pltpu

# ----------------------- tiny synthetic RoBERTa config -----------------------
VOCAB = 64
HIDDEN = 32
HEADS = 4
HEAD_DIM = HIDDEN // HEADS
INTERMEDIATE = 64
LAYERS = 2
SEQ = 8
BATCH = 2
MAX_POS = SEQ + 2          # roberta positions start at padding_idx + 1 = 2
TYPE_VOCAB = 1
PAD_IDX = 1
LN_EPS = 1e-5
NUM_CLASSES = 2
PAD_OUT = 128              # lane-dense classifier output width (slice to 2 outside)

# packed embedding table rows: [0:64) word, [64:74) pos, [74] type, [75:80) zero pad
EMB_ROWS = 80
# packed bias/LN vector rows (each row padded to 128 lanes)
ROW_EMB_G, ROW_EMB_B = 0, 1


def _layer_base(l):
    return 2 + l * 8          # +0 bqkv, +1 bo, +2 ln1g, +3 ln1b, +4 b1, +5 b2, +6 ln2g, +7 ln2b


ROW_POOL_B = 2 + LAYERS * 8   # 18
ROW_FC_B = ROW_POOL_B + 1     # 19
VEC_ROWS = 24                 # pad 20 -> 24 (multiple of 8 sublanes)


# ------------------------------ fused Pallas kernel ---------------------------
def _fused_encoder_kernel(
    ids_ref,        # (1, S, 1) int32   token ids of this sequence
    maskc_ref,      # (1, S, 1) f32     attention mask, column layout
    maskr_ref,      # (1, 1, S) f32     attention mask, row layout (keys)
    emb_ref,        # (EMB_ROWS, H) bf16  packed word|pos|type embedding table
    vec_ref,        # (VEC_ROWS, 128) f32 packed biases / LayerNorm params
    wqkv_ref,       # (L, H, 3H) bf16
    wo_ref,         # (L, H, H)  bf16
    w1_ref,         # (L, H, I)  bf16
    w2_ref,         # (L, I, H)  bf16
    head_ref,       # (2, H, 128) bf16   [0]=pooler W (lanes :H), [1]=classifier W (lanes :2)
    o_ref,          # (1, 1, 128) f32    CLS logits, lane-dense
):
    f32 = jnp.float32
    bf16 = jnp.bfloat16

    vec = vec_ref[...]                                   # (VEC_ROWS, 128) f32

    def vrow(r, w):
        return vec[r:r + 1, :w]                          # (1, w) f32

    def layer_norm(x, g, b):
        mu = jnp.mean(x, axis=-1, keepdims=True)
        var = jnp.mean(jnp.square(x - mu), axis=-1, keepdims=True)
        return (x - mu) * lax.rsqrt(var + LN_EPS) * g + b

    ids = ids_ref[0]                                     # (S, 1) int32
    mask_c = maskc_ref[0]                                # (S, 1) f32
    mask_r = maskr_ref[0]                                # (1, S) f32

    # ---- fused embedding lookup: one-hot x packed table on the MXU ----
    tab = emb_ref[...]                                   # (EMB_ROWS, H) bf16
    word_tab = tab[:VOCAB, :]
    pos_tab = tab[VOCAB:VOCAB + MAX_POS, :]
    type_row = tab[VOCAB + MAX_POS:VOCAB + MAX_POS + 1, :].astype(f32)   # (1, H)

    word_eq = ids == lax.broadcasted_iota(jnp.int32, (SEQ, VOCAB), 1)
    word_oh = jnp.where(word_eq, 1.0, 0.0).astype(bf16)                  # (S, VOCAB)

    # RoBERTa position ids: cumsum(mask)*mask + PAD_IDX (cumsum via tril*mask reduce)
    ii = lax.broadcasted_iota(jnp.int32, (SEQ, SEQ), 0)
    jj = lax.broadcasted_iota(jnp.int32, (SEQ, SEQ), 1)
    tri = jnp.where(jj <= ii, 1.0, 0.0)                                  # (S, S) f32
    cum = jnp.sum(tri * mask_r, axis=1, keepdims=True)                   # (S, 1) f32
    pos_i = (cum * mask_c + PAD_IDX).astype(jnp.int32)                   # (S, 1) int32
    pos_eq = pos_i == lax.broadcasted_iota(jnp.int32, (SEQ, MAX_POS), 1)
    pos_oh = jnp.where(pos_eq, 1.0, 0.0).astype(bf16)                    # (S, MAX_POS)

    h = (jnp.dot(word_oh, word_tab, preferred_element_type=f32)
         + jnp.dot(pos_oh, pos_tab, preferred_element_type=f32)
         + type_row)                                                     # (S, H) f32

    x = layer_norm(h, vrow(ROW_EMB_G, HIDDEN), vrow(ROW_EMB_B, HIDDEN))

    # key-padding additive bias, kept in f32 (broadcasts over query rows)
    bias = (1.0 - mask_r) * -1e9                                         # (1, S)
    scale = 1.0 / (HEAD_DIM ** 0.5)

    for l in range(LAYERS):                       # static unroll (LAYERS = 2)
        base = _layer_base(l)

        # ---- fused QKV projection: one (H, 3H) bf16 matmul ----
        x16 = x.astype(bf16)
        qkv = (jnp.dot(x16, wqkv_ref[l], preferred_element_type=f32)
               + vrow(base + 0, 3 * HIDDEN)).astype(bf16)                # (S, 3H)

        # ---- multi-head attention; single output projection per layer ----
        ctx_parts = []
        for hd in range(HEADS):
            q_lo = hd * HEAD_DIM
            k_lo = HIDDEN + hd * HEAD_DIM
            v_lo = 2 * HIDDEN + hd * HEAD_DIM
            qh = qkv[:, q_lo:q_lo + HEAD_DIM]
            kh = qkv[:, k_lo:k_lo + HEAD_DIM]
            vh = qkv[:, v_lo:v_lo + HEAD_DIM]
            s = jnp.einsum("qd,kd->qk", qh, kh,
                           preferred_element_type=f32) * scale + bias    # (S, S) f32
            p = jax.nn.softmax(s, axis=-1).astype(bf16)
            ctx_parts.append(jnp.dot(p, vh, preferred_element_type=f32))  # (S, D)
        ctx = jnp.concatenate(ctx_parts, axis=-1).astype(bf16)            # (S, H)
        attn = (jnp.dot(ctx, wo_ref[l], preferred_element_type=f32)
                + vrow(base + 1, HIDDEN))
        x = layer_norm(attn + x, vrow(base + 2, HIDDEN), vrow(base + 3, HIDDEN))

        # ---- feed-forward ----
        y16 = x.astype(bf16)
        ffn = (jnp.dot(y16, w1_ref[l], preferred_element_type=f32)
               + vrow(base + 4, INTERMEDIATE))
        # TODO(synk): HF RoBERTa uses exact erf GELU; tanh approximation used here.
        ffn = jax.nn.gelu(ffn, approximate=True).astype(bf16)
        ffn = (jnp.dot(ffn, w2_ref[l], preferred_element_type=f32)
               + vrow(base + 5, HIDDEN))
        x = layer_norm(ffn + x, vrow(base + 6, HIDDEN), vrow(base + 7, HIDDEN))

    # ---- pooler + classifier on the [CLS] row only; lane-dense 128-wide store ----
    cls = x[0:1, :].astype(bf16)                                          # (1, H)
    pool_w = head_ref[0][:, :HIDDEN]                                      # (H, H) bf16
    pooled = jnp.tanh(jnp.dot(cls, pool_w, preferred_element_type=f32)
                      + vrow(ROW_POOL_B, HIDDEN))
    # dropout(p=0.3) in eval mode == identity
    logits = (jnp.dot(pooled.astype(bf16), head_ref[1], preferred_element_type=f32)
              + vec[ROW_FC_B:ROW_FC_B + 1, :])                            # (1, 128)
    o_ref[0] = logits.astype(o_ref.dtype)


# --------------------------- parameter construction --------------------------
def init_params(key):
    def nrm(k, shape, std=0.02):
        return std * jax.random.normal(k, shape, dtype=jnp.float32)

    keys = jax.random.split(key, 16)

    # packed embedding table (bf16): word | pos | type, zero-padded to EMB_ROWS
    emb_tab = jnp.zeros((EMB_ROWS, HIDDEN), jnp.float32)
    emb_tab = emb_tab.at[:VOCAB].set(nrm(keys[0], (VOCAB, HIDDEN)))
    emb_tab = emb_tab.at[VOCAB:VOCAB + MAX_POS].set(nrm(keys[1], (MAX_POS, HIDDEN)))
    emb_tab = emb_tab.at[VOCAB + MAX_POS:VOCAB + MAX_POS + TYPE_VOCAB].set(
        nrm(keys[2], (TYPE_VOCAB, HIDDEN)))

    # packed bias / LayerNorm vector buffer (f32): one row per vector, 128 lanes
    vec = jnp.zeros((VEC_ROWS, 128), jnp.float32)
    vec = vec.at[ROW_EMB_G, :HIDDEN].set(1.0)                       # emb LN gamma
    for l in range(LAYERS):
        base = _layer_base(l)
        vec = vec.at[base + 0, :3 * HIDDEN].set(
            0.02 * jax.random.normal(keys[7 + l], (3 * HIDDEN,)))   # bqkv
        vec = vec.at[base + 2, :HIDDEN].set(1.0)                    # ln1 gamma
        vec = vec.at[base + 4, :INTERMEDIATE].set(
            0.02 * jax.random.normal(keys[9 + l], (INTERMEDIATE,)))  # b1
        vec = vec.at[base + 6, :HIDDEN].set(1.0)                    # ln2 gamma
    vec = vec.at[ROW_FC_B, :NUM_CLASSES].set(
        0.02 * jax.random.normal(keys[11], (NUM_CLASSES,)))         # fc bias

    # pooler + classifier weights packed, lane-padded to 128 (bf16)
    head_w = jnp.zeros((2, HIDDEN, 128), jnp.float32)
    head_w = head_w.at[0, :, :HIDDEN].set(nrm(keys[12], (HIDDEN, HIDDEN)))
    head_w = head_w.at[1, :, :NUM_CLASSES].set(nrm(keys[13], (HIDDEN, NUM_CLASSES)))

    return {
        "emb_tab": emb_tab.astype(jnp.bfloat16),
        "vec": vec,
        "wqkv": nrm(keys[3], (LAYERS, HIDDEN, 3 * HIDDEN)).astype(jnp.bfloat16),
        "wo": nrm(keys[4], (LAYERS, HIDDEN, HIDDEN)).astype(jnp.bfloat16),
        "w1": nrm(keys[5], (LAYERS, HIDDEN, INTERMEDIATE)).astype(jnp.bfloat16),
        "w2": nrm(keys[6], (LAYERS, INTERMEDIATE, HIDDEN)).astype(jnp.bfloat16),
        "head_w": head_w.astype(jnp.bfloat16),
    }


# ------------------------------- forward pass ---------------------------------
def toxicity_classifier_forward(params, input_ids, attention_mask):
    B, S = input_ids.shape
    ids_col = input_ids.astype(jnp.int32).reshape(B, S, 1)
    maskf = attention_mask.astype(jnp.float32)
    mask_col = maskf.reshape(B, S, 1)
    mask_row = maskf.reshape(B, 1, S)

    grid_spec = pltpu.PrefetchScalarGridSpec(
        num_scalar_prefetch=0,
        grid=(B,),
        in_specs=[
            pl.BlockSpec((1, S, 1), lambda b: (b, 0, 0)),                      # ids
            pl.BlockSpec((1, S, 1), lambda b: (b, 0, 0)),                      # mask col
            pl.BlockSpec((1, 1, S), lambda b: (b, 0, 0)),                      # mask row
            pl.BlockSpec((EMB_ROWS, HIDDEN), lambda b: (0, 0)),                # emb table
            pl.BlockSpec((VEC_ROWS, 128), lambda b: (0, 0)),                   # bias pack
            pl.BlockSpec((LAYERS, HIDDEN, 3 * HIDDEN), lambda b: (0, 0, 0)),   # wqkv
            pl.BlockSpec((LAYERS, HIDDEN, HIDDEN), lambda b: (0, 0, 0)),       # wo
            pl.BlockSpec((LAYERS, HIDDEN, INTERMEDIATE), lambda b: (0, 0, 0)), # w1
            pl.BlockSpec((LAYERS, INTERMEDIATE, HIDDEN), lambda b: (0, 0, 0)), # w2
            pl.BlockSpec((2, HIDDEN, 128), lambda b: (0, 0, 0)),               # pooler+fc
        ],
        out_specs=pl.BlockSpec((1, 1, PAD_OUT), lambda b: (b, 0, 0)),
    )

    out = pl.pallas_call(
        _fused_encoder_kernel,
        out_shape=jax.ShapeDtypeStruct((B, 1, PAD_OUT), jnp.float32),
        grid_spec=grid_spec,
        compiler_params=pltpu.CompilerParams(
            dimension_semantics=("parallel",),        # shards batches over v7x's 2 TCs
            vmem_limit_bytes=32 * 1024 * 1024,
        ),
    )(ids_col, mask_col, mask_row,
      params["emb_tab"], params["vec"],
      params["wqkv"], params["wo"], params["w1"], params["w2"],
      params["head_w"])

    # logits for each sequence live in the first NUM_CLASSES lanes of its row.
    return out[:, 0, :NUM_CLASSES]


# ------------------------------------ main ------------------------------------
if __name__ == "__main__":
    root = jax.random.PRNGKey(0)
    k_param, k_ids = jax.random.split(root)

    params = init_params(k_param)

    input_ids = jax.random.randint(k_ids, (BATCH, SEQ), minval=2, maxval=VOCAB,
                                   dtype=jnp.int32)
    attention_mask = jnp.ones((BATCH, SEQ), dtype=jnp.int32)
    attention_mask = attention_mask.at[1, SEQ - 2:].set(0)   # some padding in batch 1

    fwd = jax.jit(toxicity_classifier_forward)
    logits = jax.block_until_ready(fwd(params, input_ids, attention_mask))

    assert logits.shape == (BATCH, NUM_CLASSES) and logits.dtype == jnp.float32
    assert bool(jnp.all(jnp.isfinite(logits)))
    print("KERNEL_OK")
</pallas_src>

<mosaic_0001>
module attributes {stable_mosaic.version = 11 : i64} {
  func.func @_fused_encoder_kernel(%arg0: i32, %arg1: memref<1x8x1xi32, #tpu.memory_space<vmem>>, %arg2: memref<1x8x1xf32, #tpu.memory_space<vmem>>, %arg3: memref<1x1x8xf32, #tpu.memory_space<vmem>>, %arg4: memref<80x32xbf16, #tpu.memory_space<vmem>>, %arg5: memref<24x128xf32, #tpu.memory_space<vmem>>, %arg6: memref<2x32x96xbf16, #tpu.memory_space<vmem>>, %arg7: memref<2x32x32xbf16, #tpu.memory_space<vmem>>, %arg8: memref<2x32x64xbf16, #tpu.memory_space<vmem>>, %arg9: memref<2x64x32xbf16, #tpu.memory_space<vmem>>, %arg10: memref<2x32x128xbf16, #tpu.memory_space<vmem>>, %arg11: memref<1x1x128xf32, #tpu.memory_space<vmem>>) attributes {dimension_semantics = [#tpu.dimension_semantics<parallel>], iteration_bounds = array<i64: 2>, scalar_prefetch = 0 : i64, scratch_operands = 0 : i64, tpu.core_type = #tpu.core_type<tc>, window_params = [{transform_indices = @transform_0, window_bounds = array<i64: 1, 8, 1>}, {transform_indices = @transform_1, window_bounds = array<i64: 1, 8, 1>}, {transform_indices = @transform_2, window_bounds = array<i64: 1, 1, 8>}, {pipeline_mode = #tpu.pipeline_mode<synchronous>, transform_indices = @transform_3, window_bounds = array<i64: 80, 32>}, {pipeline_mode = #tpu.pipeline_mode<synchronous>, transform_indices = @transform_4, window_bounds = array<i64: 24, 128>}, {pipeline_mode = #tpu.pipeline_mode<synchronous>, transform_indices = @transform_5, window_bounds = array<i64: 2, 32, 96>}, {pipeline_mode = #tpu.pipeline_mode<synchronous>, transform_indices = @transform_6, window_bounds = array<i64: 2, 32, 32>}, {pipeline_mode = #tpu.pipeline_mode<synchronous>, transform_indices = @transform_7, window_bounds = array<i64: 2, 32, 64>}, {pipeline_mode = #tpu.pipeline_mode<synchronous>, transform_indices = @transform_8, window_bounds = array<i64: 2, 64, 32>}, {pipeline_mode = #tpu.pipeline_mode<synchronous>, transform_indices = @transform_9, window_bounds = array<i64: 2, 32, 128>}, {transform_indices = @transform_10, window_bounds = array<i64: 1, 1, 128>}]} {
    %c0 = arith.constant 0 : index
    %c0_0 = arith.constant 0 : index
    %0 = vector.load %arg5[%c0, %c0_0] : memref<24x128xf32, #tpu.memory_space<vmem>>, vector<24x128xf32>
    %c0_1 = arith.constant 0 : index
    %c0_2 = arith.constant 0 : index
    %c0_3 = arith.constant 0 : index
    %1 = vector.load %arg1[%c0_1, %c0_2, %c0_3] : memref<1x8x1xi32, #tpu.memory_space<vmem>>, vector<1x8x1xi32>
    %2 = vector.shape_cast %1 : vector<1x8x1xi32> to vector<8x1xi32>
    %c0_4 = arith.constant 0 : index
    %c0_5 = arith.constant 0 : index
    %c0_6 = arith.constant 0 : index
    %3 = vector.load %arg2[%c0_4, %c0_5, %c0_6] : memref<1x8x1xf32, #tpu.memory_space<vmem>>, vector<1x8x1xf32>
    %4 = vector.shape_cast %3 : vector<1x8x1xf32> to vector<8x1xf32>
    %c0_7 = arith.constant 0 : index
    %c0_8 = arith.constant 0 : index
    %c0_9 = arith.constant 0 : index
    %5 = vector.load %arg3[%c0_7, %c0_8, %c0_9] : memref<1x1x8xf32, #tpu.memory_space<vmem>>, vector<1x1x8xf32>
    %6 = vector.shape_cast %5 : vector<1x1x8xf32> to vector<1x8xf32>
    %c0_10 = arith.constant 0 : index
    %c0_11 = arith.constant 0 : index
    %7 = vector.load %arg4[%c0_10, %c0_11] : memref<80x32xbf16, #tpu.memory_space<vmem>>, vector<80x32xbf16>
    %8 = vector.extract_strided_slice %7 {offsets = [0, 0], sizes = [64, 32], strides = [1, 1]} : vector<80x32xbf16> to vector<64x32xbf16>
    %9 = vector.extract_strided_slice %7 {offsets = [64, 0], sizes = [10, 32], strides = [1, 1]} : vector<80x32xbf16> to vector<10x32xbf16>
    %10 = vector.extract_strided_slice %7 {offsets = [74, 0], sizes = [1, 32], strides = [1, 1]} : vector<80x32xbf16> to vector<1x32xbf16>
    %11 = arith.extf %10 : vector<1x32xbf16> to vector<1x32xf32>
    %12 = tpu.iota {dimensions = array<i32: 1>} : vector<8x64xi32>
    %13 = vector.broadcast %2 : vector<8x1xi32> to vector<8x64xi32>
    %14 = arith.cmpi eq, %13, %12 : vector<8x64xi32>
    %cst = arith.constant 1.000000e+00 : f32
    %cst_12 = arith.constant 0.000000e+00 : f32
    %15 = vector.broadcast %cst : f32 to vector<8x64xf32>
    %16 = vector.broadcast %cst_12 : f32 to vector<8x64xf32>
    %17 = arith.select %14, %15, %16 : vector<8x64xi1>, vector<8x64xf32>
    %18 = arith.truncf %17 : vector<8x64xf32> to vector<8x64xbf16>
    %19 = tpu.iota {dimensions = array<i32: 0>} : vector<8x8xi32>
    %20 = tpu.iota {dimensions = array<i32: 1>} : vector<8x8xi32>
    %21 = arith.cmpi sle, %20, %19 : vector<8x8xi32>
    %cst_13 = arith.constant 1.000000e+00 : f32
    %cst_14 = arith.constant 0.000000e+00 : f32
    %22 = vector.broadcast %cst_13 : f32 to vector<8x8xf32>
    %23 = vector.broadcast %cst_14 : f32 to vector<8x8xf32>
    %24 = arith.select %21, %22, %23 : vector<8x8xi1>, vector<8x8xf32>
    %25 = vector.broadcast %6 : vector<1x8xf32> to vector<8x8xf32>
    %26 = arith.mulf %24, %25 : vector<8x8xf32>
    %cst_15 = arith.constant dense<0.000000e+00> : vector<8xf32>
    %27 = vector.multi_reduction <add>, %26, %cst_15 [1] : vector<8x8xf32> to vector<8xf32>
    %28 = vector.shape_cast %27 : vector<8xf32> to vector<8x1xf32>
    %29 = arith.mulf %28, %4 : vector<8x1xf32>
    %cst_16 = arith.constant 1.000000e+00 : f32
    %30 = vector.broadcast %cst_16 : f32 to vector<8x1xf32>
    %31 = arith.addf %29, %30 : vector<8x1xf32>
    %32 = arith.fptosi %31 : vector<8x1xf32> to vector<8x1xi32>
    %33 = tpu.iota {dimensions = array<i32: 1>} : vector<8x10xi32>
    %34 = vector.broadcast %32 : vector<8x1xi32> to vector<8x10xi32>
    %35 = arith.cmpi eq, %34, %33 : vector<8x10xi32>
    %cst_17 = arith.constant 1.000000e+00 : f32
    %cst_18 = arith.constant 0.000000e+00 : f32
    %36 = vector.broadcast %cst_17 : f32 to vector<8x10xf32>
    %37 = vector.broadcast %cst_18 : f32 to vector<8x10xf32>
    %38 = arith.select %35, %36, %37 : vector<8x10xi1>, vector<8x10xf32>
    %39 = arith.truncf %38 : vector<8x10xf32> to vector<8x10xbf16>
    %cst_19 = arith.constant dense<0.000000e+00> : vector<8x32xf32>
    %40 = tpu.matmul %18, %8, %cst_19 {dimension_numbers = #tpu.dot_dimension_numbers<[1], [0], [0], [1], [0, 0, 1, 1], [], []>} : vector<8x64xbf16>, vector<64x32xbf16>, vector<8x32xf32> -> vector<8x32xf32>
    %cst_20 = arith.constant dense<0.000000e+00> : vector<8x32xf32>
    %41 = tpu.matmul %39, %9, %cst_20 {dimension_numbers = #tpu.dot_dimension_numbers<[1], [0], [0], [1], [0, 0, 1, 1], [], []>} : vector<8x10xbf16>, vector<10x32xbf16>, vector<8x32xf32> -> vector<8x32xf32>
    %42 = arith.addf %40, %41 : vector<8x32xf32>
    %43 = vector.broadcast %11 : vector<1x32xf32> to vector<8x32xf32>
    %44 = arith.addf %42, %43 : vector<8x32xf32>
    %45 = vector.extract_strided_slice %0 {offsets = [0, 0], sizes = [1, 32], strides = [1, 1]} : vector<24x128xf32> to vector<1x32xf32>
    %46 = vector.extract_strided_slice %0 {offsets = [1, 0], sizes = [1, 32], strides = [1, 1]} : vector<24x128xf32> to vector<1x32xf32>
    %cst_21 = arith.constant dense<0.000000e+00> : vector<8xf32>
    %47 = vector.multi_reduction <add>, %44, %cst_21 [1] : vector<8x32xf32> to vector<8xf32>
    %48 = vector.shape_cast %47 : vector<8xf32> to vector<8x1xf32>
    %cst_22 = arith.constant 3.200000e+01 : f32
    %49 = vector.broadcast %cst_22 : f32 to vector<8x1xf32>
    %50 = arith.divf %48, %49 : vector<8x1xf32>
    %51 = vector.broadcast %50 : vector<8x1xf32> to vector<8x32xf32>
    %52 = arith.subf %44, %51 : vector<8x32xf32>
    %53 = arith.mulf %52, %52 : vector<8x32xf32>
    %cst_23 = arith.constant dense<0.000000e+00> : vector<8xf32>
    %54 = vector.multi_reduction <add>, %53, %cst_23 [1] : vector<8x32xf32> to vector<8xf32>
    %55 = vector.shape_cast %54 : vector<8xf32> to vector<8x1xf32>
    %cst_24 = arith.constant 3.200000e+01 : f32
    %56 = vector.broadcast %cst_24 : f32 to vector<8x1xf32>
    %57 = arith.divf %55, %56 : vector<8x1xf32>
    %58 = vector.broadcast %50 : vector<8x1xf32> to vector<8x32xf32>
    %59 = arith.subf %44, %58 : vector<8x32xf32>
    %cst_25 = arith.constant 9.99999974E-6 : f32
    %60 = vector.broadcast %cst_25 : f32 to vector<8x1xf32>
    %61 = arith.addf %57, %60 : vector<8x1xf32>
    %62 = math.rsqrt %61 : vector<8x1xf32>
    %63 = vector.broadcast %62 : vector<8x1xf32> to vector<8x32xf32>
    %64 = arith.mulf %59, %63 : vector<8x32xf32>
    %65 = vector.broadcast %45 : vector<1x32xf32> to vector<8x32xf32>
    %66 = arith.mulf %64, %65 : vector<8x32xf32>
    %67 = vector.broadcast %46 : vector<1x32xf32> to vector<8x32xf32>
    %68 = arith.addf %66, %67 : vector<8x32xf32>
    %cst_26 = arith.constant 1.000000e+00 : f32
    %69 = vector.broadcast %cst_26 : f32 to vector<1x8xf32>
    %70 = arith.subf %69, %6 : vector<1x8xf32>
    %cst_27 = arith.constant -1.000000e+09 : f32
    %71 = vector.broadcast %cst_27 : f32 to vector<1x8xf32>
    %72 = arith.mulf %70, %71 : vector<1x8xf32>
    %73 = arith.truncf %68 : vector<8x32xf32> to vector<8x32xbf16>
    %c0_28 = arith.constant 0 : index
    %c0_29 = arith.constant 0 : index
    %c0_30 = arith.constant 0 : index
    %74 = vector.load %arg6[%c0_28, %c0_29, %c0_30] : memref<2x32x96xbf16, #tpu.memory_space<vmem>>, vector<1x32x96xbf16>
    %75 = vector.shape_cast %74 : vector<1x32x96xbf16> to vector<32x96xbf16>
    %cst_31 = arith.constant dense<0.000000e+00> : vector<8x96xf32>
    %76 = tpu.matmul %73, %75, %cst_31 {dimension_numbers = #tpu.dot_dimension_numbers<[1], [0], [0], [1], [0, 0, 1, 1], [], []>} : vector<8x32xbf16>, vector<32x96xbf16>, vector<8x96xf32> -> vector<8x96xf32>
    %77 = vector.extract_strided_slice %0 {offsets = [2, 0], sizes = [1, 96], strides = [1, 1]} : vector<24x128xf32> to vector<1x96xf32>
    %78 = vector.broadcast %77 : vector<1x96xf32> to vector<8x96xf32>
    %79 = arith.addf %76, %78 : vector<8x96xf32>
    %80 = arith.truncf %79 : vector<8x96xf32> to vector<8x96xbf16>
    %81 = vector.extract_strided_slice %80 {offsets = [0, 0], sizes = [8, 8], strides = [1, 1]} : vector<8x96xbf16> to vector<8x8xbf16>
    %82 = vector.extract_strided_slice %80 {offsets = [0, 32], sizes = [8, 8], strides = [1, 1]} : vector<8x96xbf16> to vector<8x8xbf16>
    %83 = vector.extract_strided_slice %80 {offsets = [0, 64], sizes = [8, 8], strides = [1, 1]} : vector<8x96xbf16> to vector<8x8xbf16>
    "tpu.trace_start"() <{level = 10 : i32, message = "qd,kd->qk"}> : () -> ()
    %cst_32 = arith.constant dense<0.000000e+00> : vector<8x8xf32>
    %84 = tpu.matmul %81, %82, %cst_32 {dimension_numbers = #tpu.dot_dimension_numbers<[1], [1], [0], [0], [0, 0, 1, 0], [], []>} : vector<8x8xbf16>, vector<8x8xbf16>, vector<8x8xf32> -> vector<8x8xf32>
    "tpu.trace_stop"() : () -> ()
    %cst_33 = arith.constant 0.353553385 : f32
    %85 = vector.broadcast %cst_33 : f32 to vector<8x8xf32>
    %86 = arith.mulf %84, %85 : vector<8x8xf32>
    %87 = vector.broadcast %72 : vector<1x8xf32> to vector<8x8xf32>
    %88 = arith.addf %86, %87 : vector<8x8xf32>
    %cst_34 = arith.constant dense<0xFF800000> : vector<8xf32>
    %89 = vector.multi_reduction <maximumf>, %88, %cst_34 [1] : vector<8x8xf32> to vector<8xf32>
    %cst_35 = arith.constant 0xFF800000 : f32
    %90 = vector.broadcast %cst_35 : f32 to vector<8xf32>
    %91 = arith.maximumf %90, %89 : vector<8xf32>
    %92 = vector.shape_cast %91 : vector<8xf32> to vector<8x1xf32>
    %93 = vector.broadcast %92 : vector<8x1xf32> to vector<8x8xf32>
    %94 = arith.subf %88, %93 : vector<8x8xf32>
    %95 = math.exp %94 : vector<8x8xf32>
    %cst_36 = arith.constant dense<0.000000e+00> : vector<8xf32>
    %96 = vector.multi_reduction <add>, %95, %cst_36 [1] : vector<8x8xf32> to vector<8xf32>
    %97 = vector.shape_cast %96 : vector<8xf32> to vector<8x1xf32>
    %98 = vector.broadcast %97 : vector<8x1xf32> to vector<8x8xf32>
    %99 = arith.divf %95, %98 : vector<8x8xf32>
    %100 = arith.truncf %99 : vector<8x8xf32> to vector<8x8xbf16>
    %cst_37 = arith.constant dense<0.000000e+00> : vector<8x8xf32>
    %101 = tpu.matmul %100, %83, %cst_37 {dimension_numbers = #tpu.dot_dimension_numbers<[1], [0], [0], [1], [0, 0, 1, 1], [], []>} : vector<8x8xbf16>, vector<8x8xbf16>, vector<8x8xf32> -> vector<8x8xf32>
    %102 = vector.extract_strided_slice %80 {offsets = [0, 8], sizes = [8, 8], strides = [1, 1]} : vector<8x96xbf16> to vector<8x8xbf16>
    %103 = vector.extract_strided_slice %80 {offsets = [0, 40], sizes = [8, 8], strides = [1, 1]} : vector<8x96xbf16> to vector<8x8xbf16>
    %104 = vector.extract_strided_slice %80 {offsets = [0, 72], sizes = [8, 8], strides = [1, 1]} : vector<8x96xbf16> to vector<8x8xbf16>
    "tpu.trace_start"() <{level = 10 : i32, message = "qd,kd->qk"}> : () -> ()
    %cst_38 = arith.constant dense<0.000000e+00> : vector<8x8xf32>
    %105 = tpu.matmul %102, %103, %cst_38 {dimension_numbers = #tpu.dot_dimension_numbers<[1], [1], [0], [0], [0, 0, 1, 0], [], []>} : vector<8x8xbf16>, vector<8x8xbf16>, vector<8x8xf32> -> vector<8x8xf32>
    "tpu.trace_stop"() : () -> ()
    %cst_39 = arith.constant 0.353553385 : f32
    %106 = vector.broadcast %cst_39 : f32 to vector<8x8xf32>
    %107 = arith.mulf %105, %106 : vector<8x8xf32>
    %108 = vector.broadcast %72 : vector<1x8xf32> to vector<8x8xf32>
    %109 = arith.addf %107, %108 : vector<8x8xf32>
    %cst_40 = arith.constant dense<0xFF800000> : vector<8xf32>
    %110 = vector.multi_reduction <maximumf>, %109, %cst_40 [1] : vector<8x8xf32> to vector<8xf32>
    %cst_41 = arith.constant 0xFF800000 : f32
    %111 = vector.broadcast %cst_41 : f32 to vector<8xf32>
    %112 = arith.maximumf %111, %110 : vector<8xf32>
    %113 = vector.shape_cast %112 : vector<8xf32> to vector<8x1xf32>
    %114 = vector.broadcast %113 : vector<8x1xf32> to vector<8x8xf32>
    %115 = arith.subf %109, %114 : vector<8x8xf32>
    %116 = math.exp %115 : vector<8x8xf32>
    %cst_42 = arith.constant dense<0.000000e+00> : vector<8xf32>
    %117 = vector.multi_reduction <add>, %116, %cst_42 [1] : vector<8x8xf32> to vector<8xf32>
    %118 = vector.shape_cast %117 : vector<8xf32> to vector<8x1xf32>
    %119 = vector.broadcast %118 : vector<8x1xf32> to vector<8x8xf32>
    %120 = arith.divf %116, %119 : vector<8x8xf32>
    %121 = arith.truncf %120 : vector<8x8xf32> to vector<8x8xbf16>
    %cst_43 = arith.constant dense<0.000000e+00> : vector<8x8xf32>
    %122 = tpu.matmul %121, %104, %cst_43 {dimension_numbers = #tpu.dot_dimension_numbers<[1], [0], [0], [1], [0, 0, 1, 1], [], []>} : vector<8x8xbf16>, vector<8x8xbf16>, vector<8x8xf32> -> vector<8x8xf32>
    %123 = vector.extract_strided_slice %80 {offsets = [0, 16], sizes = [8, 8], strides = [1, 1]} : vector<8x96xbf16> to vector<8x8xbf16>
    %124 = vector.extract_strided_slice %80 {offsets = [0, 48], sizes = [8, 8], strides = [1, 1]} : vector<8x96xbf16> to vector<8x8xbf16>
    %125 = vector.extract_strided_slice %80 {offsets = [0, 80], sizes = [8, 8], strides = [1, 1]} : vector<8x96xbf16> to vector<8x8xbf16>
    "tpu.trace_start"() <{level = 10 : i32, message = "qd,kd->qk"}> : () -> ()
    %cst_44 = arith.constant dense<0.000000e+00> : vector<8x8xf32>
    %126 = tpu.matmul %123, %124, %cst_44 {dimension_numbers = #tpu.dot_dimension_numbers<[1], [1], [0], [0], [0, 0, 1, 0], [], []>} : vector<8x8xbf16>, vector<8x8xbf16>, vector<8x8xf32> -> vector<8x8xf32>
    "tpu.trace_stop"() : () -> ()
    %cst_45 = arith.constant 0.353553385 : f32
    %127 = vector.broadcast %cst_45 : f32 to vector<8x8xf32>
    %128 = arith.mulf %126, %127 : vector<8x8xf32>
    %129 = vector.broadcast %72 : vector<1x8xf32> to vector<8x8xf32>
    %130 = arith.addf %128, %129 : vector<8x8xf32>
    %cst_46 = arith.constant dense<0xFF800000> : vector<8xf32>
    %131 = vector.multi_reduction <maximumf>, %130, %cst_46 [1] : vector<8x8xf32> to vector<8xf32>
    %cst_47 = arith.constant 0xFF800000 : f32
    %132 = vector.broadcast %cst_47 : f32 to vector<8xf32>
    %133 = arith.maximumf %132, %131 : vector<8xf32>
    %134 = vector.shape_cast %133 : vector<8xf32> to vector<8x1xf32>
    %135 = vector.broadcast %134 : vector<8x1xf32> to vector<8x8xf32>
    %136 = arith.subf %130, %135 : vector<8x8xf32>
    %137 = math.exp %136 : vector<8x8xf32>
    %cst_48 = arith.constant dense<0.000000e+00> : vector<8xf32>
    %138 = vector.multi_reduction <add>, %137, %cst_48 [1] : vector<8x8xf32> to vector<8xf32>
    %139 = vector.shape_cast %138 : vector<8xf32> to vector<8x1xf32>
    %140 = vector.broadcast %139 : vector<8x1xf32> to vector<8x8xf32>
    %141 = arith.divf %137, %140 : vector<8x8xf32>
    %142 = arith.truncf %141 : vector<8x8xf32> to vector<8x8xbf16>
    %cst_49 = arith.constant dense<0.000000e+00> : vector<8x8xf32>
    %143 = tpu.matmul %142, %125, %cst_49 {dimension_numbers = #tpu.dot_dimension_numbers<[1], [0], [0], [1], [0, 0, 1, 1], [], []>} : vector<8x8xbf16>, vector<8x8xbf16>, vector<8x8xf32> -> vector<8x8xf32>
    %144 = vector.extract_strided_slice %80 {offsets = [0, 24], sizes = [8, 8], strides = [1, 1]} : vector<8x96xbf16> to vector<8x8xbf16>
    %145 = vector.extract_strided_slice %80 {offsets = [0, 56], sizes = [8, 8], strides = [1, 1]} : vector<8x96xbf16> to vector<8x8xbf16>
    %146 = vector.extract_strided_slice %80 {offsets = [0, 88], sizes = [8, 8], strides = [1, 1]} : vector<8x96xbf16> to vector<8x8xbf16>
    "tpu.trace_start"() <{level = 10 : i32, message = "qd,kd->qk"}> : () -> ()
    %cst_50 = arith.constant dense<0.000000e+00> : vector<8x8xf32>
    %147 = tpu.matmul %144, %145, %cst_50 {dimension_numbers = #tpu.dot_dimension_numbers<[1], [1], [0], [0], [0, 0, 1, 0], [], []>} : vector<8x8xbf16>, vector<8x8xbf16>, vector<8x8xf32> -> vector<8x8xf32>
    "tpu.trace_stop"() : () -> ()
    %cst_51 = arith.constant 0.353553385 : f32
    %148 = vector.broadcast %cst_51 : f32 to vector<8x8xf32>
    %149 = arith.mulf %147, %148 : vector<8x8xf32>
    %150 = vector.broadcast %72 : vector<1x8xf32> to vector<8x8xf32>
    %151 = arith.addf %149, %150 : vector<8x8xf32>
    %cst_52 = arith.constant dense<0xFF800000> : vector<8xf32>
    %152 = vector.multi_reduction <maximumf>, %151, %cst_52 [1] : vector<8x8xf32> to vector<8xf32>
    %cst_53 = arith.constant 0xFF800000 : f32
    %153 = vector.broadcast %cst_53 : f32 to vector<8xf32>
    %154 = arith.maximumf %153, %152 : vector<8xf32>
    %155 = vector.shape_cast %154 : vector<8xf32> to vector<8x1xf32>
    %156 = vector.broadcast %155 : vector<8x1xf32> to vector<8x8xf32>
    %157 = arith.subf %151, %156 : vector<8x8xf32>
    %158 = math.exp %157 : vector<8x8xf32>
    %cst_54 = arith.constant dense<0.000000e+00> : vector<8xf32>
    %159 = vector.multi_reduction <add>, %158, %cst_54 [1] : vector<8x8xf32> to vector<8xf32>
    %160 = vector.shape_cast %159 : vector<8xf32> to vector<8x1xf32>
    %161 = vector.broadcast %160 : vector<8x1xf32> to vector<8x8xf32>
    %162 = arith.divf %158, %161 : vector<8x8xf32>
    %163 = arith.truncf %162 : vector<8x8xf32> to vector<8x8xbf16>
    %cst_55 = arith.constant dense<0.000000e+00> : vector<8x8xf32>
    %164 = tpu.matmul %163, %146, %cst_55 {dimension_numbers = #tpu.dot_dimension_numbers<[1], [0], [0], [1], [0, 0, 1, 1], [], []>} : vector<8x8xbf16>, vector<8x8xbf16>, vector<8x8xf32> -> vector<8x8xf32>
    %165 = tpu.concatenate %101, %122, %143, %164 in 1 : vector<8x8xf32>, vector<8x8xf32>, vector<8x8xf32>, vector<8x8xf32> -> vector<8x32xf32>
    %166 = arith.truncf %165 : vector<8x32xf32> to vector<8x32xbf16>
    %c0_56 = arith.constant 0 : index
    %c0_57 = arith.constant 0 : index
    %c0_58 = arith.constant 0 : index
    %167 = vector.load %arg7[%c0_56, %c0_57, %c0_58] : memref<2x32x32xbf16, #tpu.memory_space<vmem>>, vector<1x32x32xbf16>
    %168 = vector.shape_cast %167 : vector<1x32x32xbf16> to vector<32x32xbf16>
    %cst_59 = arith.constant dense<0.000000e+00> : vector<8x32xf32>
    %169 = tpu.matmul %166, %168, %cst_59 {dimension_numbers = #tpu.dot_dimension_numbers<[1], [0], [0], [1], [0, 0, 1, 1], [], []>} : vector<8x32xbf16>, vector<32x32xbf16>, vector<8x32xf32> -> vector<8x32xf32>
    %170 = vector.extract_strided_slice %0 {offsets = [3, 0], sizes = [1, 32], strides = [1, 1]} : vector<24x128xf32> to vector<1x32xf32>
    %171 = vector.broadcast %170 : vector<1x32xf32> to vector<8x32xf32>
    %172 = arith.addf %169, %171 : vector<8x32xf32>
    %173 = arith.addf %172, %68 : vector<8x32xf32>
    %174 = vector.extract_strided_slice %0 {offsets = [4, 0], sizes = [1, 32], strides = [1, 1]} : vector<24x128xf32> to vector<1x32xf32>
    %175 = vector.extract_strided_slice %0 {offsets = [5, 0], sizes = [1, 32], strides = [1, 1]} : vector<24x128xf32> to vector<1x32xf32>
    %cst_60 = arith.constant dense<0.000000e+00> : vector<8xf32>
    %176 = vector.multi_reduction <add>, %173, %cst_60 [1] : vector<8x32xf32> to vector<8xf32>
    %177 = vector.shape_cast %176 : vector<8xf32> to vector<8x1xf32>
    %cst_61 = arith.constant 3.200000e+01 : f32
    %178 = vector.broadcast %cst_61 : f32 to vector<8x1xf32>
    %179 = arith.divf %177, %178 : vector<8x1xf32>
    %180 = vector.broadcast %179 : vector<8x1xf32> to vector<8x32xf32>
    %181 = arith.subf %173, %180 : vector<8x32xf32>
    %182 = arith.mulf %181, %181 : vector<8x32xf32>
    %cst_62 = arith.constant dense<0.000000e+00> : vector<8xf32>
    %183 = vector.multi_reduction <add>, %182, %cst_62 [1] : vector<8x32xf32> to vector<8xf32>
    %184 = vector.shape_cast %183 : vector<8xf32> to vector<8x1xf32>
    %cst_63 = arith.constant 3.200000e+01 : f32
    %185 = vector.broadcast %cst_63 : f32 to vector<8x1xf32>
    %186 = arith.divf %184, %185 : vector<8x1xf32>
    %187 = vector.broadcast %179 : vector<8x1xf32> to vector<8x32xf32>
    %188 = arith.subf %173, %187 : vector<8x32xf32>
    %cst_64 = arith.constant 9.99999974E-6 : f32
    %189 = vector.broadcast %cst_64 : f32 to vector<8x1xf32>
    %190 = arith.addf %186, %189 : vector<8x1xf32>
    %191 = math.rsqrt %190 : vector<8x1xf32>
    %192 = vector.broadcast %191 : vector<8x1xf32> to vector<8x32xf32>
    %193 = arith.mulf %188, %192 : vector<8x32xf32>
    %194 = vector.broadcast %174 : vector<1x32xf32> to vector<8x32xf32>
    %195 = arith.mulf %193, %194 : vector<8x32xf32>
    %196 = vector.broadcast %175 : vector<1x32xf32> to vector<8x32xf32>
    %197 = arith.addf %195, %196 : vector<8x32xf32>
    %198 = arith.truncf %197 : vector<8x32xf32> to vector<8x32xbf16>
    %c0_65 = arith.constant 0 : index
    %c0_66 = arith.constant 0 : index
    %c0_67 = arith.constant 0 : index
    %199 = vector.load %arg8[%c0_65, %c0_66, %c0_67] : memref<2x32x64xbf16, #tpu.memory_space<vmem>>, vector<1x32x64xbf16>
    %200 = vector.shape_cast %199 : vector<1x32x64xbf16> to vector<32x64xbf16>
    %cst_68 = arith.constant dense<0.000000e+00> : vector<8x64xf32>
    %201 = tpu.matmul %198, %200, %cst_68 {dimension_numbers = #tpu.dot_dimension_numbers<[1], [0], [0], [1], [0, 0, 1, 1], [], []>} : vector<8x32xbf16>, vector<32x64xbf16>, vector<8x64xf32> -> vector<8x64xf32>
    %202 = vector.extract_strided_slice %0 {offsets = [6, 0], sizes = [1, 64], strides = [1, 1]} : vector<24x128xf32> to vector<1x64xf32>
    %203 = vector.broadcast %202 : vector<1x64xf32> to vector<8x64xf32>
    %204 = arith.addf %201, %203 : vector<8x64xf32>
    %205 = arith.mulf %204, %204 : vector<8x64xf32>
    %206 = arith.mulf %204, %205 : vector<8x64xf32>
    %cst_69 = arith.constant 4.471500e-02 : f32
    %207 = vector.broadcast %cst_69 : f32 to vector<8x64xf32>
    %208 = arith.mulf %207, %206 : vector<8x64xf32>
    %209 = arith.addf %204, %208 : vector<8x64xf32>
    %cst_70 = arith.constant 0.797884583 : f32
    %210 = vector.broadcast %cst_70 : f32 to vector<8x64xf32>
    %211 = arith.mulf %210, %209 : vector<8x64xf32>
    %212 = math.tanh %211 : vector<8x64xf32>
    %cst_71 = arith.constant 1.000000e+00 : f32
    %213 = vector.broadcast %cst_71 : f32 to vector<8x64xf32>
    %214 = arith.addf %213, %212 : vector<8x64xf32>
    %cst_72 = arith.constant 5.000000e-01 : f32
    %215 = vector.broadcast %cst_72 : f32 to vector<8x64xf32>
    %216 = arith.mulf %215, %214 : vector<8x64xf32>
    %217 = arith.mulf %204, %216 : vector<8x64xf32>
    %218 = arith.truncf %217 : vector<8x64xf32> to vector<8x64xbf16>
    %c0_73 = arith.constant 0 : index
    %c0_74 = arith.constant 0 : index
    %c0_75 = arith.constant 0 : index
    %219 = vector.load %arg9[%c0_73, %c0_74, %c0_75] : memref<2x64x32xbf16, #tpu.memory_space<vmem>>, vector<1x64x32xbf16>
    %220 = vector.shape_cast %219 : vector<1x64x32xbf16> to vector<64x32xbf16>
    %cst_76 = arith.constant dense<0.000000e+00> : vector<8x32xf32>
    %221 = tpu.matmul %218, %220, %cst_76 {dimension_numbers = #tpu.dot_dimension_numbers<[1], [0], [0], [1], [0, 0, 1, 1], [], []>} : vector<8x64xbf16>, vector<64x32xbf16>, vector<8x32xf32> -> vector<8x32xf32>
    %222 = vector.extract_strided_slice %0 {offsets = [7, 0], sizes = [1, 32], strides = [1, 1]} : vector<24x128xf32> to vector<1x32xf32>
    %223 = vector.broadcast %222 : vector<1x32xf32> to vector<8x32xf32>
    %224 = arith.addf %221, %223 : vector<8x32xf32>
    %225 = arith.addf %224, %197 : vector<8x32xf32>
    %226 = vector.extract_strided_slice %0 {offsets = [8, 0], sizes = [1, 32], strides = [1, 1]} : vector<24x128xf32> to vector<1x32xf32>
    %227 = vector.extract_strided_slice %0 {offsets = [9, 0], sizes = [1, 32], strides = [1, 1]} : vector<24x128xf32> to vector<1x32xf32>
    %cst_77 = arith.constant dense<0.000000e+00> : vector<8xf32>
    %228 = vector.multi_reduction <add>, %225, %cst_77 [1] : vector<8x32xf32> to vector<8xf32>
    %229 = vector.shape_cast %228 : vector<8xf32> to vector<8x1xf32>
    %cst_78 = arith.constant 3.200000e+01 : f32
    %230 = vector.broadcast %cst_78 : f32 to vector<8x1xf32>
    %231 = arith.divf %229, %230 : vector<8x1xf32>
    %232 = vector.broadcast %231 : vector<8x1xf32> to vector<8x32xf32>
    %233 = arith.subf %225, %232 : vector<8x32xf32>
    %234 = arith.mulf %233, %233 : vector<8x32xf32>
    %cst_79 = arith.constant dense<0.000000e+00> : vector<8xf32>
    %235 = vector.multi_reduction <add>, %234, %cst_79 [1] : vector<8x32xf32> to vector<8xf32>
    %236 = vector.shape_cast %235 : vector<8xf32> to vector<8x1xf32>
    %cst_80 = arith.constant 3.200000e+01 : f32
    %237 = vector.broadcast %cst_80 : f32 to vector<8x1xf32>
    %238 = arith.divf %236, %237 : vector<8x1xf32>
    %239 = vector.broadcast %231 : vector<8x1xf32> to vector<8x32xf32>
    %240 = arith.subf %225, %239 : vector<8x32xf32>
    %cst_81 = arith.constant 9.99999974E-6 : f32
    %241 = vector.broadcast %cst_81 : f32 to vector<8x1xf32>
    %242 = arith.addf %238, %241 : vector<8x1xf32>
    %243 = math.rsqrt %242 : vector<8x1xf32>
    %244 = vector.broadcast %243 : vector<8x1xf32> to vector<8x32xf32>
    %245 = arith.mulf %240, %244 : vector<8x32xf32>
    %246 = vector.broadcast %226 : vector<1x32xf32> to vector<8x32xf32>
    %247 = arith.mulf %245, %246 : vector<8x32xf32>
    %248 = vector.broadcast %227 : vector<1x32xf32> to vector<8x32xf32>
    %249 = arith.addf %247, %248 : vector<8x32xf32>
    %250 = arith.truncf %249 : vector<8x32xf32> to vector<8x32xbf16>
    %c1 = arith.constant 1 : index
    %c0_82 = arith.constant 0 : index
    %c0_83 = arith.constant 0 : index
    %251 = vector.load %arg6[%c1, %c0_82, %c0_83] : memref<2x32x96xbf16, #tpu.memory_space<vmem>>, vector<1x32x96xbf16>
    %252 = vector.shape_cast %251 : vector<1x32x96xbf16> to vector<32x96xbf16>
    %cst_84 = arith.constant dense<0.000000e+00> : vector<8x96xf32>
    %253 = tpu.matmul %250, %252, %cst_84 {dimension_numbers = #tpu.dot_dimension_numbers<[1], [0], [0], [1], [0, 0, 1, 1], [], []>} : vector<8x32xbf16>, vector<32x96xbf16>, vector<8x96xf32> -> vector<8x96xf32>
    %254 = vector.extract_strided_slice %0 {offsets = [10, 0], sizes = [1, 96], strides = [1, 1]} : vector<24x128xf32> to vector<1x96xf32>
    %255 = vector.broadcast %254 : vector<1x96xf32> to vector<8x96xf32>
    %256 = arith.addf %253, %255 : vector<8x96xf32>
    %257 = arith.truncf %256 : vector<8x96xf32> to vector<8x96xbf16>
    %258 = vector.extract_strided_slice %257 {offsets = [0, 0], sizes = [8, 8], strides = [1, 1]} : vector<8x96xbf16> to vector<8x8xbf16>
    %259 = vector.extract_strided_slice %257 {offsets = [0, 32], sizes = [8, 8], strides = [1, 1]} : vector<8x96xbf16> to vector<8x8xbf16>
    %260 = vector.extract_strided_slice %257 {offsets = [0, 64], sizes = [8, 8], strides = [1, 1]} : vector<8x96xbf16> to vector<8x8xbf16>
    "tpu.trace_start"() <{level = 10 : i32, message = "qd,kd->qk"}> : () -> ()
    %cst_85 = arith.constant dense<0.000000e+00> : vector<8x8xf32>
    %261 = tpu.matmul %258, %259, %cst_85 {dimension_numbers = #tpu.dot_dimension_numbers<[1], [1], [0], [0], [0, 0, 1, 0], [], []>} : vector<8x8xbf16>, vector<8x8xbf16>, vector<8x8xf32> -> vector<8x8xf32>
    "tpu.trace_stop"() : () -> ()
    %cst_86 = arith.constant 0.353553385 : f32
    %262 = vector.broadcast %cst_86 : f32 to vector<8x8xf32>
    %263 = arith.mulf %261, %262 : vector<8x8xf32>
    %264 = vector.broadcast %72 : vector<1x8xf32> to vector<8x8xf32>
    %265 = arith.addf %263, %264 : vector<8x8xf32>
    %cst_87 = arith.constant dense<0xFF800000> : vector<8xf32>
    %266 = vector.multi_reduction <maximumf>, %265, %cst_87 [1] : vector<8x8xf32> to vector<8xf32>
    %cst_88 = arith.constant 0xFF800000 : f32
    %267 = vector.broadcast %cst_88 : f32 to vector<8xf32>
    %268 = arith.maximumf %267, %266 : vector<8xf32>
    %269 = vector.shape_cast %268 : vector<8xf32> to vector<8x1xf32>
    %270 = vector.broadcast %269 : vector<8x1xf32> to vector<8x8xf32>
    %271 = arith.subf %265, %270 : vector<8x8xf32>
    %272 = math.exp %271 : vector<8x8xf32>
    %cst_89 = arith.constant dense<0.000000e+00> : vector<8xf32>
    %273 = vector.multi_reduction <add>, %272, %cst_89 [1] : vector<8x8xf32> to vector<8xf32>
    %274 = vector.shape_cast %273 : vector<8xf32> to vector<8x1xf32>
    %275 = vector.broadcast %274 : vector<8x1xf32> to vector<8x8xf32>
    %276 = arith.divf %272, %275 : vector<8x8xf32>
    %277 = arith.truncf %276 : vector<8x8xf32> to vector<8x8xbf16>
    %cst_90 = arith.constant dense<0.000000e+00> : vector<8x8xf32>
    %278 = tpu.matmul %277, %260, %cst_90 {dimension_numbers = #tpu.dot_dimension_numbers<[1], [0], [0], [1], [0, 0, 1, 1], [], []>} : vector<8x8xbf16>, vector<8x8xbf16>, vector<8x8xf32> -> vector<8x8xf32>
    %279 = vector.extract_strided_slice %257 {offsets = [0, 8], sizes = [8, 8], strides = [1, 1]} : vector<8x96xbf16> to vector<8x8xbf16>
    %280 = vector.extract_strided_slice %257 {offsets = [0, 40], sizes = [8, 8], strides = [1, 1]} : vector<8x96xbf16> to vector<8x8xbf16>
    %281 = vector.extract_strided_slice %257 {offsets = [0, 72], sizes = [8, 8], strides = [1, 1]} : vector<8x96xbf16> to vector<8x8xbf16>
    "tpu.trace_start"() <{level = 10 : i32, message = "qd,kd->qk"}> : () -> ()
    %cst_91 = arith.constant dense<0.000000e+00> : vector<8x8xf32>
    %282 = tpu.matmul %279, %280, %cst_91 {dimension_numbers = #tpu.dot_dimension_numbers<[1], [1], [0], [0], [0, 0, 1, 0], [], []>} : vector<8x8xbf16>, vector<8x8xbf16>, vector<8x8xf32> -> vector<8x8xf32>
    "tpu.trace_stop"() : () -> ()
    %cst_92 = arith.constant 0.353553385 : f32
    %283 = vector.broadcast %cst_92 : f32 to vector<8x8xf32>
    %284 = arith.mulf %282, %283 : vector<8x8xf32>
    %285 = vector.broadcast %72 : vector<1x8xf32> to vector<8x8xf32>
    %286 = arith.addf %284, %285 : vector<8x8xf32>
    %cst_93 = arith.constant dense<0xFF800000> : vector<8xf32>
    %287 = vector.multi_reduction <maximumf>, %286, %cst_93 [1] : vector<8x8xf32> to vector<8xf32>
    %cst_94 = arith.constant 0xFF800000 : f32
    %288 = vector.broadcast %cst_94 : f32 to vector<8xf32>
    %289 = arith.maximumf %288, %287 : vector<8xf32>
    %290 = vector.shape_cast %289 : vector<8xf32> to vector<8x1xf32>
    %291 = vector.broadcast %290 : vector<8x1xf32> to vector<8x8xf32>
    %292 = arith.subf %286, %291 : vector<8x8xf32>
    %293 = math.exp %292 : vector<8x8xf32>
    %cst_95 = arith.constant dense<0.000000e+00> : vector<8xf32>
    %294 = vector.multi_reduction <add>, %293, %cst_95 [1] : vector<8x8xf32> to vector<8xf32>
    %295 = vector.shape_cast %294 : vector<8xf32> to vector<8x1xf32>
    %296 = vector.broadcast %295 : vector<8x1xf32> to vector<8x8xf32>
    %297 = arith.divf %293, %296 : vector<8x8xf32>
    %298 = arith.truncf %297 : vector<8x8xf32> to vector<8x8xbf16>
    %cst_96 = arith.constant dense<0.000000e+00> : vector<8x8xf32>
    %299 = tpu.matmul %298, %281, %cst_96 {dimension_numbers = #tpu.dot_dimension_numbers<[1], [0], [0], [1], [0, 0, 1, 1], [], []>} : vector<8x8xbf16>, vector<8x8xbf16>, vector<8x8xf32> -> vector<8x8xf32>
    %300 = vector.extract_strided_slice %257 {offsets = [0, 16], sizes = [8, 8], strides = [1, 1]} : vector<8x96xbf16> to vector<8x8xbf16>
    %301 = vector.extract_strided_slice %257 {offsets = [0, 48], sizes = [8, 8], strides = [1, 1]} : vector<8x96xbf16> to vector<8x8xbf16>
    %302 = vector.extract_strided_slice %257 {offsets = [0, 80], sizes = [8, 8], strides = [1, 1]} : vector<8x96xbf16> to vector<8x8xbf16>
    "tpu.trace_start"() <{level = 10 : i32, message = "qd,kd->qk"}> : () -> ()
    %cst_97 = arith.constant dense<0.000000e+00> : vector<8x8xf32>
    %303 = tpu.matmul %300, %301, %cst_97 {dimension_numbers = #tpu.dot_dimension_numbers<[1], [1], [0], [0], [0, 0, 1, 0], [], []>} : vector<8x8xbf16>, vector<8x8xbf16>, vector<8x8xf32> -> vector<8x8xf32>
    "tpu.trace_stop"() : () -> ()
    %cst_98 = arith.constant 0.353553385 : f32
    %304 = vector.broadcast %cst_98 : f32 to vector<8x8xf32>
    %305 = arith.mulf %303, %304 : vector<8x8xf32>
    %306 = vector.broadcast %72 : vector<1x8xf32> to vector<8x8xf32>
    %307 = arith.addf %305, %306 : vector<8x8xf32>
    %cst_99 = arith.constant dense<0xFF800000> : vector<8xf32>
    %308 = vector.multi_reduction <maximumf>, %307, %cst_99 [1] : vector<8x8xf32> to vector<8xf32>
    %cst_100 = arith.constant 0xFF800000 : f32
    %309 = vector.broadcast %cst_100 : f32 to vector<8xf32>
    %310 = arith.maximumf %309, %308 : vector<8xf32>
    %311 = vector.shape_cast %310 : vector<8xf32> to vector<8x1xf32>
    %312 = vector.broadcast %311 : vector<8x1xf32> to vector<8x8xf32>
    %313 = arith.subf %307, %312 : vector<8x8xf32>
    %314 = math.exp %313 : vector<8x8xf32>
    %cst_101 = arith.constant dense<0.000000e+00> : vector<8xf32>
    %315 = vector.multi_reduction <add>, %314, %cst_101 [1] : vector<8x8xf32> to vector<8xf32>
    %316 = vector.shape_cast %315 : vector<8xf32> to vector<8x1xf32>
    %317 = vector.broadcast %316 : vector<8x1xf32> to vector<8x8xf32>
    %318 = arith.divf %314, %317 : vector<8x8xf32>
    %319 = arith.truncf %318 : vector<8x8xf32> to vector<8x8xbf16>
    %cst_102 = arith.constant dense<0.000000e+00> : vector<8x8xf32>
    %320 = tpu.matmul %319, %302, %cst_102 {dimension_numbers = #tpu.dot_dimension_numbers<[1], [0], [0], [1], [0, 0, 1, 1], [], []>} : vector<8x8xbf16>, vector<8x8xbf16>, vector<8x8xf32> -> vector<8x8xf32>
    %321 = vector.extract_strided_slice %257 {offsets = [0, 24], sizes = [8, 8], strides = [1, 1]} : vector<8x96xbf16> to vector<8x8xbf16>
    %322 = vector.extract_strided_slice %257 {offsets = [0, 56], sizes = [8, 8], strides = [1, 1]} : vector<8x96xbf16> to vector<8x8xbf16>
    %323 = vector.extract_strided_slice %257 {offsets = [0, 88], sizes = [8, 8], strides = [1, 1]} : vector<8x96xbf16> to vector<8x8xbf16>
    "tpu.trace_start"() <{level = 10 : i32, message = "qd,kd->qk"}> : () -> ()
    %cst_103 = arith.constant dense<0.000000e+00> : vector<8x8xf32>
    %324 = tpu.matmul %321, %322, %cst_103 {dimension_numbers = #tpu.dot_dimension_numbers<[1], [1], [0], [0], [0, 0, 1, 0], [], []>} : vector<8x8xbf16>, vector<8x8xbf16>, vector<8x8xf32> -> vector<8x8xf32>
    "tpu.trace_stop"() : () -> ()
    %cst_104 = arith.constant 0.353553385 : f32
    %325 = vector.broadcast %cst_104 : f32 to vector<8x8xf32>
    %326 = arith.mulf %324, %325 : vector<8x8xf32>
    %327 = vector.broadcast %72 : vector<1x8xf32> to vector<8x8xf32>
    %328 = arith.addf %326, %327 : vector<8x8xf32>
    %cst_105 = arith.constant dense<0xFF800000> : vector<8xf32>
    %329 = vector.multi_reduction <maximumf>, %328, %cst_105 [1] : vector<8x8xf32> to vector<8xf32>
    %cst_106 = arith.constant 0xFF800000 : f32
    %330 = vector.broadcast %cst_106 : f32 to vector<8xf32>
    %331 = arith.maximumf %330, %329 : vector<8xf32>
    %332 = vector.shape_cast %331 : vector<8xf32> to vector<8x1xf32>
    %333 = vector.broadcast %332 : vector<8x1xf32> to vector<8x8xf32>
    %334 = arith.subf %328, %333 : vector<8x8xf32>
    %335 = math.exp %334 : vector<8x8xf32>
    %cst_107 = arith.constant dense<0.000000e+00> : vector<8xf32>
    %336 = vector.multi_reduction <add>, %335, %cst_107 [1] : vector<8x8xf32> to vector<8xf32>
    %337 = vector.shape_cast %336 : vector<8xf32> to vector<8x1xf32>
    %338 = vector.broadcast %337 : vector<8x1xf32> to vector<8x8xf32>
    %339 = arith.divf %335, %338 : vector<8x8xf32>
    %340 = arith.truncf %339 : vector<8x8xf32> to vector<8x8xbf16>
    %cst_108 = arith.constant dense<0.000000e+00> : vector<8x8xf32>
    %341 = tpu.matmul %340, %323, %cst_108 {dimension_numbers = #tpu.dot_dimension_numbers<[1], [0], [0], [1], [0, 0, 1, 1], [], []>} : vector<8x8xbf16>, vector<8x8xbf16>, vector<8x8xf32> -> vector<8x8xf32>
    %342 = tpu.concatenate %278, %299, %320, %341 in 1 : vector<8x8xf32>, vector<8x8xf32>, vector<8x8xf32>, vector<8x8xf32> -> vector<8x32xf32>
    %343 = arith.truncf %342 : vector<8x32xf32> to vector<8x32xbf16>
    %c1_109 = arith.constant 1 : index
    %c0_110 = arith.constant 0 : index
    %c0_111 = arith.constant 0 : index
    %344 = vector.load %arg7[%c1_109, %c0_110, %c0_111] : memref<2x32x32xbf16, #tpu.memory_space<vmem>>, vector<1x32x32xbf16>
    %345 = vector.shape_cast %344 : vector<1x32x32xbf16> to vector<32x32xbf16>
    %cst_112 = arith.constant dense<0.000000e+00> : vector<8x32xf32>
    %346 = tpu.matmul %343, %345, %cst_112 {dimension_numbers = #tpu.dot_dimension_numbers<[1], [0], [0], [1], [0, 0, 1, 1], [], []>} : vector<8x32xbf16>, vector<32x32xbf16>, vector<8x32xf32> -> vector<8x32xf32>
    %347 = vector.extract_strided_slice %0 {offsets = [11, 0], sizes = [1, 32], strides = [1, 1]} : vector<24x128xf32> to vector<1x32xf32>
    %348 = vector.broadcast %347 : vector<1x32xf32> to vector<8x32xf32>
    %349 = arith.addf %346, %348 : vector<8x32xf32>
    %350 = arith.addf %349, %249 : vector<8x32xf32>
    %351 = vector.extract_strided_slice %0 {offsets = [12, 0], sizes = [1, 32], strides = [1, 1]} : vector<24x128xf32> to vector<1x32xf32>
    %352 = vector.extract_strided_slice %0 {offsets = [13, 0], sizes = [1, 32], strides = [1, 1]} : vector<24x128xf32> to vector<1x32xf32>
    %cst_113 = arith.constant dense<0.000000e+00> : vector<8xf32>
    %353 = vector.multi_reduction <add>, %350, %cst_113 [1] : vector<8x32xf32> to vector<8xf32>
    %354 = vector.shape_cast %353 : vector<8xf32> to vector<8x1xf32>
    %cst_114 = arith.constant 3.200000e+01 : f32
    %355 = vector.broadcast %cst_114 : f32 to vector<8x1xf32>
    %356 = arith.divf %354, %355 : vector<8x1xf32>
    %357 = vector.broadcast %356 : vector<8x1xf32> to vector<8x32xf32>
    %358 = arith.subf %350, %357 : vector<8x32xf32>
    %359 = arith.mulf %358, %358 : vector<8x32xf32>
    %cst_115 = arith.constant dense<0.000000e+00> : vector<8xf32>
    %360 = vector.multi_reduction <add>, %359, %cst_115 [1] : vector<8x32xf32> to vector<8xf32>
    %361 = vector.shape_cast %360 : vector<8xf32> to vector<8x1xf32>
    %cst_116 = arith.constant 3.200000e+01 : f32
    %362 = vector.broadcast %cst_116 : f32 to vector<8x1xf32>
    %363 = arith.divf %361, %362 : vector<8x1xf32>
    %364 = vector.broadcast %356 : vector<8x1xf32> to vector<8x32xf32>
    %365 = arith.subf %350, %364 : vector<8x32xf32>
    %cst_117 = arith.constant 9.99999974E-6 : f32
    %366 = vector.broadcast %cst_117 : f32 to vector<8x1xf32>
    %367 = arith.addf %363, %366 : vector<8x1xf32>
    %368 = math.rsqrt %367 : vector<8x1xf32>
    %369 = vector.broadcast %368 : vector<8x1xf32> to vector<8x32xf32>
    %370 = arith.mulf %365, %369 : vector<8x32xf32>
    %371 = vector.broadcast %351 : vector<1x32xf32> to vector<8x32xf32>
    %372 = arith.mulf %370, %371 : vector<8x32xf32>
    %373 = vector.broadcast %352 : vector<1x32xf32> to vector<8x32xf32>
    %374 = arith.addf %372, %373 : vector<8x32xf32>
    %375 = arith.truncf %374 : vector<8x32xf32> to vector<8x32xbf16>
    %c1_118 = arith.constant 1 : index
    %c0_119 = arith.constant 0 : index
    %c0_120 = arith.constant 0 : index
    %376 = vector.load %arg8[%c1_118, %c0_119, %c0_120] : memref<2x32x64xbf16, #tpu.memory_space<vmem>>, vector<1x32x64xbf16>
    %377 = vector.shape_cast %376 : vector<1x32x64xbf16> to vector<32x64xbf16>
    %cst_121 = arith.constant dense<0.000000e+00> : vector<8x64xf32>
    %378 = tpu.matmul %375, %377, %cst_121 {dimension_numbers = #tpu.dot_dimension_numbers<[1], [0], [0], [1], [0, 0, 1, 1], [], []>} : vector<8x32xbf16>, vector<32x64xbf16>, vector<8x64xf32> -> vector<8x64xf32>
    %379 = vector.extract_strided_slice %0 {offsets = [14, 0], sizes = [1, 64], strides = [1, 1]} : vector<24x128xf32> to vector<1x64xf32>
    %380 = vector.broadcast %379 : vector<1x64xf32> to vector<8x64xf32>
    %381 = arith.addf %378, %380 : vector<8x64xf32>
    %382 = arith.mulf %381, %381 : vector<8x64xf32>
    %383 = arith.mulf %381, %382 : vector<8x64xf32>
    %cst_122 = arith.constant 4.471500e-02 : f32
    %384 = vector.broadcast %cst_122 : f32 to vector<8x64xf32>
    %385 = arith.mulf %384, %383 : vector<8x64xf32>
    %386 = arith.addf %381, %385 : vector<8x64xf32>
    %cst_123 = arith.constant 0.797884583 : f32
    %387 = vector.broadcast %cst_123 : f32 to vector<8x64xf32>
    %388 = arith.mulf %387, %386 : vector<8x64xf32>
    %389 = math.tanh %388 : vector<8x64xf32>
    %cst_124 = arith.constant 1.000000e+00 : f32
    %390 = vector.broadcast %cst_124 : f32 to vector<8x64xf32>
    %391 = arith.addf %390, %389 : vector<8x64xf32>
    %cst_125 = arith.constant 5.000000e-01 : f32
    %392 = vector.broadcast %cst_125 : f32 to vector<8x64xf32>
    %393 = arith.mulf %392, %391 : vector<8x64xf32>
    %394 = arith.mulf %381, %393 : vector<8x64xf32>
    %395 = arith.truncf %394 : vector<8x64xf32> to vector<8x64xbf16>
    %c1_126 = arith.constant 1 : index
    %c0_127 = arith.constant 0 : index
    %c0_128 = arith.constant 0 : index
    %396 = vector.load %arg9[%c1_126, %c0_127, %c0_128] : memref<2x64x32xbf16, #tpu.memory_space<vmem>>, vector<1x64x32xbf16>
    %397 = vector.shape_cast %396 : vector<1x64x32xbf16> to vector<64x32xbf16>
    %cst_129 = arith.constant dense<0.000000e+00> : vector<8x32xf32>
    %398 = tpu.matmul %395, %397, %cst_129 {dimension_numbers = #tpu.dot_dimension_numbers<[1], [0], [0], [1], [0, 0, 1, 1], [], []>} : vector<8x64xbf16>, vector<64x32xbf16>, vector<8x32xf32> -> vector<8x32xf32>
    %399 = vector.extract_strided_slice %0 {offsets = [15, 0], sizes = [1, 32], strides = [1, 1]} : vector<24x128xf32> to vector<1x32xf32>
    %400 = vector.broadcast %399 : vector<1x32xf32> to vector<8x32xf32>
    %401 = arith.addf %398, %400 : vector<8x32xf32>
    %402 = arith.addf %401, %374 : vector<8x32xf32>
    %403 = vector.extract_strided_slice %0 {offsets = [16, 0], sizes = [1, 32], strides = [1, 1]} : vector<24x128xf32> to vector<1x32xf32>
    %404 = vector.extract_strided_slice %0 {offsets = [17, 0], sizes = [1, 32], strides = [1, 1]} : vector<24x128xf32> to vector<1x32xf32>
    %cst_130 = arith.constant dense<0.000000e+00> : vector<8xf32>
    %405 = vector.multi_reduction <add>, %402, %cst_130 [1] : vector<8x32xf32> to vector<8xf32>
    %406 = vector.shape_cast %405 : vector<8xf32> to vector<8x1xf32>
    %cst_131 = arith.constant 3.200000e+01 : f32
    %407 = vector.broadcast %cst_131 : f32 to vector<8x1xf32>
    %408 = arith.divf %406, %407 : vector<8x1xf32>
    %409 = vector.broadcast %408 : vector<8x1xf32> to vector<8x32xf32>
    %410 = arith.subf %402, %409 : vector<8x32xf32>
    %411 = arith.mulf %410, %410 : vector<8x32xf32>
    %cst_132 = arith.constant dense<0.000000e+00> : vector<8xf32>
    %412 = vector.multi_reduction <add>, %411, %cst_132 [1] : vector<8x32xf32> to vector<8xf32>
    %413 = vector.shape_cast %412 : vector<8xf32> to vector<8x1xf32>
    %cst_133 = arith.constant 3.200000e+01 : f32
    %414 = vector.broadcast %cst_133 : f32 to vector<8x1xf32>
    %415 = arith.divf %413, %414 : vector<8x1xf32>
    %416 = vector.broadcast %408 : vector<8x1xf32> to vector<8x32xf32>
    %417 = arith.subf %402, %416 : vector<8x32xf32>
    %cst_134 = arith.constant 9.99999974E-6 : f32
    %418 = vector.broadcast %cst_134 : f32 to vector<8x1xf32>
    %419 = arith.addf %415, %418 : vector<8x1xf32>
    %420 = math.rsqrt %419 : vector<8x1xf32>
    %421 = vector.broadcast %420 : vector<8x1xf32> to vector<8x32xf32>
    %422 = arith.mulf %417, %421 : vector<8x32xf32>
    %423 = vector.broadcast %403 : vector<1x32xf32> to vector<8x32xf32>
    %424 = arith.mulf %422, %423 : vector<8x32xf32>
    %425 = vector.broadcast %404 : vector<1x32xf32> to vector<8x32xf32>
    %426 = arith.addf %424, %425 : vector<8x32xf32>
    %427 = vector.extract_strided_slice %426 {offsets = [0, 0], sizes = [1, 32], strides = [1, 1]} : vector<8x32xf32> to vector<1x32xf32>
    %428 = arith.truncf %427 : vector<1x32xf32> to vector<1x32xbf16>
    %c0_135 = arith.constant 0 : index
    %c0_136 = arith.constant 0 : index
    %c0_137 = arith.constant 0 : index
    %429 = vector.load %arg10[%c0_135, %c0_136, %c0_137] : memref<2x32x128xbf16, #tpu.memory_space<vmem>>, vector<1x32x128xbf16>
    %430 = vector.shape_cast %429 : vector<1x32x128xbf16> to vector<32x128xbf16>
    %431 = vector.extract_strided_slice %430 {offsets = [0, 0], sizes = [32, 32], strides = [1, 1]} : vector<32x128xbf16> to vector<32x32xbf16>
    %cst_138 = arith.constant dense<0.000000e+00> : vector<1x32xf32>
    %432 = tpu.matmul %428, %431, %cst_138 {dimension_numbers = #tpu.dot_dimension_numbers<[1], [0], [0], [1], [0, 0, 1, 1], [], []>} : vector<1x32xbf16>, vector<32x32xbf16>, vector<1x32xf32> -> vector<1x32xf32>
    %433 = vector.extract_strided_slice %0 {offsets = [18, 0], sizes = [1, 32], strides = [1, 1]} : vector<24x128xf32> to vector<1x32xf32>
    %434 = arith.addf %432, %433 : vector<1x32xf32>
    %435 = math.tanh %434 : vector<1x32xf32>
    %436 = arith.truncf %435 : vector<1x32xf32> to vector<1x32xbf16>
    %c1_139 = arith.constant 1 : index
    %c0_140 = arith.constant 0 : index
    %c0_141 = arith.constant 0 : index
    %437 = vector.load %arg10[%c1_139, %c0_140, %c0_141] : memref<2x32x128xbf16, #tpu.memory_space<vmem>>, vector<1x32x128xbf16>
    %438 = vector.shape_cast %437 : vector<1x32x128xbf16> to vector<32x128xbf16>
    %cst_142 = arith.constant dense<0.000000e+00> : vector<1x128xf32>
    %439 = tpu.matmul %436, %438, %cst_142 {dimension_numbers = #tpu.dot_dimension_numbers<[1], [0], [0], [1], [0, 0, 1, 1], [], []>} : vector<1x32xbf16>, vector<32x128xbf16>, vector<1x128xf32> -> vector<1x128xf32>
    %440 = vector.extract_strided_slice %0 {offsets = [19, 0], sizes = [1, 128], strides = [1, 1]} : vector<24x128xf32> to vector<1x128xf32>
    %441 = arith.addf %439, %440 : vector<1x128xf32>
    %c0_143 = arith.constant 0 : index
    %c0_144 = arith.constant 0 : index
    %c0_145 = arith.constant 0 : index
    %442 = vector.load %arg11[%c0_143, %c0_144, %c0_145] : memref<1x1x128xf32, #tpu.memory_space<vmem>>, vector<1x1x128xf32>
    %443 = vector.shape_cast %442 : vector<1x1x128xf32> to vector<1x128xf32>
    %444 = vector.shape_cast %441 : vector<1x128xf32> to vector<1x1x128xf32>
    tpu.vector_store %arg11[%c0_143, %c0_144, %c0_145], %444 {strides = array<i32>} : memref<1x1x128xf32, #tpu.memory_space<vmem>>, vector<1x1x128xf32>,
    return
  }
  func.func @transform_0(%arg0: i32) -> (i32, i32, i32) {
    %c0_i32 = arith.constant 0 : i32
    %c0_i32_0 = arith.constant 0 : i32
    %c0_i32_1 = arith.constant 0 : i32
    return %arg0, %c0_i32, %c0_i32_0 : i32, i32, i32
  }
  func.func @transform_1(%arg0: i32) -> (i32, i32, i32) {
    %c0_i32 = arith.constant 0 : i32
    %c0_i32_0 = arith.constant 0 : i32
    %c0_i32_1 = arith.constant 0 : i32
    return %arg0, %c0_i32, %c0_i32_0 : i32, i32, i32
  }
  func.func @transform_2(%arg0: i32) -> (i32, i32, i32) {
    %c0_i32 = arith.constant 0 : i32
    %c0_i32_0 = arith.constant 0 : i32
    %c0_i32_1 = arith.constant 0 : i32
    return %arg0, %c0_i32, %c0_i32_0 : i32, i32, i32
  }
  func.func @transform_3(%arg0: i32) -> (i32, i32) {
    %c0_i32 = arith.constant 0 : i32
    %c0_i32_0 = arith.constant 0 : i32
    %c0_i32_1 = arith.constant 0 : i32
    return %c0_i32, %c0_i32_0 : i32, i32
  }
  func.func @transform_4(%arg0: i32) -> (i32, i32) {
    %c0_i32 = arith.constant 0 : i32
    %c0_i32_0 = arith.constant 0 : i32
    %c0_i32_1 = arith.constant 0 : i32
    return %c0_i32, %c0_i32_0 : i32, i32
  }
  func.func @transform_5(%arg0: i32) -> (i32, i32, i32) {
    %c0_i32 = arith.constant 0 : i32
    %c0_i32_0 = arith.constant 0 : i32
    %c0_i32_1 = arith.constant 0 : i32
    %c0_i32_2 = arith.constant 0 : i32
    return %c0_i32, %c0_i32_0, %c0_i32_1 : i32, i32, i32
  }
  func.func @transform_6(%arg0: i32) -> (i32, i32, i32) {
    %c0_i32 = arith.constant 0 : i32
    %c0_i32_0 = arith.constant 0 : i32
    %c0_i32_1 = arith.constant 0 : i32
    %c0_i32_2 = arith.constant 0 : i32
    return %c0_i32, %c0_i32_0, %c0_i32_1 : i32, i32, i32
  }
  func.func @transform_7(%arg0: i32) -> (i32, i32, i32) {
    %c0_i32 = arith.constant 0 : i32
    %c0_i32_0 = arith.constant 0 : i32
    %c0_i32_1 = arith.constant 0 : i32
    %c0_i32_2 = arith.constant 0 : i32
    return %c0_i32, %c0_i32_0, %c0_i32_1 : i32, i32, i32
  }
  func.func @transform_8(%arg0: i32) -> (i32, i32, i32) {
    %c0_i32 = arith.constant 0 : i32
    %c0_i32_0 = arith.constant 0 : i32
    %c0_i32_1 = arith.constant 0 : i32
    %c0_i32_2 = arith.constant 0 : i32
    return %c0_i32, %c0_i32_0, %c0_i32_1 : i32, i32, i32
  }
  func.func @transform_9(%arg0: i32) -> (i32, i32, i32) {
    %c0_i32 = arith.constant 0 : i32
    %c0_i32_0 = arith.constant 0 : i32
    %c0_i32_1 = arith.constant 0 : i32
    %c0_i32_2 = arith.constant 0 : i32
    return %c0_i32, %c0_i32_0, %c0_i32_1 : i32, i32, i32
  }
  func.func @transform_10(%arg0: i32) -> (i32, i32, i32) {
    %c0_i32 = arith.constant 0 : i32
    %c0_i32_0 = arith.constant 0 : i32
    %c0_i32_1 = arith.constant 0 : i32
    return %arg0, %c0_i32, %c0_i32_0 : i32, i32, i32
  }
}

</mosaic_0001>

<llo_original>
// kernel: toxicity_classifier_forward.1
$region0: #{toxicity_classifier_forward.1}
  #allocation0 [shape = 'u32[]', space=smem, size = 0x4, offset = 0x4, fixed_abs, tag = 'smem constant byte address 0x4 - core index']
  #allocation1 [shape = 'u32[144,128]{1,0:T(1,128)}', space=vmem, size = 0x12000, scoped, tag = 'internal scratch']
  %s0 = inlined_call_operand.vmem [shape: s32[2,8,1], index: 0, kind: input, shape index: {}]
  %s1 = inlined_call_operand.vmem [shape: f32[2,8,1], index: 1, kind: input, shape index: {}]
  %s2 = inlined_call_operand.vmem [shape: f32[2,1,8], index: 2, kind: input, shape index: {}]
  %s3 = inlined_call_operand.vmem [shape: bf16[80,32], index: 3, kind: input, shape index: {}]
  %s4 = inlined_call_operand.vmem [shape: f32[24,128], index: 4, kind: input, shape index: {}]
  %s5 = inlined_call_operand.vmem [shape: bf16[2,32,96], index: 5, kind: input, shape index: {}]
  %s6 = inlined_call_operand.vmem [shape: bf16[2,32,32], index: 6, kind: input, shape index: {}]
  %s7 = inlined_call_operand.vmem [shape: bf16[2,32,64], index: 7, kind: input, shape index: {}]
  %s8 = inlined_call_operand.vmem [shape: bf16[2,64,32], index: 8, kind: input, shape index: {}]
  %s9 = inlined_call_operand.vmem [shape: bf16[2,32,128], index: 9, kind: input, shape index: {}]
  %s10 = inlined_call_operand.hbm [shape: f32[2,1,128], index: 10, kind: output, shape index: {}]
  %s11 = sld [smem:[#allocation0]]
  $region73: #{toxicity_classifier_forward.1} parent=0
    _
  %s13 = ssub.s32 1, %s11
  %s14 = scalar_select 0, %s13, %s11
  $region1: #{toxicity_classifier_forward.1} parent=0
    #allocation2 [shape = 'u8[1024]{0}', space=vmem, size = 0x400, scoped, tag = 'output window, operand 0']
    #allocation3 [shape = 's32[2]{0}', space=sflag, size = 0x8, scoped, tag = 'scoped memory for toxicity_classifier_forward.1']
    %15 = vsyncpa [#allocation3], 0
    %s16 = scalar_lea.sflag [#allocation3], 1
    %17 = vsyncpa %s16, 0
    loop: start=0, step=1, limit=4
    $region2: #{toxicity_classifier_forward.1} parent=1 // loop_pre_header
      _
    $region3: #{toxicity_classifier_forward.1} parent=1 // loop_header
      %s19 = sphi 0, %s23
      %p20 = scmp.ge.s32.totalorder %s19, 4
      %s29 = sphi 0, %s31
      %s32 = sphi 0, %s29
      %s33 = sphi 0, %s32
      %s49 = sphi 0, %s33
      %s55 = sphi 0, %s57
      %s58 = sphi 0, %s55
      %s59 = sphi 0, %s58
      %s75 = sphi 0, %s59
      %s81 = sphi 0, %s83
      %s84 = sphi 0, %s81
      %s85 = sphi 0, %s84
      %s101 = sphi 0, %s85
      %s105 = sphi 0, %s105
      %s107 = sphi 0, %s105
      %s108 = sphi 0, %s107
      %s122 = sphi 0, %s108
      %s126 = sphi 0, %s126
      %s128 = sphi 0, %s126
      %s129 = sphi 0, %s128
      %s143 = sphi 0, %s129
      %s147 = sphi 0, %s147
      %s149 = sphi 0, %s147
      %s150 = sphi 0, %s149
      %s164 = sphi 0, %s150
      %s168 = sphi 0, %s168
      %s170 = sphi 0, %s168
      %s171 = sphi 0, %s170
      %s185 = sphi 0, %s171
      %s189 = sphi 0, %s189
      %s191 = sphi 0, %s189
      %s192 = sphi 0, %s191
      %s206 = sphi 0, %s192
      %s210 = sphi 0, %s210
      %s212 = sphi 0, %s210
      %s213 = sphi 0, %s212
      %s227 = sphi 0, %s213
      %s231 = sphi 0, %s231
      %s233 = sphi 0, %s231
      %s234 = sphi 0, %s233
      %s248 = sphi 0, %s234
      %s254 = sphi 0, %s256
      %s257 = sphi 0, %s254
      %s258 = sphi 0, %s257
      %s274 = sphi 0, %s258
    $region4: #{toxicity_classifier_forward.1} parent=1 // loop_header_branch
      %22 = sbr.rel (%p20) target = $region8
    $region5: #{toxicity_classifier_forward.1} parent=1 // loop_body
      %s24 = ssub.s32 %s19, 1
      %s25 = ssub.s32 %s19, 2
      %s26 = sadd.s32 %s19, 1
      %s27 = ssub.s32 %s19, %s26
      %p28 = scmp.eq.s32.totalorder %s27, 0
      %s30 = sadd.s32 %s29, 1
      %s31 = scalar_select %p28, %s29, %s30
      %p34 = pneg %p28
      %p35 = scmp.eq.s32.totalorder %s19, 1
      %p36 = por %p34, %p35
      %p37 = scmp.ne.s32.totalorder %s29, %s32
      %p38 = scmp.eq.s32.totalorder %s19, 0
      %p39 = por %p37, %p38
      %p40 = scmp.ne.s32.totalorder %s29, %s32
      %p41 = scmp.eq.s32.totalorder %s24, 1
      %p42 = por %p40, %p41
      %p43 = scmp.ne.s32.totalorder %s32, %s33
      %p44 = scmp.eq.s32.totalorder %s24, 0
      %p45 = por %p43, %p44
      %p46 = scmp.ne.s32.totalorder %s32, %s33
      %p47 = scmp.eq.s32.totalorder %s25, 1
      %p48 = por %p46, %p47
      %p50 = scmp.ne.s32.totalorder %s33, %s49
      %p51 = scmp.eq.s32.totalorder %s25, 0
      %p52 = por %p50, %p51
      %s53 = ssub.s32 %s19, %s26
      %p54 = scmp.eq.s32.totalorder %s53, 0
      %s56 = sadd.s32 %s55, 1
      %s57 = scalar_select %p54, %s55, %s56
      %p60 = pneg %p54
      %p61 = scmp.eq.s32.totalorder %s19, 1
      %p62 = por %p60, %p61
      %p63 = scmp.ne.s32.totalorder %s55, %s58
      %p64 = scmp.eq.s32.totalorder %s19, 0
      %p65 = por %p63, %p64
      %p66 = scmp.ne.s32.totalorder %s55, %s58
      %p67 = scmp.eq.s32.totalorder %s24, 1
      %p68 = por %p66, %p67
      %p69 = scmp.ne.s32.totalorder %s58, %s59
      %p70 = scmp.eq.s32.totalorder %s24, 0
      %p71 = por %p69, %p70
      %p72 = scmp.ne.s32.totalorder %s58, %s59
      %p73 = scmp.eq.s32.totalorder %s25, 1
      %p74 = por %p72, %p73
      %p76 = scmp.ne.s32.totalorder %s59, %s75
      %p77 = scmp.eq.s32.totalorder %s25, 0
      %p78 = por %p76, %p77
      %s79 = ssub.s32 %s19, %s26
      %p80 = scmp.eq.s32.totalorder %s79, 0
      %s82 = sadd.s32 %s81, 1
      %s83 = scalar_select %p80, %s81, %s82
      %p86 = pneg %p80
      %p87 = scmp.eq.s32.totalorder %s19, 1
      %p88 = por %p86, %p87
      %p89 = scmp.ne.s32.totalorder %s81, %s84
      %p90 = scmp.eq.s32.totalorder %s19, 0
      %p91 = por %p89, %p90
      %p92 = scmp.ne.s32.totalorder %s81, %s84
      %p93 = scmp.eq.s32.totalorder %s24, 1
      %p94 = por %p92, %p93
      %p95 = scmp.ne.s32.totalorder %s84, %s85
      %p96 = scmp.eq.s32.totalorder %s24, 0
      %p97 = por %p95, %p96
      %p98 = scmp.ne.s32.totalorder %s84, %s85
      %p99 = scmp.eq.s32.totalorder %s25, 1
      %p100 = por %p98, %p99
      %p102 = scmp.ne.s32.totalorder %s85, %s101
      %p103 = scmp.eq.s32.totalorder %s25, 0
      %p104 = por %p102, %p103
      %s106 = sadd.s32 %s105, 1
      %p109 = scmp.eq.s32.totalorder %s19, 1
      %p110 = scmp.ne.s32.totalorder %s105, %s107
      %p111 = scmp.eq.s32.totalorder %s19, 0
      %p112 = por %p110, %p111
      %p113 = scmp.ne.s32.totalorder %s105, %s107
      %p114 = scmp.eq.s32.totalorder %s24, 1
      %p115 = por %p113, %p114
      %p116 = scmp.ne.s32.totalorder %s107, %s108
      %p117 = scmp.eq.s32.totalorder %s24, 0
      %p118 = por %p116, %p117
      %p119 = scmp.ne.s32.totalorder %s107, %s108
      %p120 = scmp.eq.s32.totalorder %s25, 1
      %p121 = por %p119, %p120
      %p123 = scmp.ne.s32.totalorder %s108, %s122
      %p124 = scmp.eq.s32.totalorder %s25, 0
      %p125 = por %p123, %p124
      %s127 = sadd.s32 %s126, 1
      %p130 = scmp.eq.s32.totalorder %s19, 1
      %p131 = scmp.ne.s32.totalorder %s126, %s128
      %p132 = scmp.eq.s32.totalorder %s19, 0
      %p133 = por %p131, %p132
      %p134 = scmp.ne.s32.totalorder %s126, %s128
      %p135 = scmp.eq.s32.totalorder %s24, 1
      %p136 = por %p134, %p135
      %p137 = scmp.ne.s32.totalorder %s128, %s129
      %p138 = scmp.eq.s32.totalorder %s24, 0
      %p139 = por %p137, %p138
      %p140 = scmp.ne.s32.totalorder %s128, %s129
      %p141 = scmp.eq.s32.totalorder %s25, 1
      %p142 = por %p140, %p141
      %p144 = scmp.ne.s32.totalorder %s129, %s143
      %p145 = scmp.eq.s32.totalorder %s25, 0
      %p146 = por %p144, %p145
      %s148 = sadd.s32 %s147, 1
      %p151 = scmp.eq.s32.totalorder %s19, 1
      %p152 = scmp.ne.s32.totalorder %s147, %s149
      %p153 = scmp.eq.s32.totalorder %s19, 0
      %p154 = por %p152, %p153
      %p155 = scmp.ne.s32.totalorder %s147, %s149
      %p156 = scmp.eq.s32.totalorder %s24, 1
      %p157 = por %p155, %p156
      %p158 = scmp.ne.s32.totalorder %s149, %s150
      %p159 = scmp.eq.s32.totalorder %s24, 0
      %p160 = por %p158, %p159
      %p161 = scmp.ne.s32.totalorder %s149, %s150
      %p162 = scmp.eq.s32.totalorder %s25, 1
      %p163 = por %p161, %p162
      %p165 = scmp.ne.s32.totalorder %s150, %s164
      %p166 = scmp.eq.s32.totalorder %s25, 0
      %p167 = por %p165, %p166
      %s169 = sadd.s32 %s168, 1
      %p172 = scmp.eq.s32.totalorder %s19, 1
      %p173 = scmp.ne.s32.totalorder %s168, %s170
      %p174 = scmp.eq.s32.totalorder %s19, 0
      %p175 = por %p173, %p174
      %p176 = scmp.ne.s32.totalorder %s168, %s170
      %p177 = scmp.eq.s32.totalorder %s24, 1
      %p178 = por %p176, %p177
      %p179 = scmp.ne.s32.totalorder %s170, %s171
      %p180 = scmp.eq.s32.totalorder %s24, 0
      %p181 = por %p179, %p180
      %p182 = scmp.ne.s32.totalorder %s170, %s171
      %p183 = scmp.eq.s32.totalorder %s25, 1
      %p184 = por %p182, %p183
      %p186 = scmp.ne.s32.totalorder %s171, %s185
      %p187 = scmp.eq.s32.totalorder %s25, 0
      %p188 = por %p186, %p187
      %s190 = sadd.s32 %s189, 1
      %p193 = scmp.eq.s32.totalorder %s19, 1
      %p194 = scmp.ne.s32.totalorder %s189, %s191
      %p195 = scmp.eq.s32.totalorder %s19, 0
      %p196 = por %p194, %p195
      %p197 = scmp.ne.s32.totalorder %s189, %s191
      %p198 = scmp.eq.s32.totalorder %s24, 1
      %p199 = por %p197, %p198
      %p200 = scmp.ne.s32.totalorder %s191, %s192
      %p201 = scmp.eq.s32.totalorder %s24, 0
      %p202 = por %p200, %p201
      %p203 = scmp.ne.s32.totalorder %s191, %s192
      %p204 = scmp.eq.s32.totalorder %s25, 1
      %p205 = por %p203, %p204
      %p207 = scmp.ne.s32.totalorder %s192, %s206
      %p208 = scmp.eq.s32.totalorder %s25, 0
      %p209 = por %p207, %p208
      %s211 = sadd.s32 %s210, 1
      %p214 = scmp.eq.s32.totalorder %s19, 1
      %p215 = scmp.ne.s32.totalorder %s210, %s212
      %p216 = scmp.eq.s32.totalorder %s19, 0
      %p217 = por %p215, %p216
      %p218 = scmp.ne.s32.totalorder %s210, %s212
      %p219 = scmp.eq.s32.totalorder %s24, 1
      %p220 = por %p218, %p219
      %p221 = scmp.ne.s32.totalorder %s212, %s213
      %p222 = scmp.eq.s32.totalorder %s24, 0
      %p223 = por %p221, %p222
      %p224 = scmp.ne.s32.totalorder %s212, %s213
      %p225 = scmp.eq.s32.totalorder %s25, 1
      %p226 = por %p224, %p225
      %p228 = scmp.ne.s32.totalorder %s213, %s227
      %p229 = scmp.eq.s32.totalorder %s25, 0
      %p230 = por %p228, %p229
      %s232 = sadd.s32 %s231, 1
      %p235 = scmp.eq.s32.totalorder %s19, 1
      %p236 = scmp.ne.s32.totalorder %s231, %s233
      %p237 = scmp.eq.s32.totalorder %s19, 0
      %p238 = por %p236, %p237
      %p239 = scmp.ne.s32.totalorder %s231, %s233
      %p240 = scmp.eq.s32.totalorder %s24, 1
      %p241 = por %p239, %p240
      %p242 = scmp.ne.s32.totalorder %s233, %s234
      %p243 = scmp.eq.s32.totalorder %s24, 0
      %p244 = por %p242, %p243
      %p245 = scmp.ne.s32.totalorder %s233, %s234
      %p246 = scmp.eq.s32.totalorder %s25, 1
      %p247 = por %p245, %p246
      %p249 = scmp.ne.s32.totalorder %s234, %s248
      %p250 = scmp.eq.s32.totalorder %s25, 0
      %p251 = por %p249, %p250
      %s252 = ssub.s32 %s19, %s26
      %p253 = scmp.eq.s32.totalorder %s252, 0
      %s255 = sadd.s32 %s254, 1
      %s256 = scalar_select %p253, %s254, %s255
      %p259 = pneg %p253
      %p260 = scmp.eq.s32.totalorder %s19, 1
      %p261 = por %p259, %p260
      %p262 = scmp.ne.s32.totalorder %s254, %s257
      %p263 = scmp.eq.s32.totalorder %s19, 0
      %p264 = por %p262, %p263
      %p265 = scmp.ne.s32.totalorder %s254, %s257
      %p266 = scmp.eq.s32.totalorder %s24, 1
      %p267 = por %p265, %p266
      %p268 = scmp.ne.s32.totalorder %s257, %s258
      %p269 = scmp.eq.s32.totalorder %s24, 0
      %p270 = por %p268, %p269
      %p271 = scmp.ne.s32.totalorder %s257, %s258
      %p272 = scmp.eq.s32.totalorder %s25, 1
      %p273 = por %p271, %p272
      %p275 = scmp.ne.s32.totalorder %s258, %s274
      %p276 = scmp.eq.s32.totalorder %s25, 0
      %p277 = por %p275, %p276
      %p278 = scmp.le.s32.totalorder 1, %s19
      %p279 = scmp.lt.s32.totalorder %s19, 3
      %p280 = pnand %p278, %p279
      %p281 = pneg %p280
      // Predicated region
      $region9: #{toxicity_classifier_forward.1} parent=5 // pred_check
        _
      $region10: #{toxicity_classifier_forward.1} parent=5 // pred_check_branch
        %283 = sbr.rel (%p280) target = $region12
      $region11: #{toxicity_classifier_forward.1} parent=5 // pred_region
        %s284 = ssub.s32 %s19, 1
        // Predicated region
        $region13: #{toxicity_classifier_forward.1} parent=11 // pred_check
          %p285 = pneg %p118
        $region14: #{toxicity_classifier_forward.1} parent=11 // pred_check_branch
          %287 = sbr.rel (%p285) target = $region16
        $region15: #{toxicity_classifier_forward.1} parent=11 // pred_region
          _
        $region16: #{toxicity_classifier_forward.1} parent=11 // pred_fallthru
          _
        // Predicated region
        $region17: #{toxicity_classifier_forward.1} parent=11 // pred_check
          %p288 = pneg %p139
        $region18: #{toxicity_classifier_forward.1} parent=11 // pred_check_branch
          %290 = sbr.rel (%p288) target = $region20
        $region19: #{toxicity_classifier_forward.1} parent=11 // pred_region
          _
        $region20: #{toxicity_classifier_forward.1} parent=11 // pred_fallthru
          _
        // Predicated region
        $region21: #{toxicity_classifier_forward.1} parent=11 // pred_check
          %p291 = pneg %p160
        $region22: #{toxicity_classifier_forward.1} parent=11 // pred_check_branch
          %293 = sbr.rel (%p291) target = $region24
        $region23: #{toxicity_classifier_forward.1} parent=11 // pred_region
          _
        $region24: #{toxicity_classifier_forward.1} parent=11 // pred_fallthru
          _
        // Predicated region
        $region25: #{toxicity_classifier_forward.1} parent=11 // pred_check
          %p294 = pneg %p181
        $region26: #{toxicity_classifier_forward.1} parent=11 // pred_check_branch
          %296 = sbr.rel (%p294) target = $region28
        $region27: #{toxicity_classifier_forward.1} parent=11 // pred_region
          _
        $region28: #{toxicity_classifier_forward.1} parent=11 // pred_fallthru
          _
        // Predicated region
        $region29: #{toxicity_classifier_forward.1} parent=11 // pred_check
          %p297 = pneg %p202
        $region30: #{toxicity_classifier_forward.1} parent=11 // pred_check_branch
          %299 = sbr.rel (%p297) target = $region32
        $region31: #{toxicity_classifier_forward.1} parent=11 // pred_region
          _
        $region32: #{toxicity_classifier_forward.1} parent=11 // pred_fallthru
          _
        // Predicated region
        $region33: #{toxicity_classifier_forward.1} parent=11 // pred_check
          %p300 = pneg %p223
        $region34: #{toxicity_classifier_forward.1} parent=11 // pred_check_branch
          %302 = sbr.rel (%p300) target = $region36
        $region35: #{toxicity_classifier_forward.1} parent=11 // pred_region
          _
        $region36: #{toxicity_classifier_forward.1} parent=11 // pred_fallthru
          _
        // Predicated region
        $region37: #{toxicity_classifier_forward.1} parent=11 // pred_check
          %p303 = pneg %p244
        $region38: #{toxicity_classifier_forward.1} parent=11 // pred_check_branch
          %305 = sbr.rel (%p303) target = $region40
        $region39: #{toxicity_classifier_forward.1} parent=11 // pred_region
          _
        $region40: #{toxicity_classifier_forward.1} parent=11 // pred_fallthru
          _
      $region12: #{toxicity_classifier_forward.1} parent=5 // pred_fallthru
        _
      %p306 = scmp.lt.s32.totalorder %s19, 2
      // Predicated region
      $region41: #{toxicity_classifier_forward.1} parent=5 // pred_check
        %p307 = pneg %p306
      $region42: #{toxicity_classifier_forward.1} parent=5 // pred_check_branch
        %309 = sbr.rel (%p307) target = $region44
      $region43: #{toxicity_classifier_forward.1} parent=5 // pred_region
        // Predicated region
        $region45: #{toxicity_classifier_forward.1} parent=43 // pred_check
          %p310 = pneg %p39
        $region46: #{toxicity_classifier_forward.1} parent=43 // pred_check_branch
          %312 = sbr.rel (%p310) target = $region48
        $region47: #{toxicity_classifier_forward.1} parent=43 // pred_region
          %p313 = scmp.lt.s32.totalorder %s19, 1
          %s314 = scalar_select %p313, %s19, 1
          %s315 = smul.addr %s314, 8
          %s316 = scalar_lea.vmem %s0, %s315
        $region48: #{toxicity_classifier_forward.1} parent=43 // pred_fallthru
          _
        // Predicated region
        $region49: #{toxicity_classifier_forward.1} parent=43 // pred_check
          %p317 = pneg %p65
        $region50: #{toxicity_classifier_forward.1} parent=43 // pred_check_branch
          %319 = sbr.rel (%p317) target = $region52
        $region51: #{toxicity_classifier_forward.1} parent=43 // pred_region
          %p320 = scmp.lt.s32.totalorder %s19, 1
          %s321 = scalar_select %p320, %s19, 1
          %s322 = smul.addr %s321, 8
          %s323 = scalar_lea.vmem %s1, %s322
        $region52: #{toxicity_classifier_forward.1} parent=43 // pred_fallthru
          _
        // Predicated region
        $region53: #{toxicity_classifier_forward.1} parent=43 // pred_check
          %p324 = pneg %p91
        $region54: #{toxicity_classifier_forward.1} parent=43 // pred_check_branch
          %326 = sbr.rel (%p324) target = $region56
        $region55: #{toxicity_classifier_forward.1} parent=43 // pred_region
          %p327 = scmp.lt.s32.totalorder %s19, 1
          %s328 = scalar_select %p327, %s19, 1
          %s329 = scalar_lea.vmem %s2, %s328
        $region56: #{toxicity_classifier_forward.1} parent=43 // pred_fallthru
          _
      $region44: #{toxicity_classifier_forward.1} parent=5 // pred_fallthru
        _
      %p330 = scmp.le.s32.totalorder 1, %s19
      %p331 = scmp.lt.s32.totalorder %s19, 3
      %p332 = pnand %p330, %p331
      %p333 = pneg %p332
      // Predicated region
      $region57: #{toxicity_classifier_forward.1} parent=5 // pred_check
        _
      $region58: #{toxicity_classifier_forward.1} parent=5 // pred_check_branch
        %335 = sbr.rel (%p332) target = $region60
      $region59: #{toxicity_classifier_forward.1} parent=5 // pred_region
        %s336 = ssub.s32 %s19, 1
        %p337 = scmp.lt.s32.totalorder %s24, 1
        %s338 = scalar_select %p337, %s24, 1
        %s339 = smul.addr %s338, 8
        %s340 = scalar_lea.vmem %s0, %s339
        %p341 = pneg %p45
        %p342 = pneg %p42
        %p343 = scmp.lt.s32.totalorder %s24, 1
        %s344 = scalar_select %p343, %s24, 1
        %s345 = smul.addr %s344, 8
        %s346 = scalar_lea.vmem %s1, %s345
        %p347 = pneg %p71
        %p348 = pneg %p68
        %p349 = scmp.lt.s32.totalorder %s24, 1
        %s350 = scalar_select %p349, %s24, 1
        %s351 = scalar_lea.vmem %s2, %s350
        %p352 = pneg %p97
        %p353 = pneg %p94
        %p354 = pneg %p118
        %p355 = pneg %p115
        %p356 = pneg %p139
        %p357 = pneg %p136
        %p358 = pneg %p160
        %p359 = pneg %p157
        %p360 = pneg %p181
        %p361 = pneg %p178
        %p362 = pneg %p202
        %p363 = pneg %p199
        %p364 = pneg %p223
        %p365 = pneg %p220
        %p366 = pneg %p244
        %p367 = pneg %p241
        %p368 = pneg %p270
        %p369 = pneg %p267
        %s370 = sand.u32 %s257, 1
        %s371 = scalar_lea.sflag [#allocation3], %s370
        %s372 = sand.u32 %s257, 1
        %s373 = scalar_lea.vmem [#allocation2], %s372
        %p374 = scmp.lt.s32.totalorder %s24, 1
        %s375 = scalar_select %p374, %s24, 1
        %s376 = smul.addr %s375, 8
        %s377 = scalar_lea.vmem %s0, %s376
        %p378 = scmp.lt.s32.totalorder %s24, 1
        %s379 = scalar_select %p378, %s24, 1
        %s380 = smul.addr %s379, 8
        %s381 = scalar_lea.vmem %s1, %s380
        %p382 = scmp.lt.s32.totalorder %s24, 1
        %s383 = scalar_select %p382, %s24, 1
        %s384 = scalar_lea.vmem %s2, %s383
        %v386 = vld [vmem:[%s4] sm:$0xff]
        %v387 = vld [vmem:[%s4 + $0x8] sm:$0xff]
        %v388 = vld [vmem:[%s4 + $0x10] sm:$0xff]
        %v389 = vld [vmem:[%s377] sm:$0xff]
        %v390 = vld [vmem:[%s381] sm:$0xff]
        %v391 = vld [vmem:[%s384] sm:$0x1]
        %v392 = vld [vmem:[%s3] sm:$0xf]
        %v393 = vld [vmem:[%s3 + $0x4] sm:$0xf]
        %v394 = vld [vmem:[%s3 + $0x8] sm:$0xf]
        %v395 = vld [vmem:[%s3 + $0xc] sm:$0xf]
        %v396 = vld [vmem:[%s3 + $0x10] sm:$0xf]
        %v397 = vld [vmem:[%s3 + $0x14] sm:$0xf]
        %v398 = vld [vmem:[%s3 + $0x18] sm:$0xf]
        %v399 = vld [vmem:[%s3 + $0x1c] sm:$0xf]
        %v400 = vld [vmem:[%s3 + $0x20] sm:$0xf]
        %v401 = vld [vmem:[%s3 + $0x24] sm:$0xf]
        %v402 = vunpack.c.l.bf16 %v401
        %v403 = vlaneseq
        %v404 = vand.u32 %v403, 127
        %405 = vset.pattern.permute.xlu0 0
        %406 = vperm.xlu0 %405, %v389
        %v407 = vpop.permute.xlu0 %406
        %vm408 = vcmp.eq.s32.totalorder %v407, %v404
        %v409 = vsel %vm408, 1.0, 0.0
        %v410 = vpack.c.bf16 %v409, %v409
        %v411 = vlaneseq
        %v412 = vshrl.u32 %v411, 7
        %vm413 = vcmp.le.s32.totalorder %v404, %v412
        %v414 = vsel %vm413, 1.0, 0.0
        %v416 = vlaneseq
        %v417 = vshrl.u32 %v416, 7
        %v418 = vsub.s32 0, %v417
        %v419 = vrot.slane %v391, %v418
        %v421 = vmul.f32 %v414, %v419
        %vm422 = vcmask 64512
        %v423 = vsel %vm422, %v421, 0.0
        %424 = vadd.xlane.f32.xlu0 %v423
        %v425 = vpop.xlane.xlu0 %424
        %v426 = vmul.f32 %v425, %v390
        %v427 = vadd.f32 %v426, 1.0
        %v428 = vcvt.f32.s32.to.zero.pseudo %v427
        %429 = vset.pattern.permute.xlu0 0
        %430 = vperm.xlu0 %429, %v428
        %v431 = vpop.permute.xlu0 %430
        %vm432 = vcmp.eq.s32.totalorder %v431, %v404
        %v433 = vsel %vm432, 1.0, 0.0
        %v434 = vpack.c.bf16 %v433, %v433
        %v437 = vunpack.c.l.b16 %v400
        %v438 = vunpack.c.l.b16 %v401
        %v439 = vpack.c.b16 %v438, %v437
        %vm440 = vcmask 80896
        %v442 = vsel %vm440, %v434, 0
        %vm444 = vcmask 1044480
        %v446 = vsel %vm444, %v439, 0
        %448 = vmatprep.subr.bf16.mxu0 0
        %449 = vmatpush1.bf16.msra.mxu0 0
        %450 = vmatprep.subr.bf16.mxu0 0
        %451 = vmatpush1.bf16.msra.mxu0 0
        %452 = vmatprep.subr.bf16.mxu0 0
        %453 = vmatpush1.bf16.msra.mxu0 0
        %454 = vmatprep.subr.bf16.mxu0 0
        %455 = vmatpush1.bf16.msra.mxu0 0
        %456 = vmatprep.subr.bf16.mxu0 0
        %457 = vmatpush1.bf16.msra.mxu0 0
        %458 = vmatprep.subr.bf16.mxu0 0
        %459 = vmatpush1.bf16.msra.mxu0 0
        %460 = vmatprep.subr.bf16.mxu0 0
        %461 = vmatpush1.bf16.msra.mxu0 0
        %462 = vmatprep.subr.bf16.mxu0 0
        %463 = vmatpush1.bf16.msra.mxu0 %v446
        %464 = vmatprep.subr.bf16.mxu0 0
        %465 = vmatpush2.bf16.msra.mxu0 0
        %466 = vmatprep.subr.bf16.mxu0 0
        %467 = vmatpush2.bf16.msra.mxu0 0
        %468 = vmatprep.subr.bf16.mxu0 0
        %469 = vmatpush2.bf16.msra.mxu0 0
        %470 = vmatprep.subr.bf16.mxu0 0
        %471 = vmatpush2.bf16.msra.mxu0 0
        %472 = vmatprep.subr.bf16.mxu0 0
        %473 = vmatpush2.bf16.msra.mxu0 0
        %474 = vmatprep.subr.bf16.mxu0 0
        %475 = vmatpush2.bf16.msra.mxu0 0
        %476 = vmatprep.subr.bf16.mxu0 0
        %477 = vmatpush2.bf16.msra.mxu0 0
        %478 = vmatprep.subr.bf16.mxu0 0
        %479 = vmatpush2.bf16.msra.mxu0 0
        %480 = vmatprep.mubr.bf16.mxu0 0
        %481 = vmatmul.mubr.bf16.gmra.mxu0 %v442
        %v482 = vpop.f32.mrf.mxu0
        %v483 = vadd.f32 0.0, %v482
        %v484 = vpop.f32.mrf.mxu0
        %v485 = vpop.f32.mrf.mxu0
        %v486 = vpop.f32.mrf.mxu0
        %487 = vdwg.mxu0
        %v496 = vunpack.c.l.b16 %v392
        %v497 = vunpack.c.l.b16 %v393
        %v498 = vunpack.c.l.b16 %v394
        %v499 = vunpack.c.l.b16 %v395
        %v500 = vunpack.c.l.b16 %v396
        %v501 = vunpack.c.l.b16 %v397
        %v502 = vunpack.c.l.b16 %v398
        %v503 = vunpack.c.l.b16 %v399
        %v504 = vpack.c.b16 %v497, %v496
        %v505 = vpack.c.b16 %v499, %v498
        %v506 = vpack.c.b16 %v501, %v500
        %v507 = vpack.c.b16 %v503, %v502
        %vm512 = vcmask 523264
        %v514 = vsel %vm512, %v410, 0
        %516 = vmatprep.subr.bf16.mxu0 0
        %517 = vmatpush1.bf16.msra.mxu0 0
        %518 = vmatprep.subr.bf16.mxu0 0
        %519 = vmatpush1.bf16.msra.mxu0 0
        %520 = vmatprep.subr.bf16.mxu0 0
        %521 = vmatpush1.bf16.msra.mxu0 0
        %522 = vmatprep.subr.bf16.mxu0 0
        %523 = vmatpush1.bf16.msra.mxu0 0
        %524 = vmatprep.subr.bf16.mxu0 0
        %525 = vmatpush1.bf16.msra.mxu0 %v507
        %526 = vmatprep.subr.bf16.mxu0 0
        %527 = vmatpush1.bf16.msra.mxu0 %v506
        %528 = vmatprep.subr.bf16.mxu0 0
        %529 = vmatpush1.bf16.msra.mxu0 %v505
        %530 = vmatprep.subr.bf16.mxu0 0
        %531 = vmatpush1.bf16.msra.mxu0 %v504
        %532 = vmatprep.subr.bf16.mxu0 0
        %533 = vmatpush2.bf16.msra.mxu0 0
        %534 = vmatprep.subr.bf16.mxu0 0
        %535 = vmatpush2.bf16.msra.mxu0 0
        %536 = vmatprep.subr.bf16.mxu0 0
        %537 = vmatpush2.bf16.msra.mxu0 0
        %538 = vmatprep.subr.bf16.mxu0 0
        %539 = vmatpush2.bf16.msra.mxu0 0
        %540 = vmatprep.subr.bf16.mxu0 0
        %541 = vmatpush2.bf16.msra.mxu0 0
        %542 = vmatprep.subr.bf16.mxu0 0
        %543 = vmatpush2.bf16.msra.mxu0 0
        %544 = vmatprep.subr.bf16.mxu0 0
        %545 = vmatpush2.bf16.msra.mxu0 0
        %546 = vmatprep.subr.bf16.mxu0 0
        %547 = vmatpush2.bf16.msra.mxu0 0
        %548 = vmatprep.mubr.bf16.mxu0 0
        %549 = vmatmul.mubr.bf16.gmra.mxu0 %v514
        %v550 = vpop.f32.mrf.mxu0
        %v551 = vadd.f32 %v483, %v550
        %v552 = vpop.f32.mrf.mxu0
        %v553 = vpop.f32.mrf.mxu0
        %v554 = vpop.f32.mrf.mxu0
        %555 = vdwg.mxu0
        %v556 = vlaneseq
        %v557 = vshrl.u32 %v556, 7
        %v558 = vsub.s32 2, %v557
        %v559 = vrot.slane %v402, %v558
        %v560 = vadd.f32 %v551, %v559
        %vm561 = vcmask 261120
        %v562 = vsel %vm561, %v560, 0.0
        %563 = vadd.xlane.f32.xlu0 %v562
        %v564 = vpop.xlane.xlu0 %563
        %v565 = vrcp.pop 32.0
        %v566 = vmul.f32 %v564, %v565
        %v567 = vsub.f32 %v560, %v566
        %v568 = vmul.f32 %v567, %v567
        %v569 = vsel %vm561, %v568, 0.0
        %570 = vadd.xlane.f32.xlu0 %v569
        %v571 = vpop.xlane.xlu0 %570
        %v572 = vmul.f32 %v571, %v565
        %v573 = vadd.f32 %v572, 1e-05
        %v574 = vrsqrt.pop %v573
        %v575 = vmul.f32 %v567, %v574
        %v576 = vlaneseq
        %v577 = vshrl.u32 %v576, 7
        %v578 = vsub.s32 0, %v577
        %v579 = vrot.slane %v386, %v578
        %v580 = vmul.f32 %v575, %v579
        %v581 = vlaneseq
        %v582 = vshrl.u32 %v581, 7
        %v583 = vsub.s32 1, %v582
        %v584 = vrot.slane %v386, %v583
        %v585 = vadd.f32 %v580, %v584
        %v586 = vsub.f32 1.0, %v391
        %v587 = vmul.f32 %v586, -1e+09
        %v588 = vpack.c.bf16 %v585, %v585
        %v589 = vld [vmem:[%s5] sm:$0xf]
        %v590 = vld [vmem:[%s5 + $0x4] sm:$0xf]
        %v591 = vld [vmem:[%s5 + $0x8] sm:$0xf]
        %v592 = vld [vmem:[%s5 + $0xc] sm:$0xf]
        %v593 = vlaneseq
        %v594 = vshrl.u32 %v593, 7
        %v595 = vsub.s32 2, %v594
        %v596 = vrot.slane %v386, %v595
        %v601 = vunpack.c.l.b16 %v589
        %v602 = vunpack.c.l.b16 %v590
        %v603 = vunpack.c.l.b16 %v591
        %v604 = vunpack.c.l.b16 %v592
        %v605 = vpack.c.b16 %v602, %v601
        %v606 = vpack.c.b16 %v604, %v603
        %v610 = vsel %vm561, %v588, 0
        %612 = vmatprep.subr.bf16.mxu0 0
        %613 = vmatpush1.bf16.msra.mxu0 0
        %614 = vmatprep.subr.bf16.mxu0 0
        %615 = vmatpush1.bf16.msra.mxu0 0
        %616 = vmatprep.subr.bf16.mxu0 0
        %617 = vmatpush1.bf16.msra.mxu0 0
        %618 = vmatprep.subr.bf16.mxu0 0
        %619 = vmatpush1.bf16.msra.mxu0 0
        %620 = vmatprep.subr.bf16.mxu0 0
        %621 = vmatpush1.bf16.msra.mxu0 0
        %622 = vmatprep.subr.bf16.mxu0 0
        %623 = vmatpush1.bf16.msra.mxu0 0
        %624 = vmatprep.subr.bf16.mxu0 0
        %625 = vmatpush1.bf16.msra.mxu0 %v606
        %626 = vmatprep.subr.bf16.mxu0 0
        %627 = vmatpush1.bf16.msra.mxu0 %v605
        %628 = vmatprep.subr.bf16.mxu0 0
        %629 = vmatpush2.bf16.msra.mxu0 0
        %630 = vmatprep.subr.bf16.mxu0 0
        %631 = vmatpush2.bf16.msra.mxu0 0
        %632 = vmatprep.subr.bf16.mxu0 0
        %633 = vmatpush2.bf16.msra.mxu0 0
        %634 = vmatprep.subr.bf16.mxu0 0
        %635 = vmatpush2.bf16.msra.mxu0 0
        %636 = vmatprep.subr.bf16.mxu0 0
        %637 = vmatpush2.bf16.msra.mxu0 0
        %638 = vmatprep.subr.bf16.mxu0 0
        %639 = vmatpush2.bf16.msra.mxu0 0
        %640 = vmatprep.subr.bf16.mxu0 0
        %641 = vmatpush2.bf16.msra.mxu0 0
        %642 = vmatprep.subr.bf16.mxu0 0
        %643 = vmatpush2.bf16.msra.mxu0 0
        %644 = vmatprep.mubr.bf16.mxu0 0
        %645 = vmatmul.mubr.bf16.gmra.mxu0 %v610
        %v646 = vpop.f32.mrf.mxu0
        %v647 = vadd.f32 %v596, %v646
        %v648 = vpop.f32.mrf.mxu0
        %v649 = vpop.f32.mrf.mxu0
        %v650 = vpop.f32.mrf.mxu0
        %651 = vdwg.mxu0
        %v652 = vpack.c.bf16 %v647, %v647
        %654 = vrot.lane.b32.xlu0 %v652, 96
        %v655 = vpop.permute.xlu0 %654
        %v657 = vsel %vm422, %v652, 0
        %v660 = vsel %vm422, %v655, 0
        %662 = vmatprep.subr.bf16.mxu0 0
        %663 = vmatpush1.bf16.xpose.msra.mxu0 0
        %664 = vmatprep.subr.bf16.mxu0 0
        %665 = vmatpush1.bf16.xpose.msra.mxu0 0
        %666 = vmatprep.subr.bf16.mxu0 0
        %667 = vmatpush1.bf16.xpose.msra.mxu0 0
        %668 = vmatprep.subr.bf16.mxu0 0
        %669 = vmatpush1.bf16.xpose.msra.mxu0 0
        %670 = vmatprep.subr.bf16.mxu0 0
        %671 = vmatpush1.bf16.xpose.msra.mxu0 0
        %672 = vmatprep.subr.bf16.mxu0 0
        %673 = vmatpush1.bf16.xpose.msra.mxu0 0
        %674 = vmatprep.subr.bf16.mxu0 0
        %675 = vmatpush1.bf16.xpose.msra.mxu0 0
        %676 = vmatprep.subr.bf16.mxu0 0
        %677 = vmatpush1.bf16.xpose.msra.mxu0 %v660
        %678 = vmatprep.subr.bf16.mxu0 0
        %679 = vmatpush2.bf16.xpose.msra.mxu0 0
        %680 = vmatprep.subr.bf16.mxu0 0
        %681 = vmatpush2.bf16.xpose.msra.mxu0 0
        %682 = vmatprep.subr.bf16.mxu0 0
        %683 = vmatpush2.bf16.xpose.msra.mxu0 0
        %684 = vmatprep.subr.bf16.mxu0 0
        %685 = vmatpush2.bf16.xpose.msra.mxu0 0
        %686 = vmatprep.subr.bf16.mxu0 0
        %687 = vmatpush2.bf16.xpose.msra.mxu0 0
        %688 = vmatprep.subr.bf16.mxu0 0
        %689 = vmatpush2.bf16.xpose.msra.mxu0 0
        %690 = vmatprep.subr.bf16.mxu0 0
        %691 = vmatpush2.bf16.xpose.msra.mxu0 0
        %692 = vmatprep.subr.bf16.mxu0 0
        %693 = vmatpush2.bf16.xpose.msra.mxu0 0
        %694 = vmatprep.mubr.bf16.mxu0 0
        %695 = vmatmul.mubr.bf16.gmra.mxu0 %v657
        %v696 = vpop.f32.mrf.mxu0
        %v697 = vadd.f32 0.0, %v696
        %v698 = vpop.f32.mrf.mxu0
        %v699 = vpop.f32.mrf.mxu0
        %v700 = vpop.f32.mrf.mxu0
        %701 = vdwg.mxu0
        %v702 = vmul.f32 %v697, 0.35355338
        %v704 = vlaneseq
        %v705 = vshrl.u32 %v704, 7
        %v706 = vsub.s32 0, %v705
        %v707 = vrot.slane %v587, %v706
        %v709 = vadd.f32 %v702, %v707
        %v710 = vsel %vm422, %v709, -inf
        %711 = vmax.xlane.f32.xlu0 %v710
        %v712 = vpop.xlane.xlu0 %711
        %v713 = vsub.f32 %v709, %v712
        %v714 = vmul.f32 %v713, 1.442695
        %v715 = vpow.pop %v714
        %v716 = vsel %vm422, %v715, 0.0
        %717 = vadd.xlane.f32.xlu0 %v716
        %v718 = vpop.xlane.xlu0 %717
        %v719 = vrcp.pop %v718
        %v720 = vmul.f32 %v715, %v719
        %v721 = vpack.c.bf16 %v720, %v720
        %722 = vrot.lane.b32.xlu0 %v652, 64
        %v723 = vpop.permute.xlu0 %722
        %v725 = vsel %vm422, %v721, 0
        %vm727 = vcmask 1043456
        %v729 = vsel %vm727, %v723, 0
        %731 = vmatprep.subr.bf16.mxu0 0
        %732 = vmatpush1.bf16.msra.mxu0 0
        %733 = vmatprep.subr.bf16.mxu0 0
        %734 = vmatpush1.bf16.msra.mxu0 0
        %735 = vmatprep.subr.bf16.mxu0 0
        %736 = vmatpush1.bf16.msra.mxu0 0
        %737 = vmatprep.subr.bf16.mxu0 0
        %738 = vmatpush1.bf16.msra.mxu0 0
        %739 = vmatprep.subr.bf16.mxu0 0
        %740 = vmatpush1.bf16.msra.mxu0 0
        %741 = vmatprep.subr.bf16.mxu0 0
        %742 = vmatpush1.bf16.msra.mxu0 0
        %743 = vmatprep.subr.bf16.mxu0 0
        %744 = vmatpush1.bf16.msra.mxu0 0
        %745 = vmatprep.subr.bf16.mxu0 0
        %746 = vmatpush1.bf16.msra.mxu0 %v729
        %747 = vmatprep.subr.bf16.mxu0 0
        %748 = vmatpush2.bf16.msra.mxu0 0
        %749 = vmatprep.subr.bf16.mxu0 0
        %750 = vmatpush2.bf16.msra.mxu0 0
        %751 = vmatprep.subr.bf16.mxu0 0
        %752 = vmatpush2.bf16.msra.mxu0 0
        %753 = vmatprep.subr.bf16.mxu0 0
        %754 = vmatpush2.bf16.msra.mxu0 0
        %755 = vmatprep.subr.bf16.mxu0 0
        %756 = vmatpush2.bf16.msra.mxu0 0
        %757 = vmatprep.subr.bf16.mxu0 0
        %758 = vmatpush2.bf16.msra.mxu0 0
        %759 = vmatprep.subr.bf16.mxu0 0
        %760 = vmatpush2.bf16.msra.mxu0 0
        %761 = vmatprep.subr.bf16.mxu0 0
        %762 = vmatpush2.bf16.msra.mxu0 0
        %763 = vmatprep.mubr.bf16.mxu0 0
        %764 = vmatmul.mubr.bf16.gmra.mxu0 %v725
        %v765 = vpop.f32.mrf.mxu0
        %v766 = vadd.f32 0.0, %v765
        %v767 = vpop.f32.mrf.mxu0
        %v768 = vpop.f32.mrf.mxu0
        %v769 = vpop.f32.mrf.mxu0
        %770 = vdwg.mxu0
        %771 = vrot.lane.b32.xlu0 %v652, 120
        %v772 = vpop.permute.xlu0 %771
        %773 = vrot.lane.b32.xlu0 %v652, 88
        %v774 = vpop.permute.xlu0 %773
        %v776 = vsel %vm422, %v772, 0
        %v779 = vsel %vm422, %v774, 0
        %781 = vmatprep.subr.bf16.mxu0 0
        %782 = vmatpush1.bf16.xpose.msra.mxu0 0
        %783 = vmatprep.subr.bf16.mxu0 0
        %784 = vmatpush1.bf16.xpose.msra.mxu0 0
        %785 = vmatprep.subr.bf16.mxu0 0
        %786 = vmatpush1.bf16.xpose.msra.mxu0 0
        %787 = vmatprep.subr.bf16.mxu0 0
        %788 = vmatpush1.bf16.xpose.msra.mxu0 0
        %789 = vmatprep.subr.bf16.mxu0 0
        %790 = vmatpush1.bf16.xpose.msra.mxu0 0
        %791 = vmatprep.subr.bf16.mxu0 0
        %792 = vmatpush1.bf16.xpose.msra.mxu0 0
        %793 = vmatprep.subr.bf16.mxu0 0
        %794 = vmatpush1.bf16.xpose.msra.mxu0 0
        %795 = vmatprep.subr.bf16.mxu0 0
        %796 = vmatpush1.bf16.xpose.msra.mxu0 %v779
        %797 = vmatprep.subr.bf16.mxu0 0
        %798 = vmatpush2.bf16.xpose.msra.mxu0 0
        %799 = vmatprep.subr.bf16.mxu0 0
        %800 = vmatpush2.bf16.xpose.msra.mxu0 0
        %801 = vmatprep.subr.bf16.mxu0 0
        %802 = vmatpush2.bf16.xpose.msra.mxu0 0
        %803 = vmatprep.subr.bf16.mxu0 0
        %804 = vmatpush2.bf16.xpose.msra.mxu0 0
        %805 = vmatprep.subr.bf16.mxu0 0
        %806 = vmatpush2.bf16.xpose.msra.mxu0 0
        %807 = vmatprep.subr.bf16.mxu0 0
        %808 = vmatpush2.bf16.xpose.msra.mxu0 0
        %809 = vmatprep.subr.bf16.mxu0 0
        %810 = vmatpush2.bf16.xpose.msra.mxu0 0
        %811 = vmatprep.subr.bf16.mxu0 0
        %812 = vmatpush2.bf16.xpose.msra.mxu0 0
        %813 = vmatprep.mubr.bf16.mxu0 0
        %814 = vmatmul.mubr.bf16.gmra.mxu0 %v776
        %v815 = vpop.f32.mrf.mxu0
        %v816 = vadd.f32 0.0, %v815
        %v817 = vpop.f32.mrf.mxu0
        %v818 = vpop.f32.mrf.mxu0
        %v819 = vpop.f32.mrf.mxu0
        %820 = vdwg.mxu0
        %v821 = vmul.f32 %v816, 0.35355338
        %v822 = vadd.f32 %v821, %v707
        %v823 = vsel %vm422, %v822, -inf
        %824 = vmax.xlane.f32.xlu0 %v823
        %v825 = vpop.xlane.xlu0 %824
        %v826 = vsub.f32 %v822, %v825
        %v827 = vmul.f32 %v826, 1.442695
        %v828 = vpow.pop %v827
        %v829 = vsel %vm422, %v828, 0.0
        %830 = vadd.xlane.f32.xlu0 %v829
        %v831 = vpop.xlane.xlu0 %830
        %v832 = vrcp.pop %v831
        %v833 = vmul.f32 %v828, %v832
        %v834 = vpack.c.bf16 %v833, %v833
        %835 = vrot.lane.b32.xlu0 %v652, 56
        %v836 = vpop.permute.xlu0 %835
        %v838 = vsel %vm422, %v834, 0
        %v841 = vsel %vm727, %v836, 0
        %843 = vmatprep.subr.bf16.mxu0 0
        %844 = vmatpush1.bf16.msra.mxu0 0
        %845 = vmatprep.subr.bf16.mxu0 0
        %846 = vmatpush1.bf16.msra.mxu0 0
        %847 = vmatprep.subr.bf16.mxu0 0
        %848 = vmatpush1.bf16.msra.mxu0 0
        %849 = vmatprep.subr.bf16.mxu0 0
        %850 = vmatpush1.bf16.msra.mxu0 0
        %851 = vmatprep.subr.bf16.mxu0 0
        %852 = vmatpush1.bf16.msra.mxu0 0
        %853 = vmatprep.subr.bf16.mxu0 0
        %854 = vmatpush1.bf16.msra.mxu0 0
        %855 = vmatprep.subr.bf16.mxu0 0
        %856 = vmatpush1.bf16.msra.mxu0 0
        %857 = vmatprep.subr.bf16.mxu0 0
        %858 = vmatpush1.bf16.msra.mxu0 %v841
        %859 = vmatprep.subr.bf16.mxu0 0
        %860 = vmatpush2.bf16.msra.mxu0 0
        %861 = vmatprep.subr.bf16.mxu0 0
        %862 = vmatpush2.bf16.msra.mxu0 0
        %863 = vmatprep.subr.bf16.mxu0 0
        %864 = vmatpush2.bf16.msra.mxu0 0
        %865 = vmatprep.subr.bf16.mxu0 0
        %866 = vmatpush2.bf16.msra.mxu0 0
        %867 = vmatprep.subr.bf16.mxu0 0
        %868 = vmatpush2.bf16.msra.mxu0 0
        %869 = vmatprep.subr.bf16.mxu0 0
        %870 = vmatpush2.bf16.msra.mxu0 0
        %871 = vmatprep.subr.bf16.mxu0 0
        %872 = vmatpush2.bf16.msra.mxu0 0
        %873 = vmatprep.subr.bf16.mxu0 0
        %874 = vmatpush2.bf16.msra.mxu0 0
        %875 = vmatprep.mubr.bf16.mxu0 0
        %876 = vmatmul.mubr.bf16.gmra.mxu0 %v838
        %v877 = vpop.f32.mrf.mxu0
        %v878 = vadd.f32 0.0, %v877
        %v879 = vpop.f32.mrf.mxu0
        %v880 = vpop.f32.mrf.mxu0
        %v881 = vpop.f32.mrf.mxu0
        %882 = vdwg.mxu0
        %883 = vrot.lane.b32.xlu0 %v652, 112
        %v884 = vpop.permute.xlu0 %883
        %885 = vrot.lane.b32.xlu0 %v652, 80
        %v886 = vpop.permute.xlu0 %885
        %v888 = vsel %vm422, %v884, 0
        %v891 = vsel %vm422, %v886, 0
        %893 = vmatprep.subr.bf16.mxu0 0
        %894 = vmatpush1.bf16.xpose.msra.mxu0 0
        %895 = vmatprep.subr.bf16.mxu0 0
        %896 = vmatpush1.bf16.xpose.msra.mxu0 0
        %897 = vmatprep.subr.bf16.mxu0 0
        %898 = vmatpush1.bf16.xpose.msra.mxu0 0
        %899 = vmatprep.subr.bf16.mxu0 0
        %900 = vmatpush1.bf16.xpose.msra.mxu0 0
        %901 = vmatprep.subr.bf16.mxu0 0
        %902 = vmatpush1.bf16.xpose.msra.mxu0 0
        %903 = vmatprep.subr.bf16.mxu0 0
        %904 = vmatpush1.bf16.xpose.msra.mxu0 0
        %905 = vmatprep.subr.bf16.mxu0 0
        %906 = vmatpush1.bf16.xpose.msra.mxu0 0
        %907 = vmatprep.subr.bf16.mxu0 0
        %908 = vmatpush1.bf16.xpose.msra.mxu0 %v891
        %909 = vmatprep.subr.bf16.mxu0 0
        %910 = vmatpush2.bf16.xpose.msra.mxu0 0
        %911 = vmatprep.subr.bf16.mxu0 0
        %912 = vmatpush2.bf16.xpose.msra.mxu0 0
        %913 = vmatprep.subr.bf16.mxu0 0
        %914 = vmatpush2.bf16.xpose.msra.mxu0 0
        %915 = vmatprep.subr.bf16.mxu0 0
        %916 = vmatpush2.bf16.xpose.msra.mxu0 0
        %917 = vmatprep.subr.bf16.mxu0 0
        %918 = vmatpush2.bf16.xpose.msra.mxu0 0
        %919 = vmatprep.subr.bf16.mxu0 0
        %920 = vmatpush2.bf16.xpose.msra.mxu0 0
        %921 = vmatprep.subr.bf16.mxu0 0
        %922 = vmatpush2.bf16.xpose.msra.mxu0 0
        %923 = vmatprep.subr.bf16.mxu0 0
        %924 = vmatpush2.bf16.xpose.msra.mxu0 0
        %925 = vmatprep.mubr.bf16.mxu0 0
        %926 = vmatmul.mubr.bf16.gmra.mxu0 %v888
        %v927 = vpop.f32.mrf.mxu0
        %v928 = vadd.f32 0.0, %v927
        %v929 = vpop.f32.mrf.mxu0
        %v930 = vpop.f32.mrf.mxu0
        %v931 = vpop.f32.mrf.mxu0
        %932 = vdwg.mxu0
        %v933 = vmul.f32 %v928, 0.35355338
        %v934 = vadd.f32 %v933, %v707
        %v935 = vsel %vm422, %v934, -inf
        %936 = vmax.xlane.f32.xlu0 %v935
        %v937 = vpop.xlane.xlu0 %936
        %v938 = vsub.f32 %v934, %v937
        %v939 = vmul.f32 %v938, 1.442695
        %v940 = vpow.pop %v939
        %v941 = vsel %vm422, %v940, 0.0
        %942 = vadd.xlane.f32.xlu0 %v941
        %v943 = vpop.xlane.xlu0 %942
        %v944 = vrcp.pop %v943
        %v945 = vmul.f32 %v940, %v944
        %v946 = vpack.c.bf16 %v945, %v945
        %947 = vrot.lane.b32.xlu0 %v652, 48
        %v948 = vpop.permute.xlu0 %947
        %v950 = vsel %vm422, %v946, 0
        %v953 = vsel %vm727, %v948, 0
        %955 = vmatprep.subr.bf16.mxu0 0
        %956 = vmatpush1.bf16.msra.mxu0 0
        %957 = vmatprep.subr.bf16.mxu0 0
        %958 = vmatpush1.bf16.msra.mxu0 0
        %959 = vmatprep.subr.bf16.mxu0 0
        %960 = vmatpush1.bf16.msra.mxu0 0
        %961 = vmatprep.subr.bf16.mxu0 0
        %962 = vmatpush1.bf16.msra.mxu0 0
        %963 = vmatprep.subr.bf16.mxu0 0
        %964 = vmatpush1.bf16.msra.mxu0 0
        %965 = vmatprep.subr.bf16.mxu0 0
        %966 = vmatpush1.bf16.msra.mxu0 0
        %967 = vmatprep.subr.bf16.mxu0 0
        %968 = vmatpush1.bf16.msra.mxu0 0
        %969 = vmatprep.subr.bf16.mxu0 0
        %970 = vmatpush1.bf16.msra.mxu0 %v953
        %971 = vmatprep.subr.bf16.mxu0 0
        %972 = vmatpush2.bf16.msra.mxu0 0
        %973 = vmatprep.subr.bf16.mxu0 0
        %974 = vmatpush2.bf16.msra.mxu0 0
        %975 = vmatprep.subr.bf16.mxu0 0
        %976 = vmatpush2.bf16.msra.mxu0 0
        %977 = vmatprep.subr.bf16.mxu0 0
        %978 = vmatpush2.bf16.msra.mxu0 0
        %979 = vmatprep.subr.bf16.mxu0 0
        %980 = vmatpush2.bf16.msra.mxu0 0
        %981 = vmatprep.subr.bf16.mxu0 0
        %982 = vmatpush2.bf16.msra.mxu0 0
        %983 = vmatprep.subr.bf16.mxu0 0
        %984 = vmatpush2.bf16.msra.mxu0 0
        %985 = vmatprep.subr.bf16.mxu0 0
        %986 = vmatpush2.bf16.msra.mxu0 0
        %987 = vmatprep.mubr.bf16.mxu0 0
        %988 = vmatmul.mubr.bf16.gmra.mxu0 %v950
        %v989 = vpop.f32.mrf.mxu0
        %v990 = vadd.f32 0.0, %v989
        %v991 = vpop.f32.mrf.mxu0
        %v992 = vpop.f32.mrf.mxu0
        %v993 = vpop.f32.mrf.mxu0
        %994 = vdwg.mxu0
        %995 = vrot.lane.b32.xlu0 %v652, 104
        %v996 = vpop.permute.xlu0 %995
        %997 = vrot.lane.b32.xlu0 %v652, 72
        %v998 = vpop.permute.xlu0 %997
        %v1000 = vsel %vm422, %v996, 0
        %v1003 = vsel %vm422, %v998, 0
        %1005 = vmatprep.subr.bf16.mxu0 0
        %1006 = vmatpush1.bf16.xpose.msra.mxu0 0
        %1007 = vmatprep.subr.bf16.mxu0 0
        %1008 = vmatpush1.bf16.xpose.msra.mxu0 0
        %1009 = vmatprep.subr.bf16.mxu0 0
        %1010 = vmatpush1.bf16.xpose.msra.mxu0 0
        %1011 = vmatprep.subr.bf16.mxu0 0
        %1012 = vmatpush1.bf16.xpose.msra.mxu0 0
        %1013 = vmatprep.subr.bf16.mxu0 0
        %1014 = vmatpush1.bf16.xpose.msra.mxu0 0
        %1015 = vmatprep.subr.bf16.mxu0 0
        %1016 = vmatpush1.bf16.xpose.msra.mxu0 0
        %1017 = vmatprep.subr.bf16.mxu0 0
        %1018 = vmatpush1.bf16.xpose.msra.mxu0 0
        %1019 = vmatprep.subr.bf16.mxu0 0
        %1020 = vmatpush1.bf16.xpose.msra.mxu0 %v1003
        %1021 = vmatprep.subr.bf16.mxu0 0
        %1022 = vmatpush2.bf16.xpose.msra.mxu0 0
        %1023 = vmatprep.subr.bf16.mxu0 0
        %1024 = vmatpush2.bf16.xpose.msra.mxu0 0
        %1025 = vmatprep.subr.bf16.mxu0 0
        %1026 = vmatpush2.bf16.xpose.msra.mxu0 0
        %1027 = vmatprep.subr.bf16.mxu0 0
        %1028 = vmatpush2.bf16.xpose.msra.mxu0 0
        %1029 = vmatprep.subr.bf16.mxu0 0
        %1030 = vmatpush2.bf16.xpose.msra.mxu0 0
        %1031 = vmatprep.subr.bf16.mxu0 0
        %1032 = vmatpush2.bf16.xpose.msra.mxu0 0
        %1033 = vmatprep.subr.bf16.mxu0 0
        %1034 = vmatpush2.bf16.xpose.msra.mxu0 0
        %1035 = vmatprep.subr.bf16.mxu0 0
        %1036 = vmatpush2.bf16.xpose.msra.mxu0 0
        %1037 = vmatprep.mubr.bf16.mxu0 0
        %1038 = vmatmul.mubr.bf16.gmra.mxu0 %v1000
        %v1039 = vpop.f32.mrf.mxu0
        %v1040 = vadd.f32 0.0, %v1039
        %v1041 = vpop.f32.mrf.mxu0
        %v1042 = vpop.f32.mrf.mxu0
        %v1043 = vpop.f32.mrf.mxu0
        %1044 = vdwg.mxu0
        %v1045 = vmul.f32 %v1040, 0.35355338
        %v1046 = vadd.f32 %v1045, %v707
        %v1047 = vsel %vm422, %v1046, -inf
        %1048 = vmax.xlane.f32.xlu0 %v1047
        %v1049 = vpop.xlane.xlu0 %1048
        %v1050 = vsub.f32 %v1046, %v1049
        %v1051 = vmul.f32 %v1050, 1.442695
        %v1052 = vpow.pop %v1051
        %v1053 = vsel %vm422, %v1052, 0.0
        %1054 = vadd.xlane.f32.xlu0 %v1053
        %v1055 = vpop.xlane.xlu0 %1054
        %v1056 = vrcp.pop %v1055
        %v1057 = vmul.f32 %v1052, %v1056
        %v1058 = vpack.c.bf16 %v1057, %v1057
        %1059 = vrot.lane.b32.xlu0 %v652, 40
        %v1060 = vpop.permute.xlu0 %1059
        %v1062 = vsel %vm422, %v1058, 0
        %v1065 = vsel %vm727, %v1060, 0
        %1067 = vmatprep.subr.bf16.mxu0 0
        %1068 = vmatpush1.bf16.msra.mxu0 0
        %1069 = vmatprep.subr.bf16.mxu0 0
        %1070 = vmatpush1.bf16.msra.mxu0 0
        %1071 = vmatprep.subr.bf16.mxu0 0
        %1072 = vmatpush1.bf16.msra.mxu0 0
        %1073 = vmatprep.subr.bf16.mxu0 0
        %1074 = vmatpush1.bf16.msra.mxu0 0
        %1075 = vmatprep.subr.bf16.mxu0 0
        %1076 = vmatpush1.bf16.msra.mxu0 0
        %1077 = vmatprep.subr.bf16.mxu0 0
        %1078 = vmatpush1.bf16.msra.mxu0 0
        %1079 = vmatprep.subr.bf16.mxu0 0
        %1080 = vmatpush1.bf16.msra.mxu0 0
        %1081 = vmatprep.subr.bf16.mxu0 0
        %1082 = vmatpush1.bf16.msra.mxu0 %v1065
        %1083 = vmatprep.subr.bf16.mxu0 0
        %1084 = vmatpush2.bf16.msra.mxu0 0
        %1085 = vmatprep.subr.bf16.mxu0 0
        %1086 = vmatpush2.bf16.msra.mxu0 0
        %1087 = vmatprep.subr.bf16.mxu0 0
        %1088 = vmatpush2.bf16.msra.mxu0 0
        %1089 = vmatprep.subr.bf16.mxu0 0
        %1090 = vmatpush2.bf16.msra.mxu0 0
        %1091 = vmatprep.subr.bf16.mxu0 0
        %1092 = vmatpush2.bf16.msra.mxu0 0
        %1093 = vmatprep.subr.bf16.mxu0 0
        %1094 = vmatpush2.bf16.msra.mxu0 0
        %1095 = vmatprep.subr.bf16.mxu0 0
        %1096 = vmatpush2.bf16.msra.mxu0 0
        %1097 = vmatprep.subr.bf16.mxu0 0
        %1098 = vmatpush2.bf16.msra.mxu0 0
        %1099 = vmatprep.mubr.bf16.mxu0 0
        %1100 = vmatmul.mubr.bf16.gmra.mxu0 %v1062
        %v1101 = vpop.f32.mrf.mxu0
        %v1102 = vadd.f32 0.0, %v1101
        %v1103 = vpop.f32.mrf.mxu0
        %v1104 = vpop.f32.mrf.mxu0
        %v1105 = vpop.f32.mrf.mxu0
        %1106 = vdwg.mxu0
        %1108 = vrot.lane.b32.xlu0 %v878, 8
        %v1109 = vpop.permute.xlu0 %1108
        %1112 = vrot.lane.b32.xlu0 %v990, 16
        %v1113 = vpop.permute.xlu0 %1112
        %1116 = vrot.lane.b32.xlu0 %v1102, 24
        %v1117 = vpop.permute.xlu0 %1116
        %v1119 = vsel %vm422, %v766, %v1109
        %vm1120 = vcmask 130048
        %v1121 = vsel %vm1120, %v1119, %v1113
        %vm1122 = vcmask 195584
        %v1123 = vsel %vm1122, %v1121, %v1117
        %v1124 = vpack.c.bf16 %v1123, %v1123
        %v1125 = vld [vmem:[%s6] sm:$0xf]
        %v1126 = vld [vmem:[%s6 + $0x4] sm:$0xf]
        %v1127 = vld [vmem:[%s6 + $0x8] sm:$0xf]
        %v1128 = vld [vmem:[%s6 + $0xc] sm:$0xf]
        %v1129 = vlaneseq
        %v1130 = vshrl.u32 %v1129, 7
        %v1131 = vsub.s32 3, %v1130
        %v1132 = vrot.slane %v386, %v1131
        %v1137 = vunpack.c.l.b16 %v1125
        %v1138 = vunpack.c.l.b16 %v1126
        %v1139 = vunpack.c.l.b16 %v1127
        %v1140 = vunpack.c.l.b16 %v1128
        %v1141 = vpack.c.b16 %v1138, %v1137
        %v1142 = vpack.c.b16 %v1140, %v1139
        %v1146 = vsel %vm561, %v1124, 0
        %1148 = vmatprep.subr.bf16.mxu0 0
        %1149 = vmatpush1.bf16.msra.mxu0 0
        %1150 = vmatprep.subr.bf16.mxu0 0
        %1151 = vmatpush1.bf16.msra.mxu0 0
        %1152 = vmatprep.subr.bf16.mxu0 0
        %1153 = vmatpush1.bf16.msra.mxu0 0
        %1154 = vmatprep.subr.bf16.mxu0 0
        %1155 = vmatpush1.bf16.msra.mxu0 0
        %1156 = vmatprep.subr.bf16.mxu0 0
        %1157 = vmatpush1.bf16.msra.mxu0 0
        %1158 = vmatprep.subr.bf16.mxu0 0
        %1159 = vmatpush1.bf16.msra.mxu0 0
        %1160 = vmatprep.subr.bf16.mxu0 0
        %1161 = vmatpush1.bf16.msra.mxu0 %v1142
        %1162 = vmatprep.subr.bf16.mxu0 0
        %1163 = vmatpush1.bf16.msra.mxu0 %v1141
        %1164 = vmatprep.subr.bf16.mxu0 0
        %1165 = vmatpush2.bf16.msra.mxu0 0
        %1166 = vmatprep.subr.bf16.mxu0 0
        %1167 = vmatpush2.bf16.msra.mxu0 0
        %1168 = vmatprep.subr.bf16.mxu0 0
        %1169 = vmatpush2.bf16.msra.mxu0 0
        %1170 = vmatprep.subr.bf16.mxu0 0
        %1171 = vmatpush2.bf16.msra.mxu0 0
        %1172 = vmatprep.subr.bf16.mxu0 0
        %1173 = vmatpush2.bf16.msra.mxu0 0
        %1174 = vmatprep.subr.bf16.mxu0 0
        %1175 = vmatpush2.bf16.msra.mxu0 0
        %1176 = vmatprep.subr.bf16.mxu0 0
        %1177 = vmatpush2.bf16.msra.mxu0 0
        %1178 = vmatprep.subr.bf16.mxu0 0
        %1179 = vmatpush2.bf16.msra.mxu0 0
        %1180 = vmatprep.mubr.bf16.mxu0 0
        %1181 = vmatmul.mubr.bf16.gmra.mxu0 %v1146
        %v1182 = vpop.f32.mrf.mxu0
        %v1183 = vadd.f32 %v1132, %v1182
        %v1184 = vpop.f32.mrf.mxu0
        %v1185 = vpop.f32.mrf.mxu0
        %v1186 = vpop.f32.mrf.mxu0
        %1187 = vdwg.mxu0
        %v1188 = vadd.f32 %v1183, %v585
        %v1189 = vsel %vm561, %v1188, 0.0
        %1190 = vadd.xlane.f32.xlu0 %v1189
        %v1191 = vpop.xlane.xlu0 %1190
        %v1192 = vmul.f32 %v1191, %v565
        %v1193 = vsub.f32 %v1188, %v1192
        %v1194 = vmul.f32 %v1193, %v1193
        %v1195 = vsel %vm561, %v1194, 0.0
        %1196 = vadd.xlane.f32.xlu0 %v1195
        %v1197 = vpop.xlane.xlu0 %1196
        %v1198 = vmul.f32 %v1197, %v565
        %v1199 = vadd.f32 %v1198, 1e-05
        %v1200 = vrsqrt.pop %v1199
        %v1201 = vmul.f32 %v1193, %v1200
        %v1202 = vlaneseq
        %v1203 = vshrl.u32 %v1202, 7
        %v1204 = vsub.s32 4, %v1203
        %v1205 = vrot.slane %v386, %v1204
        %v1206 = vmul.f32 %v1201, %v1205
        %v1207 = vlaneseq
        %v1208 = vshrl.u32 %v1207, 7
        %v1209 = vsub.s32 5, %v1208
        %v1210 = vrot.slane %v386, %v1209
        %v1211 = vadd.f32 %v1206, %v1210
        %v1212 = vpack.c.bf16 %v1211, %v1211
        %v1213 = vld [vmem:[%s7] sm:$0xf]
        %v1214 = vld [vmem:[%s7 + $0x4] sm:$0xf]
        %v1215 = vld [vmem:[%s7 + $0x8] sm:$0xf]
        %v1216 = vld [vmem:[%s7 + $0xc] sm:$0xf]
        %v1217 = vlaneseq
        %v1218 = vshrl.u32 %v1217, 7
        %v1219 = vsub.s32 6, %v1218
        %v1220 = vrot.slane %v386, %v1219
        %v1225 = vunpack.c.l.b16 %v1213
        %v1226 = vunpack.c.l.b16 %v1214
        %v1227 = vunpack.c.l.b16 %v1215
        %v1228 = vunpack.c.l.b16 %v1216
        %v1229 = vpack.c.b16 %v1226, %v1225
        %v1230 = vpack.c.b16 %v1228, %v1227
        %v1234 = vsel %vm561, %v1212, 0
        %1236 = vmatprep.subr.bf16.mxu0 0
        %1237 = vmatpush1.bf16.msra.mxu0 0
        %1238 = vmatprep.subr.bf16.mxu0 0
        %1239 = vmatpush1.bf16.msra.mxu0 0
        %1240 = vmatprep.subr.bf16.mxu0 0
        %1241 = vmatpush1.bf16.msra.mxu0 0
        %1242 = vmatprep.subr.bf16.mxu0 0
        %1243 = vmatpush1.bf16.msra.mxu0 0
        %1244 = vmatprep.subr.bf16.mxu0 0
        %1245 = vmatpush1.bf16.msra.mxu0 0
        %1246 = vmatprep.subr.bf16.mxu0 0
        %1247 = vmatpush1.bf16.msra.mxu0 0
        %1248 = vmatprep.subr.bf16.mxu0 0
        %1249 = vmatpush1.bf16.msra.mxu0 %v1230
        %1250 = vmatprep.subr.bf16.mxu0 0
        %1251 = vmatpush1.bf16.msra.mxu0 %v1229
        %1252 = vmatprep.subr.bf16.mxu0 0
        %1253 = vmatpush2.bf16.msra.mxu0 0
        %1254 = vmatprep.subr.bf16.mxu0 0
        %1255 = vmatpush2.bf16.msra.mxu0 0
        %1256 = vmatprep.subr.bf16.mxu0 0
        %1257 = vmatpush2.bf16.msra.mxu0 0
        %1258 = vmatprep.subr.bf16.mxu0 0
        %1259 = vmatpush2.bf16.msra.mxu0 0
        %1260 = vmatprep.subr.bf16.mxu0 0
        %1261 = vmatpush2.bf16.msra.mxu0 0
        %1262 = vmatprep.subr.bf16.mxu0 0
        %1263 = vmatpush2.bf16.msra.mxu0 0
        %1264 = vmatprep.subr.bf16.mxu0 0
        %1265 = vmatpush2.bf16.msra.mxu0 0
        %1266 = vmatprep.subr.bf16.mxu0 0
        %1267 = vmatpush2.bf16.msra.mxu0 0
        %1268 = vmatprep.mubr.bf16.mxu0 0
        %1269 = vmatmul.mubr.bf16.gmra.mxu0 %v1234
        %v1270 = vpop.f32.mrf.mxu0
        %v1271 = vadd.f32 %v1220, %v1270
        %v1272 = vpop.f32.mrf.mxu0
        %v1273 = vpop.f32.mrf.mxu0
        %v1274 = vpop.f32.mrf.mxu0
        %1275 = vdwg.mxu0
        %v1276 = vmul.f32 %v1271, %v1271
        %v1277 = vmul.f32 %v1271, %v1276
        %v1278 = vmul.f32 %v1277, 0.044715
        %v1279 = vadd.f32 %v1271, %v1278
        %v1280 = vmul.f32 %v1279, 0.7978846
        %v1281 = vtanh.pop %v1280
        %v1282 = vadd.f32 %v1281, 1.0
        %v1283 = vmul.f32 %v1282, 0.5
        %v1284 = vmul.f32 %v1271, %v1283
        %v1285 = vpack.c.bf16 %v1284, %v1284
        %v1286 = vld [vmem:[%s8] sm:$0xf]
        %v1287 = vld [vmem:[%s8 + $0x4] sm:$0xf]
        %v1288 = vld [vmem:[%s8 + $0x8] sm:$0xf]
        %v1289 = vld [vmem:[%s8 + $0xc] sm:$0xf]
        %v1290 = vld [vmem:[%s8 + $0x10] sm:$0xf]
        %v1291 = vld [vmem:[%s8 + $0x14] sm:$0xf]
        %v1292 = vld [vmem:[%s8 + $0x18] sm:$0xf]
        %v1293 = vld [vmem:[%s8 + $0x1c] sm:$0xf]
        %v1294 = vlaneseq
        %v1295 = vshrl.u32 %v1294, 7
        %v1296 = vsub.s32 7, %v1295
        %v1297 = vrot.slane %v386, %v1296
        %v1306 = vunpack.c.l.b16 %v1286
        %v1307 = vunpack.c.l.b16 %v1287
        %v1308 = vunpack.c.l.b16 %v1288
        %v1309 = vunpack.c.l.b16 %v1289
        %v1310 = vunpack.c.l.b16 %v1290
        %v1311 = vunpack.c.l.b16 %v1291
        %v1312 = vunpack.c.l.b16 %v1292
        %v1313 = vunpack.c.l.b16 %v1293
        %v1314 = vpack.c.b16 %v1307, %v1306
        %v1315 = vpack.c.b16 %v1309, %v1308
        %v1316 = vpack.c.b16 %v1311, %v1310
        %v1317 = vpack.c.b16 %v1313, %v1312
        %v1323 = vsel %vm512, %v1285, 0
        %1325 = vmatprep.subr.bf16.mxu0 0
        %1326 = vmatpush1.bf16.msra.mxu0 0
        %1327 = vmatprep.subr.bf16.mxu0 0
        %1328 = vmatpush1.bf16.msra.mxu0 0
        %1329 = vmatprep.subr.bf16.mxu0 0
        %1330 = vmatpush1.bf16.msra.mxu0 0
        %1331 = vmatprep.subr.bf16.mxu0 0
        %1332 = vmatpush1.bf16.msra.mxu0 0
        %1333 = vmatprep.subr.bf16.mxu0 0
        %1334 = vmatpush1.bf16.msra.mxu0 %v1317
        %1335 = vmatprep.subr.bf16.mxu0 0
        %1336 = vmatpush1.bf16.msra.mxu0 %v1316
        %1337 = vmatprep.subr.bf16.mxu0 0
        %1338 = vmatpush1.bf16.msra.mxu0 %v1315
        %1339 = vmatprep.subr.bf16.mxu0 0
        %1340 = vmatpush1.bf16.msra.mxu0 %v1314
        %1341 = vmatprep.subr.bf16.mxu0 0
        %1342 = vmatpush2.bf16.msra.mxu0 0
        %1343 = vmatprep.subr.bf16.mxu0 0
        %1344 = vmatpush2.bf16.msra.mxu0 0
        %1345 = vmatprep.subr.bf16.mxu0 0
        %1346 = vmatpush2.bf16.msra.mxu0 0
        %1347 = vmatprep.subr.bf16.mxu0 0
        %1348 = vmatpush2.bf16.msra.mxu0 0
        %1349 = vmatprep.subr.bf16.mxu0 0
        %1350 = vmatpush2.bf16.msra.mxu0 0
        %1351 = vmatprep.subr.bf16.mxu0 0
        %1352 = vmatpush2.bf16.msra.mxu0 0
        %1353 = vmatprep.subr.bf16.mxu0 0
        %1354 = vmatpush2.bf16.msra.mxu0 0
        %1355 = vmatprep.subr.bf16.mxu0 0
        %1356 = vmatpush2.bf16.msra.mxu0 0
        %1357 = vmatprep.mubr.bf16.mxu0 0
        %1358 = vmatmul.mubr.bf16.gmra.mxu0 %v1323
        %v1359 = vpop.f32.mrf.mxu0
        %v1360 = vadd.f32 %v1297, %v1359
        %v1361 = vpop.f32.mrf.mxu0
        %v1362 = vpop.f32.mrf.mxu0
        %v1363 = vpop.f32.mrf.mxu0
        %1364 = vdwg.mxu0
        %v1365 = vadd.f32 %v1360, %v1211
        %v1366 = vsel %vm561, %v1365, 0.0
        %1367 = vadd.xlane.f32.xlu0 %v1366
        %v1368 = vpop.xlane.xlu0 %1367
        %v1369 = vmul.f32 %v1368, %v565
        %v1370 = vsub.f32 %v1365, %v1369
        %v1371 = vmul.f32 %v1370, %v1370
        %v1372 = vsel %vm561, %v1371, 0.0
        %1373 = vadd.xlane.f32.xlu0 %v1372
        %v1374 = vpop.xlane.xlu0 %1373
        %v1375 = vmul.f32 %v1374, %v565
        %v1376 = vadd.f32 %v1375, 1e-05
        %v1377 = vrsqrt.pop %v1376
        %v1378 = vmul.f32 %v1370, %v1377
        %v1379 = vlaneseq
        %v1380 = vshrl.u32 %v1379, 7
        %v1381 = vsub.s32 0, %v1380
        %v1382 = vrot.slane %v387, %v1381
        %v1383 = vmul.f32 %v1378, %v1382
        %v1384 = vlaneseq
        %v1385 = vshrl.u32 %v1384, 7
        %v1386 = vsub.s32 1, %v1385
        %v1387 = vrot.slane %v387, %v1386
        %v1388 = vadd.f32 %v1383, %v1387
        %v1389 = vpack.c.bf16 %v1388, %v1388
        %s1390 = scalar_lea.vmem %s5, 16
        %v1391 = vld [vmem:[%s1390] sm:$0xf]
        %v1392 = vld [vmem:[%s1390 + $0x4] sm:$0xf]
        %v1393 = vld [vmem:[%s1390 + $0x8] sm:$0xf]
        %v1394 = vld [vmem:[%s1390 + $0xc] sm:$0xf]
        %v1395 = vlaneseq
        %v1396 = vshrl.u32 %v1395, 7
        %v1397 = vsub.s32 2, %v1396
        %v1398 = vrot.slane %v387, %v1397
        %v1403 = vunpack.c.l.b16 %v1391
        %v1404 = vunpack.c.l.b16 %v1392
        %v1405 = vunpack.c.l.b16 %v1393
        %v1406 = vunpack.c.l.b16 %v1394
        %v1407 = vpack.c.b16 %v1404, %v1403
        %v1408 = vpack.c.b16 %v1406, %v1405
        %v1412 = vsel %vm561, %v1389, 0
        %1414 = vmatprep.subr.bf16.mxu0 0
        %1415 = vmatpush1.bf16.msra.mxu0 0
        %1416 = vmatprep.subr.bf16.mxu0 0
        %1417 = vmatpush1.bf16.msra.mxu0 0
        %1418 = vmatprep.subr.bf16.mxu0 0
        %1419 = vmatpush1.bf16.msra.mxu0 0
        %1420 = vmatprep.subr.bf16.mxu0 0
        %1421 = vmatpush1.bf16.msra.mxu0 0
        %1422 = vmatprep.subr.bf16.mxu0 0
        %1423 = vmatpush1.bf16.msra.mxu0 0
        %1424 = vmatprep.subr.bf16.mxu0 0
        %1425 = vmatpush1.bf16.msra.mxu0 0
        %1426 = vmatprep.subr.bf16.mxu0 0
        %1427 = vmatpush1.bf16.msra.mxu0 %v1408
        %1428 = vmatprep.subr.bf16.mxu0 0
        %1429 = vmatpush1.bf16.msra.mxu0 %v1407
        %1430 = vmatprep.subr.bf16.mxu0 0
        %1431 = vmatpush2.bf16.msra.mxu0 0
        %1432 = vmatprep.subr.bf16.mxu0 0
        %1433 = vmatpush2.bf16.msra.mxu0 0
        %1434 = vmatprep.subr.bf16.mxu0 0
        %1435 = vmatpush2.bf16.msra.mxu0 0
        %1436 = vmatprep.subr.bf16.mxu0 0
        %1437 = vmatpush2.bf16.msra.mxu0 0
        %1438 = vmatprep.subr.bf16.mxu0 0
        %1439 = vmatpush2.bf16.msra.mxu0 0
        %1440 = vmatprep.subr.bf16.mxu0 0
        %1441 = vmatpush2.bf16.msra.mxu0 0
        %1442 = vmatprep.subr.bf16.mxu0 0
        %1443 = vmatpush2.bf16.msra.mxu0 0
        %1444 = vmatprep.subr.bf16.mxu0 0
        %1445 = vmatpush2.bf16.msra.mxu0 0
        %1446 = vmatprep.mubr.bf16.mxu0 0
        %1447 = vmatmul.mubr.bf16.gmra.mxu0 %v1412
        %v1448 = vpop.f32.mrf.mxu0
        %v1449 = vadd.f32 %v1398, %v1448
        %v1450 = vpop.f32.mrf.mxu0
        %v1451 = vpop.f32.mrf.mxu0
        %v1452 = vpop.f32.mrf.mxu0
        %1453 = vdwg.mxu0
        %v1454 = vpack.c.bf16 %v1449, %v1449
        %1456 = vrot.lane.b32.xlu0 %v1454, 96
        %v1457 = vpop.permute.xlu0 %1456
        %v1459 = vsel %vm422, %v1454, 0
        %v1462 = vsel %vm422, %v1457, 0
        %1464 = vmatprep.subr.bf16.mxu0 0
        %1465 = vmatpush1.bf16.xpose.msra.mxu0 0
        %1466 = vmatprep.subr.bf16.mxu0 0
        %1467 = vmatpush1.bf16.xpose.msra.mxu0 0
        %1468 = vmatprep.subr.bf16.mxu0 0
        %1469 = vmatpush1.bf16.xpose.msra.mxu0 0
        %1470 = vmatprep.subr.bf16.mxu0 0
        %1471 = vmatpush1.bf16.xpose.msra.mxu0 0
        %1472 = vmatprep.subr.bf16.mxu0 0
        %1473 = vmatpush1.bf16.xpose.msra.mxu0 0
        %1474 = vmatprep.subr.bf16.mxu0 0
        %1475 = vmatpush1.bf16.xpose.msra.mxu0 0
        %1476 = vmatprep.subr.bf16.mxu0 0
        %1477 = vmatpush1.bf16.xpose.msra.mxu0 0
        %1478 = vmatprep.subr.bf16.mxu0 0
        %1479 = vmatpush1.bf16.xpose.msra.mxu0 %v1462
        %1480 = vmatprep.subr.bf16.mxu0 0
        %1481 = vmatpush2.bf16.xpose.msra.mxu0 0
        %1482 = vmatprep.subr.bf16.mxu0 0
        %1483 = vmatpush2.bf16.xpose.msra.mxu0 0
        %1484 = vmatprep.subr.bf16.mxu0 0
        %1485 = vmatpush2.bf16.xpose.msra.mxu0 0
        %1486 = vmatprep.subr.bf16.mxu0 0
        %1487 = vmatpush2.bf16.xpose.msra.mxu0 0
        %1488 = vmatprep.subr.bf16.mxu0 0
        %1489 = vmatpush2.bf16.xpose.msra.mxu0 0
        %1490 = vmatprep.subr.bf16.mxu0 0
        %1491 = vmatpush2.bf16.xpose.msra.mxu0 0
        %1492 = vmatprep.subr.bf16.mxu0 0
        %1493 = vmatpush2.bf16.xpose.msra.mxu0 0
        %1494 = vmatprep.subr.bf16.mxu0 0
        %1495 = vmatpush2.bf16.xpose.msra.mxu0 0
        %1496 = vmatprep.mubr.bf16.mxu0 0
        %1497 = vmatmul.mubr.bf16.gmra.mxu0 %v1459
        %v1498 = vpop.f32.mrf.mxu0
        %v1499 = vadd.f32 0.0, %v1498
        %v1500 = vpop.f32.mrf.mxu0
        %v1501 = vpop.f32.mrf.mxu0
        %v1502 = vpop.f32.mrf.mxu0
        %1503 = vdwg.mxu0
        %v1504 = vmul.f32 %v1499, 0.35355338
        %v1505 = vadd.f32 %v1504, %v707
        %v1506 = vsel %vm422, %v1505, -inf
        %1507 = vmax.xlane.f32.xlu0 %v1506
        %v1508 = vpop.xlane.xlu0 %1507
        %v1509 = vsub.f32 %v1505, %v1508
        %v1510 = vmul.f32 %v1509, 1.442695
        %v1511 = vpow.pop %v1510
        %v1512 = vsel %vm422, %v1511, 0.0
        %1513 = vadd.xlane.f32.xlu0 %v1512
        %v1514 = vpop.xlane.xlu0 %1513
        %v1515 = vrcp.pop %v1514
        %v1516 = vmul.f32 %v1511, %v1515
        %v1517 = vpack.c.bf16 %v1516, %v1516
        %1518 = vrot.lane.b32.xlu0 %v1454, 64
        %v1519 = vpop.permute.xlu0 %1518
        %v1521 = vsel %vm422, %v1517, 0
        %v1524 = vsel %vm727, %v1519, 0
        %1526 = vmatprep.subr.bf16.mxu0 0
        %1527 = vmatpush1.bf16.msra.mxu0 0
        %1528 = vmatprep.subr.bf16.mxu0 0
        %1529 = vmatpush1.bf16.msra.mxu0 0
        %1530 = vmatprep.subr.bf16.mxu0 0
        %1531 = vmatpush1.bf16.msra.mxu0 0
        %1532 = vmatprep.subr.bf16.mxu0 0
        %1533 = vmatpush1.bf16.msra.mxu0 0
        %1534 = vmatprep.subr.bf16.mxu0 0
        %1535 = vmatpush1.bf16.msra.mxu0 0
        %1536 = vmatprep.subr.bf16.mxu0 0
        %1537 = vmatpush1.bf16.msra.mxu0 0
        %1538 = vmatprep.subr.bf16.mxu0 0
        %1539 = vmatpush1.bf16.msra.mxu0 0
        %1540 = vmatprep.subr.bf16.mxu0 0
        %1541 = vmatpush1.bf16.msra.mxu0 %v1524
        %1542 = vmatprep.subr.bf16.mxu0 0
        %1543 = vmatpush2.bf16.msra.mxu0 0
        %1544 = vmatprep.subr.bf16.mxu0 0
        %1545 = vmatpush2.bf16.msra.mxu0 0
        %1546 = vmatprep.subr.bf16.mxu0 0
        %1547 = vmatpush2.bf16.msra.mxu0 0
        %1548 = vmatprep.subr.bf16.mxu0 0
        %1549 = vmatpush2.bf16.msra.mxu0 0
        %1550 = vmatprep.subr.bf16.mxu0 0
        %1551 = vmatpush2.bf16.msra.mxu0 0
        %1552 = vmatprep.subr.bf16.mxu0 0
        %1553 = vmatpush2.bf16.msra.mxu0 0
        %1554 = vmatprep.subr.bf16.mxu0 0
        %1555 = vmatpush2.bf16.msra.mxu0 0
        %1556 = vmatprep.subr.bf16.mxu0 0
        %1557 = vmatpush2.bf16.msra.mxu0 0
        %1558 = vmatprep.mubr.bf16.mxu0 0
        %1559 = vmatmul.mubr.bf16.gmra.mxu0 %v1521
        %v1560 = vpop.f32.mrf.mxu0
        %v1561 = vadd.f32 0.0, %v1560
        %v1562 = vpop.f32.mrf.mxu0
        %v1563 = vpop.f32.mrf.mxu0
        %v1564 = vpop.f32.mrf.mxu0
        %1565 = vdwg.mxu0
        %1566 = vrot.lane.b32.xlu0 %v1454, 120
        %v1567 = vpop.permute.xlu0 %1566
        %1568 = vrot.lane.b32.xlu0 %v1454, 88
        %v1569 = vpop.permute.xlu0 %1568
        %v1571 = vsel %vm422, %v1567, 0
        %v1574 = vsel %vm422, %v1569, 0
        %1576 = vmatprep.subr.bf16.mxu0 0
        %1577 = vmatpush1.bf16.xpose.msra.mxu0 0
        %1578 = vmatprep.subr.bf16.mxu0 0
        %1579 = vmatpush1.bf16.xpose.msra.mxu0 0
        %1580 = vmatprep.subr.bf16.mxu0 0
        %1581 = vmatpush1.bf16.xpose.msra.mxu0 0
        %1582 = vmatprep.subr.bf16.mxu0 0
        %1583 = vmatpush1.bf16.xpose.msra.mxu0 0
        %1584 = vmatprep.subr.bf16.mxu0 0
        %1585 = vmatpush1.bf16.xpose.msra.mxu0 0
        %1586 = vmatprep.subr.bf16.mxu0 0
        %1587 = vmatpush1.bf16.xpose.msra.mxu0 0
        %1588 = vmatprep.subr.bf16.mxu0 0
        %1589 = vmatpush1.bf16.xpose.msra.mxu0 0
        %1590 = vmatprep.subr.bf16.mxu0 0
        %1591 = vmatpush1.bf16.xpose.msra.mxu0 %v1574
        %1592 = vmatprep.subr.bf16.mxu0 0
        %1593 = vmatpush2.bf16.xpose.msra.mxu0 0
        %1594 = vmatprep.subr.bf16.mxu0 0
        %1595 = vmatpush2.bf16.xpose.msra.mxu0 0
        %1596 = vmatprep.subr.bf16.mxu0 0
        %1597 = vmatpush2.bf16.xpose.msra.mxu0 0
        %1598 = vmatprep.subr.bf16.mxu0 0
        %1599 = vmatpush2.bf16.xpose.msra.mxu0 0
        %1600 = vmatprep.subr.bf16.mxu0 0
        %1601 = vmatpush2.bf16.xpose.msra.mxu0 0
        %1602 = vmatprep.subr.bf16.mxu0 0
        %1603 = vmatpush2.bf16.xpose.msra.mxu0 0
        %1604 = vmatprep.subr.bf16.mxu0 0
        %1605 = vmatpush2.bf16.xpose.msra.mxu0 0
        %1606 = vmatprep.subr.bf16.mxu0 0
        %1607 = vmatpush2.bf16.xpose.msra.mxu0 0
        %1608 = vmatprep.mubr.bf16.mxu0 0
        %1609 = vmatmul.mubr.bf16.gmra.mxu0 %v1571
        %v1610 = vpop.f32.mrf.mxu0
        %v1611 = vadd.f32 0.0, %v1610
        %v1612 = vpop.f32.mrf.mxu0
        %v1613 = vpop.f32.mrf.mxu0
        %v1614 = vpop.f32.mrf.mxu0
        %1615 = vdwg.mxu0
        %v1616 = vmul.f32 %v1611, 0.35355338
        %v1617 = vadd.f32 %v1616, %v707
        %v1618 = vsel %vm422, %v1617, -inf
        %1619 = vmax.xlane.f32.xlu0 %v1618
        %v1620 = vpop.xlane.xlu0 %1619
        %v1621 = vsub.f32 %v1617, %v1620
        %v1622 = vmul.f32 %v1621, 1.442695
        %v1623 = vpow.pop %v1622
        %v1624 = vsel %vm422, %v1623, 0.0
        %1625 = vadd.xlane.f32.xlu0 %v1624
        %v1626 = vpop.xlane.xlu0 %1625
        %v1627 = vrcp.pop %v1626
        %v1628 = vmul.f32 %v1623, %v1627
        %v1629 = vpack.c.bf16 %v1628, %v1628
        %1630 = vrot.lane.b32.xlu0 %v1454, 56
        %v1631 = vpop.permute.xlu0 %1630
        %v1633 = vsel %vm422, %v1629, 0
        %v1636 = vsel %vm727, %v1631, 0
        %1638 = vmatprep.subr.bf16.mxu0 0
        %1639 = vmatpush1.bf16.msra.mxu0 0
        %1640 = vmatprep.subr.bf16.mxu0 0
        %1641 = vmatpush1.bf16.msra.mxu0 0
        %1642 = vmatprep.subr.bf16.mxu0 0
        %1643 = vmatpush1.bf16.msra.mxu0 0
        %1644 = vmatprep.subr.bf16.mxu0 0
        %1645 = vmatpush1.bf16.msra.mxu0 0
        %1646 = vmatprep.subr.bf16.mxu0 0
        %1647 = vmatpush1.bf16.msra.mxu0 0
        %1648 = vmatprep.subr.bf16.mxu0 0
        %1649 = vmatpush1.bf16.msra.mxu0 0
        %1650 = vmatprep.subr.bf16.mxu0 0
        %1651 = vmatpush1.bf16.msra.mxu0 0
        %1652 = vmatprep.subr.bf16.mxu0 0
        %1653 = vmatpush1.bf16.msra.mxu0 %v1636
        %1654 = vmatprep.subr.bf16.mxu0 0
        %1655 = vmatpush2.bf16.msra.mxu0 0
        %1656 = vmatprep.subr.bf16.mxu0 0
        %1657 = vmatpush2.bf16.msra.mxu0 0
        %1658 = vmatprep.subr.bf16.mxu0 0
        %1659 = vmatpush2.bf16.msra.mxu0 0
        %1660 = vmatprep.subr.bf16.mxu0 0
        %1661 = vmatpush2.bf16.msra.mxu0 0
        %1662 = vmatprep.subr.bf16.mxu0 0
        %1663 = vmatpush2.bf16.msra.mxu0 0
        %1664 = vmatprep.subr.bf16.mxu0 0
        %1665 = vmatpush2.bf16.msra.mxu0 0
        %1666 = vmatprep.subr.bf16.mxu0 0
        %1667 = vmatpush2.bf16.msra.mxu0 0
        %1668 = vmatprep.subr.bf16.mxu0 0
        %1669 = vmatpush2.bf16.msra.mxu0 0
        %1670 = vmatprep.mubr.bf16.mxu0 0
        %1671 = vmatmul.mubr.bf16.gmra.mxu0 %v1633
        %v1672 = vpop.f32.mrf.mxu0
        %v1673 = vadd.f32 0.0, %v1672
        %v1674 = vpop.f32.mrf.mxu0
        %v1675 = vpop.f32.mrf.mxu0
        %v1676 = vpop.f32.mrf.mxu0
        %1677 = vdwg.mxu0
        %1678 = vrot.lane.b32.xlu0 %v1454, 112
        %v1679 = vpop.permute.xlu0 %1678
        %1680 = vrot.lane.b32.xlu0 %v1454, 80
        %v1681 = vpop.permute.xlu0 %1680
        %v1683 = vsel %vm422, %v1679, 0
        %v1686 = vsel %vm422, %v1681, 0
        %1688 = vmatprep.subr.bf16.mxu0 0
        %1689 = vmatpush1.bf16.xpose.msra.mxu0 0
        %1690 = vmatprep.subr.bf16.mxu0 0
        %1691 = vmatpush1.bf16.xpose.msra.mxu0 0
        %1692 = vmatprep.subr.bf16.mxu0 0
        %1693 = vmatpush1.bf16.xpose.msra.mxu0 0
        %1694 = vmatprep.subr.bf16.mxu0 0
        %1695 = vmatpush1.bf16.xpose.msra.mxu0 0
        %1696 = vmatprep.subr.bf16.mxu0 0
        %1697 = vmatpush1.bf16.xpose.msra.mxu0 0
        %1698 = vmatprep.subr.bf16.mxu0 0
        %1699 = vmatpush1.bf16.xpose.msra.mxu0 0
        %1700 = vmatprep.subr.bf16.mxu0 0
        %1701 = vmatpush1.bf16.xpose.msra.mxu0 0
        %1702 = vmatprep.subr.bf16.mxu0 0
        %1703 = vmatpush1.bf16.xpose.msra.mxu0 %v1686
        %1704 = vmatprep.subr.bf16.mxu0 0
        %1705 = vmatpush2.bf16.xpose.msra.mxu0 0
        %1706 = vmatprep.subr.bf16.mxu0 0
        %1707 = vmatpush2.bf16.xpose.msra.mxu0 0
        %1708 = vmatprep.subr.bf16.mxu0 0
        %1709 = vmatpush2.bf16.xpose.msra.mxu0 0
        %1710 = vmatprep.subr.bf16.mxu0 0
        %1711 = vmatpush2.bf16.xpose.msra.mxu0 0
        %1712 = vmatprep.subr.bf16.mxu0 0
        %1713 = vmatpush2.bf16.xpose.msra.mxu0 0
        %1714 = vmatprep.subr.bf16.mxu0 0
        %1715 = vmatpush2.bf16.xpose.msra.mxu0 0
        %1716 = vmatprep.subr.bf16.mxu0 0
        %1717 = vmatpush2.bf16.xpose.msra.mxu0 0
        %1718 = vmatprep.subr.bf16.mxu0 0
        %1719 = vmatpush2.bf16.xpose.msra.mxu0 0
        %1720 = vmatprep.mubr.bf16.mxu0 0
        %1721 = vmatmul.mubr.bf16.gmra.mxu0 %v1683
        %v1722 = vpop.f32.mrf.mxu0
        %v1723 = vadd.f32 0.0, %v1722
        %v1724 = vpop.f32.mrf.mxu0
        %v1725 = vpop.f32.mrf.mxu0
        %v1726 = vpop.f32.mrf.mxu0
        %1727 = vdwg.mxu0
        %v1728 = vmul.f32 %v1723, 0.35355338
        %v1729 = vadd.f32 %v1728, %v707
        %v1730 = vsel %vm422, %v1729, -inf
        %1731 = vmax.xlane.f32.xlu0 %v1730
        %v1732 = vpop.xlane.xlu0 %1731
        %v1733 = vsub.f32 %v1729, %v1732
        %v1734 = vmul.f32 %v1733, 1.442695
        %v1735 = vpow.pop %v1734
        %v1736 = vsel %vm422, %v1735, 0.0
        %1737 = vadd.xlane.f32.xlu0 %v1736
        %v1738 = vpop.xlane.xlu0 %1737
        %v1739 = vrcp.pop %v1738
        %v1740 = vmul.f32 %v1735, %v1739
        %v1741 = vpack.c.bf16 %v1740, %v1740
        %1742 = vrot.lane.b32.xlu0 %v1454, 48
        %v1743 = vpop.permute.xlu0 %1742
        %v1745 = vsel %vm422, %v1741, 0
        %v1748 = vsel %vm727, %v1743, 0
        %1750 = vmatprep.subr.bf16.mxu0 0
        %1751 = vmatpush1.bf16.msra.mxu0 0
        %1752 = vmatprep.subr.bf16.mxu0 0
        %1753 = vmatpush1.bf16.msra.mxu0 0
        %1754 = vmatprep.subr.bf16.mxu0 0
        %1755 = vmatpush1.bf16.msra.mxu0 0
        %1756 = vmatprep.subr.bf16.mxu0 0
        %1757 = vmatpush1.bf16.msra.mxu0 0
        %1758 = vmatprep.subr.bf16.mxu0 0
        %1759 = vmatpush1.bf16.msra.mxu0 0
        %1760 = vmatprep.subr.bf16.mxu0 0
        %1761 = vmatpush1.bf16.msra.mxu0 0
        %1762 = vmatprep.subr.bf16.mxu0 0
        %1763 = vmatpush1.bf16.msra.mxu0 0
        %1764 = vmatprep.subr.bf16.mxu0 0
        %1765 = vmatpush1.bf16.msra.mxu0 %v1748
        %1766 = vmatprep.subr.bf16.mxu0 0
        %1767 = vmatpush2.bf16.msra.mxu0 0
        %1768 = vmatprep.subr.bf16.mxu0 0
        %1769 = vmatpush2.bf16.msra.mxu0 0
        %1770 = vmatprep.subr.bf16.mxu0 0
        %1771 = vmatpush2.bf16.msra.mxu0 0
        %1772 = vmatprep.subr.bf16.mxu0 0
        %1773 = vmatpush2.bf16.msra.mxu0 0
        %1774 = vmatprep.subr.bf16.mxu0 0
        %1775 = vmatpush2.bf16.msra.mxu0 0
        %1776 = vmatprep.subr.bf16.mxu0 0
        %1777 = vmatpush2.bf16.msra.mxu0 0
        %1778 = vmatprep.subr.bf16.mxu0 0
        %1779 = vmatpush2.bf16.msra.mxu0 0
        %1780 = vmatprep.subr.bf16.mxu0 0
        %1781 = vmatpush2.bf16.msra.mxu0 0
        %1782 = vmatprep.mubr.bf16.mxu0 0
        %1783 = vmatmul.mubr.bf16.gmra.mxu0 %v1745
        %v1784 = vpop.f32.mrf.mxu0
        %v1785 = vadd.f32 0.0, %v1784
        %v1786 = vpop.f32.mrf.mxu0
        %v1787 = vpop.f32.mrf.mxu0
        %v1788 = vpop.f32.mrf.mxu0
        %1789 = vdwg.mxu0
        %1790 = vrot.lane.b32.xlu0 %v1454, 104
        %v1791 = vpop.permute.xlu0 %1790
        %1792 = vrot.lane.b32.xlu0 %v1454, 72
        %v1793 = vpop.permute.xlu0 %1792
        %v1795 = vsel %vm422, %v1791, 0
        %v1798 = vsel %vm422, %v1793, 0
        %1800 = vmatprep.subr.bf16.mxu0 0
        %1801 = vmatpush1.bf16.xpose.msra.mxu0 0
        %1802 = vmatprep.subr.bf16.mxu0 0
        %1803 = vmatpush1.bf16.xpose.msra.mxu0 0
        %1804 = vmatprep.subr.bf16.mxu0 0
        %1805 = vmatpush1.bf16.xpose.msra.mxu0 0
        %1806 = vmatprep.subr.bf16.mxu0 0
        %1807 = vmatpush1.bf16.xpose.msra.mxu0 0
        %1808 = vmatprep.subr.bf16.mxu0 0
        %1809 = vmatpush1.bf16.xpose.msra.mxu0 0
        %1810 = vmatprep.subr.bf16.mxu0 0
        %1811 = vmatpush1.bf16.xpose.msra.mxu0 0
        %1812 = vmatprep.subr.bf16.mxu0 0
        %1813 = vmatpush1.bf16.xpose.msra.mxu0 0
        %1814 = vmatprep.subr.bf16.mxu0 0
        %1815 = vmatpush1.bf16.xpose.msra.mxu0 %v1798
        %1816 = vmatprep.subr.bf16.mxu0 0
        %1817 = vmatpush2.bf16.xpose.msra.mxu0 0
        %1818 = vmatprep.subr.bf16.mxu0 0
        %1819 = vmatpush2.bf16.xpose.msra.mxu0 0
        %1820 = vmatprep.subr.bf16.mxu0 0
        %1821 = vmatpush2.bf16.xpose.msra.mxu0 0
        %1822 = vmatprep.subr.bf16.mxu0 0
        %1823 = vmatpush2.bf16.xpose.msra.mxu0 0
        %1824 = vmatprep.subr.bf16.mxu0 0
        %1825 = vmatpush2.bf16.xpose.msra.mxu0 0
        %1826 = vmatprep.subr.bf16.mxu0 0
        %1827 = vmatpush2.bf16.xpose.msra.mxu0 0
        %1828 = vmatprep.subr.bf16.mxu0 0
        %1829 = vmatpush2.bf16.xpose.msra.mxu0 0
        %1830 = vmatprep.subr.bf16.mxu0 0
        %1831 = vmatpush2.bf16.xpose.msra.mxu0 0
        %1832 = vmatprep.mubr.bf16.mxu0 0
        %1833 = vmatmul.mubr.bf16.gmra.mxu0 %v1795
        %v1834 = vpop.f32.mrf.mxu0
        %v1835 = vadd.f32 0.0, %v1834
        %v1836 = vpop.f32.mrf.mxu0
        %v1837 = vpop.f32.mrf.mxu0
        %v1838 = vpop.f32.mrf.mxu0
        %1839 = vdwg.mxu0
        %v1840 = vmul.f32 %v1835, 0.35355338
        %v1841 = vadd.f32 %v1840, %v707
        %v1842 = vsel %vm422, %v1841, -inf
        %1843 = vmax.xlane.f32.xlu0 %v1842
        %v1844 = vpop.xlane.xlu0 %1843
        %v1845 = vsub.f32 %v1841, %v1844
        %v1846 = vmul.f32 %v1845, 1.442695
        %v1847 = vpow.pop %v1846
        %v1848 = vsel %vm422, %v1847, 0.0
        %1849 = vadd.xlane.f32.xlu0 %v1848
        %v1850 = vpop.xlane.xlu0 %1849
        %v1851 = vrcp.pop %v1850
        %v1852 = vmul.f32 %v1847, %v1851
        %v1853 = vpack.c.bf16 %v1852, %v1852
        %1854 = vrot.lane.b32.xlu0 %v1454, 40
        %v1855 = vpop.permute.xlu0 %1854
        %v1857 = vsel %vm422, %v1853, 0
        %v1860 = vsel %vm727, %v1855, 0
        %1862 = vmatprep.subr.bf16.mxu0 0
        %1863 = vmatpush1.bf16.msra.mxu0 0
        %1864 = vmatprep.subr.bf16.mxu0 0
        %1865 = vmatpush1.bf16.msra.mxu0 0
        %1866 = vmatprep.subr.bf16.mxu0 0
        %1867 = vmatpush1.bf16.msra.mxu0 0
        %1868 = vmatprep.subr.bf16.mxu0 0
        %1869 = vmatpush1.bf16.msra.mxu0 0
        %1870 = vmatprep.subr.bf16.mxu0 0
        %1871 = vmatpush1.bf16.msra.mxu0 0
        %1872 = vmatprep.subr.bf16.mxu0 0
        %1873 = vmatpush1.bf16.msra.mxu0 0
        %1874 = vmatprep.subr.bf16.mxu0 0
        %1875 = vmatpush1.bf16.msra.mxu0 0
        %1876 = vmatprep.subr.bf16.mxu0 0
        %1877 = vmatpush1.bf16.msra.mxu0 %v1860
        %1878 = vmatprep.subr.bf16.mxu0 0
        %1879 = vmatpush2.bf16.msra.mxu0 0
        %1880 = vmatprep.subr.bf16.mxu0 0
        %1881 = vmatpush2.bf16.msra.mxu0 0
        %1882 = vmatprep.subr.bf16.mxu0 0
        %1883 = vmatpush2.bf16.msra.mxu0 0
        %1884 = vmatprep.subr.bf16.mxu0 0
        %1885 = vmatpush2.bf16.msra.mxu0 0
        %1886 = vmatprep.subr.bf16.mxu0 0
        %1887 = vmatpush2.bf16.msra.mxu0 0
        %1888 = vmatprep.subr.bf16.mxu0 0
        %1889 = vmatpush2.bf16.msra.mxu0 0
        %1890 = vmatprep.subr.bf16.mxu0 0
        %1891 = vmatpush2.bf16.msra.mxu0 0
        %1892 = vmatprep.subr.bf16.mxu0 0
        %1893 = vmatpush2.bf16.msra.mxu0 0
        %1894 = vmatprep.mubr.bf16.mxu0 0
        %1895 = vmatmul.mubr.bf16.gmra.mxu0 %v1857
        %v1896 = vpop.f32.mrf.mxu0
        %v1897 = vadd.f32 0.0, %v1896
        %v1898 = vpop.f32.mrf.mxu0
        %v1899 = vpop.f32.mrf.mxu0
        %v1900 = vpop.f32.mrf.mxu0
        %1901 = vdwg.mxu0
        %1903 = vrot.lane.b32.xlu0 %v1673, 8
        %v1904 = vpop.permute.xlu0 %1903
        %1907 = vrot.lane.b32.xlu0 %v1785, 16
        %v1908 = vpop.permute.xlu0 %1907
        %1911 = vrot.lane.b32.xlu0 %v1897, 24
        %v1912 = vpop.permute.xlu0 %1911
        %v1914 = vsel %vm422, %v1561, %v1904
        %v1915 = vsel %vm1120, %v1914, %v1908
        %v1916 = vsel %vm1122, %v1915, %v1912
        %v1917 = vpack.c.bf16 %v1916, %v1916
        %s1918 = scalar_lea.vmem %s6, 16
        %v1919 = vld [vmem:[%s1918] sm:$0xf]
        %v1920 = vld [vmem:[%s1918 + $0x4] sm:$0xf]
        %v1921 = vld [vmem:[%s1918 + $0x8] sm:$0xf]
        %v1922 = vld [vmem:[%s1918 + $0xc] sm:$0xf]
        %v1923 = vlaneseq
        %v1924 = vshrl.u32 %v1923, 7
        %v1925 = vsub.s32 3, %v1924
        %v1926 = vrot.slane %v387, %v1925
        %v1931 = vunpack.c.l.b16 %v1919
        %v1932 = vunpack.c.l.b16 %v1920
        %v1933 = vunpack.c.l.b16 %v1921
        %v1934 = vunpack.c.l.b16 %v1922
        %v1935 = vpack.c.b16 %v1932, %v1931
        %v1936 = vpack.c.b16 %v1934, %v1933
        %v1940 = vsel %vm561, %v1917, 0
        %1942 = vmatprep.subr.bf16.mxu0 0
        %1943 = vmatpush1.bf16.msra.mxu0 0
        %1944 = vmatprep.subr.bf16.mxu0 0
        %1945 = vmatpush1.bf16.msra.mxu0 0
        %1946 = vmatprep.subr.bf16.mxu0 0
        %1947 = vmatpush1.bf16.msra.mxu0 0
        %1948 = vmatprep.subr.bf16.mxu0 0
        %1949 = vmatpush1.bf16.msra.mxu0 0
        %1950 = vmatprep.subr.bf16.mxu0 0
        %1951 = vmatpush1.bf16.msra.mxu0 0
        %1952 = vmatprep.subr.bf16.mxu0 0
        %1953 = vmatpush1.bf16.msra.mxu0 0
        %1954 = vmatprep.subr.bf16.mxu0 0
        %1955 = vmatpush1.bf16.msra.mxu0 %v1936
        %1956 = vmatprep.subr.bf16.mxu0 0
        %1957 = vmatpush1.bf16.msra.mxu0 %v1935
        %1958 = vmatprep.subr.bf16.mxu0 0
        %1959 = vmatpush2.bf16.msra.mxu0 0
        %1960 = vmatprep.subr.bf16.mxu0 0
        %1961 = vmatpush2.bf16.msra.mxu0 0
        %1962 = vmatprep.subr.bf16.mxu0 0
        %1963 = vmatpush2.bf16.msra.mxu0 0
        %1964 = vmatprep.subr.bf16.mxu0 0
        %1965 = vmatpush2.bf16.msra.mxu0 0
        %1966 = vmatprep.subr.bf16.mxu0 0
        %1967 = vmatpush2.bf16.msra.mxu0 0
        %1968 = vmatprep.subr.bf16.mxu0 0
        %1969 = vmatpush2.bf16.msra.mxu0 0
        %1970 = vmatprep.subr.bf16.mxu0 0
        %1971 = vmatpush2.bf16.msra.mxu0 0
        %1972 = vmatprep.subr.bf16.mxu0 0
        %1973 = vmatpush2.bf16.msra.mxu0 0
        %1974 = vmatprep.mubr.bf16.mxu0 0
        %1975 = vmatmul.mubr.bf16.gmra.mxu0 %v1940
        %v1976 = vpop.f32.mrf.mxu0
        %v1977 = vadd.f32 %v1926, %v1976
        %v1978 = vpop.f32.mrf.mxu0
        %v1979 = vpop.f32.mrf.mxu0
        %v1980 = vpop.f32.mrf.mxu0
        %1981 = vdwg.mxu0
        %v1982 = vadd.f32 %v1977, %v1388
        %v1983 = vsel %vm561, %v1982, 0.0
        %1984 = vadd.xlane.f32.xlu0 %v1983
        %v1985 = vpop.xlane.xlu0 %1984
        %v1986 = vmul.f32 %v1985, %v565
        %v1987 = vsub.f32 %v1982, %v1986
        %v1988 = vmul.f32 %v1987, %v1987
        %v1989 = vsel %vm561, %v1988, 0.0
        %1990 = vadd.xlane.f32.xlu0 %v1989
        %v1991 = vpop.xlane.xlu0 %1990
        %v1992 = vmul.f32 %v1991, %v565
        %v1993 = vadd.f32 %v1992, 1e-05
        %v1994 = vrsqrt.pop %v1993
        %v1995 = vmul.f32 %v1987, %v1994
        %v1996 = vlaneseq
        %v1997 = vshrl.u32 %v1996, 7
        %v1998 = vsub.s32 4, %v1997
        %v1999 = vrot.slane %v387, %v1998
        %v2000 = vmul.f32 %v1995, %v1999
        %v2001 = vlaneseq
        %v2002 = vshrl.u32 %v2001, 7
        %v2003 = vsub.s32 5, %v2002
        %v2004 = vrot.slane %v387, %v2003
        %v2005 = vadd.f32 %v2000, %v2004
        %v2006 = vpack.c.bf16 %v2005, %v2005
        %s2007 = scalar_lea.vmem %s7, 16
        %v2008 = vld [vmem:[%s2007] sm:$0xf]
        %v2009 = vld [vmem:[%s2007 + $0x4] sm:$0xf]
        %v2010 = vld [vmem:[%s2007 + $0x8] sm:$0xf]
        %v2011 = vld [vmem:[%s2007 + $0xc] sm:$0xf]
        %v2012 = vlaneseq
        %v2013 = vshrl.u32 %v2012, 7
        %v2014 = vsub.s32 6, %v2013
        %v2015 = vrot.slane %v387, %v2014
        %v2020 = vunpack.c.l.b16 %v2008
        %v2021 = vunpack.c.l.b16 %v2009
        %v2022 = vunpack.c.l.b16 %v2010
        %v2023 = vunpack.c.l.b16 %v2011
        %v2024 = vpack.c.b16 %v2021, %v2020
        %v2025 = vpack.c.b16 %v2023, %v2022
        %v2029 = vsel %vm561, %v2006, 0
        %2031 = vmatprep.subr.bf16.mxu0 0
        %2032 = vmatpush1.bf16.msra.mxu0 0
        %2033 = vmatprep.subr.bf16.mxu0 0
        %2034 = vmatpush1.bf16.msra.mxu0 0
        %2035 = vmatprep.subr.bf16.mxu0 0
        %2036 = vmatpush1.bf16.msra.mxu0 0
        %2037 = vmatprep.subr.bf16.mxu0 0
        %2038 = vmatpush1.bf16.msra.mxu0 0
        %2039 = vmatprep.subr.bf16.mxu0 0
        %2040 = vmatpush1.bf16.msra.mxu0 0
        %2041 = vmatprep.subr.bf16.mxu0 0
        %2042 = vmatpush1.bf16.msra.mxu0 0
        %2043 = vmatprep.subr.bf16.mxu0 0
        %2044 = vmatpush1.bf16.msra.mxu0 %v2025
        %2045 = vmatprep.subr.bf16.mxu0 0
        %2046 = vmatpush1.bf16.msra.mxu0 %v2024
        %2047 = vmatprep.subr.bf16.mxu0 0
        %2048 = vmatpush2.bf16.msra.mxu0 0
        %2049 = vmatprep.subr.bf16.mxu0 0
        %2050 = vmatpush2.bf16.msra.mxu0 0
        %2051 = vmatprep.subr.bf16.mxu0 0
        %2052 = vmatpush2.bf16.msra.mxu0 0
        %2053 = vmatprep.subr.bf16.mxu0 0
        %2054 = vmatpush2.bf16.msra.mxu0 0
        %2055 = vmatprep.subr.bf16.mxu0 0
        %2056 = vmatpush2.bf16.msra.mxu0 0
        %2057 = vmatprep.subr.bf16.mxu0 0
        %2058 = vmatpush2.bf16.msra.mxu0 0
        %2059 = vmatprep.subr.bf16.mxu0 0
        %2060 = vmatpush2.bf16.msra.mxu0 0
        %2061 = vmatprep.subr.bf16.mxu0 0
        %2062 = vmatpush2.bf16.msra.mxu0 0
        %2063 = vmatprep.mubr.bf16.mxu0 0
        %2064 = vmatmul.mubr.bf16.gmra.mxu0 %v2029
        %v2065 = vpop.f32.mrf.mxu0
        %v2066 = vadd.f32 %v2015, %v2065
        %v2067 = vpop.f32.mrf.mxu0
        %v2068 = vpop.f32.mrf.mxu0
        %v2069 = vpop.f32.mrf.mxu0
        %2070 = vdwg.mxu0
        %v2071 = vmul.f32 %v2066, %v2066
        %v2072 = vmul.f32 %v2066, %v2071
        %v2073 = vmul.f32 %v2072, 0.044715
        %v2074 = vadd.f32 %v2066, %v2073
        %v2075 = vmul.f32 %v2074, 0.7978846
        %v2076 = vtanh.pop %v2075
        %v2077 = vadd.f32 %v2076, 1.0
        %v2078 = vmul.f32 %v2077, 0.5
        %v2079 = vmul.f32 %v2066, %v2078
        %v2080 = vpack.c.bf16 %v2079, %v2079
        %s2081 = scalar_lea.vmem %s8, 32
        %v2082 = vld [vmem:[%s2081] sm:$0xf]
        %v2083 = vld [vmem:[%s2081 + $0x4] sm:$0xf]
        %v2084 = vld [vmem:[%s2081 + $0x8] sm:$0xf]
        %v2085 = vld [vmem:[%s2081 + $0xc] sm:$0xf]
        %v2086 = vld [vmem:[%s2081 + $0x10] sm:$0xf]
        %v2087 = vld [vmem:[%s2081 + $0x14] sm:$0xf]
        %v2088 = vld [vmem:[%s2081 + $0x18] sm:$0xf]
        %v2089 = vld [vmem:[%s2081 + $0x1c] sm:$0xf]
        %v2090 = vlaneseq
        %v2091 = vshrl.u32 %v2090, 7
        %v2092 = vsub.s32 7, %v2091
        %v2093 = vrot.slane %v387, %v2092
        %v2102 = vunpack.c.l.b16 %v2082
        %v2103 = vunpack.c.l.b16 %v2083
        %v2104 = vunpack.c.l.b16 %v2084
        %v2105 = vunpack.c.l.b16 %v2085
        %v2106 = vunpack.c.l.b16 %v2086
        %v2107 = vunpack.c.l.b16 %v2087
        %v2108 = vunpack.c.l.b16 %v2088
        %v2109 = vunpack.c.l.b16 %v2089
        %v2110 = vpack.c.b16 %v2103, %v2102
        %v2111 = vpack.c.b16 %v2105, %v2104
        %v2112 = vpack.c.b16 %v2107, %v2106
        %v2113 = vpack.c.b16 %v2109, %v2108
        %v2119 = vsel %vm512, %v2080, 0
        %2121 = vmatprep.subr.bf16.mxu0 0
        %2122 = vmatpush1.bf16.msra.mxu0 0
        %2123 = vmatprep.subr.bf16.mxu0 0
        %2124 = vmatpush1.bf16.msra.mxu0 0
        %2125 = vmatprep.subr.bf16.mxu0 0
        %2126 = vmatpush1.bf16.msra.mxu0 0
        %2127 = vmatprep.subr.bf16.mxu0 0
        %2128 = vmatpush1.bf16.msra.mxu0 0
        %2129 = vmatprep.subr.bf16.mxu0 0
        %2130 = vmatpush1.bf16.msra.mxu0 %v2113
        %2131 = vmatprep.subr.bf16.mxu0 0
        %2132 = vmatpush1.bf16.msra.mxu0 %v2112
        %2133 = vmatprep.subr.bf16.mxu0 0
        %2134 = vmatpush1.bf16.msra.mxu0 %v2111
        %2135 = vmatprep.subr.bf16.mxu0 0
        %2136 = vmatpush1.bf16.msra.mxu0 %v2110
        %2137 = vmatprep.subr.bf16.mxu0 0
        %2138 = vmatpush2.bf16.msra.mxu0 0
        %2139 = vmatprep.subr.bf16.mxu0 0
        %2140 = vmatpush2.bf16.msra.mxu0 0
        %2141 = vmatprep.subr.bf16.mxu0 0
        %2142 = vmatpush2.bf16.msra.mxu0 0
        %2143 = vmatprep.subr.bf16.mxu0 0
        %2144 = vmatpush2.bf16.msra.mxu0 0
        %2145 = vmatprep.subr.bf16.mxu0 0
        %2146 = vmatpush2.bf16.msra.mxu0 0
        %2147 = vmatprep.subr.bf16.mxu0 0
        %2148 = vmatpush2.bf16.msra.mxu0 0
        %2149 = vmatprep.subr.bf16.mxu0 0
        %2150 = vmatpush2.bf16.msra.mxu0 0
        %2151 = vmatprep.subr.bf16.mxu0 0
        %2152 = vmatpush2.bf16.msra.mxu0 0
        %2153 = vmatprep.mubr.bf16.mxu0 0
        %2154 = vmatmul.mubr.bf16.gmra.mxu0 %v2119
        %v2155 = vpop.f32.mrf.mxu0
        %v2156 = vadd.f32 %v2093, %v2155
        %v2157 = vpop.f32.mrf.mxu0
        %v2158 = vpop.f32.mrf.mxu0
        %v2159 = vpop.f32.mrf.mxu0
        %2160 = vdwg.mxu0
        %v2161 = vadd.f32 %v2156, %v2005
        %v2162 = vsel %vm561, %v2161, 0.0
        %2163 = vadd.xlane.f32.xlu0 %v2162
        %v2164 = vpop.xlane.xlu0 %2163
        %v2165 = vmul.f32 %v2164, %v565
        %v2166 = vsub.f32 %v2161, %v2165
        %v2167 = vmul.f32 %v2166, %v2166
        %v2168 = vsel %vm561, %v2167, 0.0
        %2169 = vadd.xlane.f32.xlu0 %v2168
        %v2170 = vpop.xlane.xlu0 %2169
        %v2171 = vmul.f32 %v2170, %v565
        %v2172 = vadd.f32 %v2171, 1e-05
        %v2173 = vrsqrt.pop %v2172
        %v2174 = vmul.f32 %v2166, %v2173
        %v2175 = vlaneseq
        %v2176 = vshrl.u32 %v2175, 7
        %v2177 = vsub.s32 0, %v2176
        %v2178 = vrot.slane %v388, %v2177
        %v2179 = vmul.f32 %v2174, %v2178
        %v2180 = vlaneseq
        %v2181 = vshrl.u32 %v2180, 7
        %v2182 = vsub.s32 1, %v2181
        %v2183 = vrot.slane %v388, %v2182
        %v2184 = vadd.f32 %v2179, %v2183
        %v2185 = vpack.c.bf16 %v2184, %v2184
        %v2186 = vld [vmem:[%s9] sm:$0xf]
        %v2187 = vld [vmem:[%s9 + $0x4] sm:$0xf]
        %v2188 = vld [vmem:[%s9 + $0x8] sm:$0xf]
        %v2189 = vld [vmem:[%s9 + $0xc] sm:$0xf]
        %v2194 = vunpack.c.l.b16 %v2186
        %v2195 = vunpack.c.l.b16 %v2187
        %v2196 = vunpack.c.l.b16 %v2188
        %v2197 = vunpack.c.l.b16 %v2189
        %v2198 = vpack.c.b16 %v2195, %v2194
        %v2199 = vpack.c.b16 %v2197, %v2196
        %v2203 = vrot.slane %v388, 2
        %v2206 = vsel %vm561, %v2185, 0
        %2208 = vmatprep.subr.bf16.mxu0 0
        %2209 = vmatpush1.bf16.msra.mxu0 0
        %2210 = vmatprep.subr.bf16.mxu0 0
        %2211 = vmatpush1.bf16.msra.mxu0 0
        %2212 = vmatprep.subr.bf16.mxu0 0
        %2213 = vmatpush1.bf16.msra.mxu0 0
        %2214 = vmatprep.subr.bf16.mxu0 0
        %2215 = vmatpush1.bf16.msra.mxu0 0
        %2216 = vmatprep.subr.bf16.mxu0 0
        %2217 = vmatpush1.bf16.msra.mxu0 0
        %2218 = vmatprep.subr.bf16.mxu0 0
        %2219 = vmatpush1.bf16.msra.mxu0 0
        %2220 = vmatprep.subr.bf16.mxu0 0
        %2221 = vmatpush1.bf16.msra.mxu0 %v2199
        %2222 = vmatprep.subr.bf16.mxu0 0
        %2223 = vmatpush1.bf16.msra.mxu0 %v2198
        %2224 = vmatprep.subr.bf16.mxu0 0
        %2225 = vmatpush2.bf16.msra.mxu0 0
        %2226 = vmatprep.subr.bf16.mxu0 0
        %2227 = vmatpush2.bf16.msra.mxu0 0
        %2228 = vmatprep.subr.bf16.mxu0 0
        %2229 = vmatpush2.bf16.msra.mxu0 0
        %2230 = vmatprep.subr.bf16.mxu0 0
        %2231 = vmatpush2.bf16.msra.mxu0 0
        %2232 = vmatprep.subr.bf16.mxu0 0
        %2233 = vmatpush2.bf16.msra.mxu0 0
        %2234 = vmatprep.subr.bf16.mxu0 0
        %2235 = vmatpush2.bf16.msra.mxu0 0
        %2236 = vmatprep.subr.bf16.mxu0 0
        %2237 = vmatpush2.bf16.msra.mxu0 0
        %2238 = vmatprep.subr.bf16.mxu0 0
        %2239 = vmatpush2.bf16.msra.mxu0 0
        %2240 = vmatprep.mubr.bf16.mxu0 0
        %2241 = vmatmul.mubr.bf16.gmra.mxu0 %v2206
        %v2242 = vpop.f32.mrf.mxu0
        %v2243 = vadd.f32 %v2203, %v2242
        %v2244 = vpop.f32.mrf.mxu0
        %v2245 = vpop.f32.mrf.mxu0
        %v2246 = vpop.f32.mrf.mxu0
        %2247 = vdwg.mxu0
        %v2248 = vtanh.pop %v2243
        %v2249 = vpack.c.bf16 %v2248, %v2248
        %s2250 = scalar_lea.vmem %s9, 16
        %v2251 = vld [vmem:[%s2250] sm:$0xf]
        %v2252 = vld [vmem:[%s2250 + $0x4] sm:$0xf]
        %v2253 = vld [vmem:[%s2250 + $0x8] sm:$0xf]
        %v2254 = vld [vmem:[%s2250 + $0xc] sm:$0xf]
        %v2259 = vunpack.c.l.b16 %v2251
        %v2260 = vunpack.c.l.b16 %v2252
        %v2261 = vunpack.c.l.b16 %v2253
        %v2262 = vunpack.c.l.b16 %v2254
        %v2263 = vpack.c.b16 %v2260, %v2259
        %v2264 = vpack.c.b16 %v2262, %v2261
        %v2267 = vrot.slane %v388, 3
        %v2270 = vsel %vm561, %v2249, 0
        %2272 = vmatprep.subr.bf16.mxu0 0
        %2273 = vmatpush1.bf16.msra.mxu0 0
        %2274 = vmatprep.subr.bf16.mxu0 0
        %2275 = vmatpush1.bf16.msra.mxu0 0
        %2276 = vmatprep.subr.bf16.mxu0 0
        %2277 = vmatpush1.bf16.msra.mxu0 0
        %2278 = vmatprep.subr.bf16.mxu0 0
        %2279 = vmatpush1.bf16.msra.mxu0 0
        %2280 = vmatprep.subr.bf16.mxu0 0
        %2281 = vmatpush1.bf16.msra.mxu0 0
        %2282 = vmatprep.subr.bf16.mxu0 0
        %2283 = vmatpush1.bf16.msra.mxu0 0
        %2284 = vmatprep.subr.bf16.mxu0 0
        %2285 = vmatpush1.bf16.msra.mxu0 %v2264
        %2286 = vmatprep.subr.bf16.mxu0 0
        %2287 = vmatpush1.bf16.msra.mxu0 %v2263
        %2288 = vmatprep.subr.bf16.mxu0 0
        %2289 = vmatpush2.bf16.msra.mxu0 0
        %2290 = vmatprep.subr.bf16.mxu0 0
        %2291 = vmatpush2.bf16.msra.mxu0 0
        %2292 = vmatprep.subr.bf16.mxu0 0
        %2293 = vmatpush2.bf16.msra.mxu0 0
        %2294 = vmatprep.subr.bf16.mxu0 0
        %2295 = vmatpush2.bf16.msra.mxu0 0
        %2296 = vmatprep.subr.bf16.mxu0 0
        %2297 = vmatpush2.bf16.msra.mxu0 0
        %2298 = vmatprep.subr.bf16.mxu0 0
        %2299 = vmatpush2.bf16.msra.mxu0 0
        %2300 = vmatprep.subr.bf16.mxu0 0
        %2301 = vmatpush2.bf16.msra.mxu0 0
        %2302 = vmatprep.subr.bf16.mxu0 0
        %2303 = vmatpush2.bf16.msra.mxu0 0
        %2304 = vmatprep.mubr.bf16.mxu0 0
        %2305 = vmatmul.mubr.bf16.gmra.mxu0 %v2270
        %v2306 = vpop.f32.mrf.mxu0
        %v2307 = vadd.f32 %v2267, %v2306
        %v2308 = vpop.f32.mrf.mxu0
        %v2309 = vpop.f32.mrf.mxu0
        %v2310 = vpop.f32.mrf.mxu0
        %2311 = vdwg.mxu0
        %2312 = vst [vmem:[%s373] sm:$0x1] %v2307
        %s2313 = sand.u32 %s257, 1
        %s2314 = scalar_lea.sflag [#allocation3], %s2313
        %s2315 = sand.u32 %s257, 1
        %s2316 = scalar_lea.vmem [#allocation2], %s2315
        // Predicated region
        $region61: #{toxicity_classifier_forward.1} parent=59 // pred_check
          %p2317 = pneg %p267
        $region62: #{toxicity_classifier_forward.1} parent=59 // pred_check_branch
          %2319 = sbr.rel (%p2317) target = $region64
        $region63: #{toxicity_classifier_forward.1} parent=59 // pred_region
          %s2321 = ssub.s32 16, 16
          %2322 = vsyncadd %s2314, %s2321
          %s2323 = smul.addr %s24, 16
          %s2324 = scalar_lea.hbm %s10, %s2323
          %s2326 = sshll.u32 %s2316, 4
          %s2327 = int_to_ptr.vmem [resolvable:$true] %s2326
          %2329 = dma.vmem_to_hbm [thread:$0]  %s2327, 16, %s2324, %s2314
        $region64: #{toxicity_classifier_forward.1} parent=59 // pred_fallthru
          _
      $region60: #{toxicity_classifier_forward.1} parent=5 // pred_fallthru
        _
      %p2330 = scmp.le.s32.totalorder 2, %s19
      // Predicated region
      $region65: #{toxicity_classifier_forward.1} parent=5 // pred_check
        %p2331 = pneg %p2330
      $region66: #{toxicity_classifier_forward.1} parent=5 // pred_check_branch
        %2333 = sbr.rel (%p2331) target = $region68
      $region67: #{toxicity_classifier_forward.1} parent=5 // pred_region
        %s2334 = ssub.s32 %s19, 2
        // Predicated region
        $region69: #{toxicity_classifier_forward.1} parent=67 // pred_check
          %p2335 = pneg %p273
        $region70: #{toxicity_classifier_forward.1} parent=67 // pred_check_branch
          %2337 = sbr.rel (%p2335) target = $region72
        $region71: #{toxicity_classifier_forward.1} parent=67 // pred_region
          %s2338 = sand.u32 %s258, 1
          %s2339 = scalar_lea.sflag [#allocation3], %s2338
          %s2340 = sand.u32 %s258, 1
          %s2341 = scalar_lea.vmem [#allocation2], %s2340
          %2342 = dma.done %s2339, 16
        $region72: #{toxicity_classifier_forward.1} parent=67 // pred_fallthru
          _
      $region68: #{toxicity_classifier_forward.1} parent=5 // pred_fallthru
        _
    $region6: #{toxicity_classifier_forward.1} parent=1 // loop_footer
      %s23 = sadd.s32 1, %s19
    $region7: #{toxicity_classifier_forward.1} parent=1 // loop_footer_branch
      %18 = sbr.rel target = $region3
    $region8: #{toxicity_classifier_forward.1} parent=1 // loop_exit
      _
    %2343 = vsyncpa [#allocation3], 1
    %s2344 = scalar_lea.sflag [#allocation3], 1
    %2345 = vsyncpa %s2344, 1

</llo_original>
